<compile_context>
chip_gen: v7x
topology: tpu7x:2x2x1
jax: 0.10.0
libtpu: 0.0.40
codegen_flags: <defaults>
</compile_context>

<pallas_src>
import jax
import jax.numpy as jnp
from jax.experimental import pallas as pl
from jax.experimental.pallas import tpu as pltpu

# ----------------------------- configuration -------------------------------
IMAGE_SIZE = 16
PATCH_SIZE = 4
CHANNELS = 4
NUM_CLASSES = 10
DIM = 32
DEPTH = 2
HEADS = 4
DIM_HEAD = 8
MLP_DIM = 64
BATCH = 2

NUM_PATCHES = (IMAGE_SIZE // PATCH_SIZE) ** 2      # 16
PATCH_DIM = CHANNELS * PATCH_SIZE * PATCH_SIZE     # 64
SEQ = NUM_PATCHES + 1                              # 17 (cls token + patches)
SEQ_PAD = 24                                       # sublane-aligned rows / sample
INNER = HEADS * DIM_HEAD                           # 32
EPS = 1e-5
SCALE = DIM_HEAD ** (-0.5)
OUT_PAD = 128                                      # lane-dense logits store
NEG_BIG = -1e30

assert INNER == DIM
assert SEQ_PAD % 8 == 0 and SEQ_PAD >= SEQ


# ------------------------------ small helpers ------------------------------
def _gelu(x):
    # TODO(synk): nn.GELU default is the exact erf formulation; tanh
    # approximation is used here (guaranteed Mosaic lowering).
    return jax.nn.gelu(x, approximate=True)


def _layernorm(x, w, b):
    mu = jnp.mean(x, axis=-1, keepdims=True)
    var = jnp.mean(jnp.square(x - mu), axis=-1, keepdims=True)
    return (x - mu) * jax.lax.rsqrt(var + EPS) * w + b


# ------------------------------- fused kernel -------------------------------
def vit_kernel(patch_ref, pw_ref, eb_ref, qkv_ref, wo_ref, w1_ref, b1_ref,
               w2_ref, vec_ref, hvec_ref, hw_ref, hb_ref, out_ref):
    """One batch sample per grid step: embed -> DEPTH blocks -> head."""
    # ---------------- patch embedding + cls token + positional embedding ----
    # patch_ref rows: [0]=zeros (cls slot), [1:SEQ]=patches, [SEQ:]=zero pad.
    # eb_ref rows:    [0]=cls+pos[0], [1:SEQ]=patch_b+pos[1:], [SEQ:]=0.
    x = jnp.dot(patch_ref[0], pw_ref[...],
                preferred_element_type=jnp.float32) + eb_ref[...]

    # Additive mask for padded key rows (queries in padded rows produce
    # garbage but are never read; keys must be masked so valid rows ignore
    # them).  Built once, reused across layers/heads.
    key_idx = jax.lax.broadcasted_iota(jnp.int32, (SEQ_PAD, SEQ_PAD), 1)
    kmask = jnp.where(key_idx < SEQ, 0.0, NEG_BIG).astype(jnp.float32)

    # ---------------- transformer blocks ------------------------------------
    for li in range(DEPTH):
        ln1w, ln1b = vec_ref[li, 0:1, :], vec_ref[li, 1:2, :]
        ln2w, ln2b = vec_ref[li, 2:3, :], vec_ref[li, 3:4, :]
        bo, b2 = vec_ref[li, 4:5, :], vec_ref[li, 5:6, :]

        # --- attention branch (pre-LN) ---
        xn = _layernorm(x, ln1w, ln1b)
        q_all = jnp.dot(xn, qkv_ref[li, 0], preferred_element_type=jnp.float32)
        k_all = jnp.dot(xn, qkv_ref[li, 1], preferred_element_type=jnp.float32)
        v_all = jnp.dot(xn, qkv_ref[li, 2], preferred_element_type=jnp.float32)

        attn_out = jnp.zeros((SEQ_PAD, DIM), jnp.float32)
        for h in range(HEADS):
            c0 = h * DIM_HEAD
            q = q_all[:, c0:c0 + DIM_HEAD]
            k = k_all[:, c0:c0 + DIM_HEAD]
            v = v_all[:, c0:c0 + DIM_HEAD]
            s = jax.lax.dot_general(
                q, k, (((1,), (1,)), ((), ())),
                preferred_element_type=jnp.float32) * SCALE
            s = s + kmask
            s = s - jnp.max(s, axis=-1, keepdims=True)
            e = jnp.exp(s)
            p = e * pl.reciprocal(jnp.sum(e, axis=-1, keepdims=True),
                                  approx=True)
            o_h = jnp.dot(p, v, preferred_element_type=jnp.float32)
            # Project each head with a sublane-aligned Wo row block and
            # accumulate in vregs — no lane-masked scatter, no VMEM trip.
            attn_out = attn_out + jnp.dot(
                o_h, wo_ref[li, c0:c0 + DIM_HEAD, :],
                preferred_element_type=jnp.float32)
        x = x + attn_out + bo

        # --- feed-forward branch (pre-LN) ---
        xn2 = _layernorm(x, ln2w, ln2b)
        hdn = _gelu(jnp.dot(xn2, w1_ref[li],
                            preferred_element_type=jnp.float32) + b1_ref[li])
        x = x + jnp.dot(hdn, w2_ref[li],
                        preferred_element_type=jnp.float32) + b2

    # ---------------- classification head (cls pooling) ---------------------
    cls_n = _layernorm(x[0:1, :], hvec_ref[0:1, :], hvec_ref[1:2, :])
    out_ref[0] = jnp.dot(cls_n, hw_ref[...],
                         preferred_element_type=jnp.float32) + hb_ref[...]


# ----------------------------- pallas wrapper --------------------------------
def to_patches(img):
    """Rearrange 'b c (h p1) (w p2) -> b (h w) (p1 p2 c)' (plain-JAX glue)."""
    B, C, H, W = img.shape
    h, w = H // PATCH_SIZE, W // PATCH_SIZE
    x = img.reshape(B, C, h, PATCH_SIZE, w, PATCH_SIZE)
    x = x.transpose(0, 2, 4, 3, 5, 1)                # b h w p1 p2 c
    return x.reshape(B, h * w, PATCH_SIZE * PATCH_SIZE * C)


@jax.jit
def vit_forward(img, params):
    B = img.shape[0]
    patches = to_patches(img)                               # (B, 16, 64)

    # Zero-pad to the sublane-aligned layout: row 0 is the cls slot, rows
    # SEQ..SEQ_PAD-1 are padding.  The cls/patch interleave is thereby folded
    # into host-side layout + the embed bias slab (no in-kernel scatter).
    patches_pad = jnp.zeros((B, SEQ_PAD, PATCH_DIM), jnp.float32)
    patches_pad = patches_pad.at[:, 1:SEQ, :].set(patches)

    pos = params["pos"].reshape(SEQ, DIM)
    cls = params["cls"].reshape(1, DIM)
    embed_bias = jnp.zeros((SEQ_PAD, DIM), jnp.float32)
    embed_bias = embed_bias.at[0:1, :].set(cls + pos[0:1])
    embed_bias = embed_bias.at[1:SEQ, :].set(params["patch_b"] + pos[1:])

    # Pack per-layer weights into a few stacked slabs (static indexing inside
    # the kernel; one DMA per slab instead of per tensor).
    L = params["layers"]
    qkv_s = jnp.stack([jnp.stack(jnp.split(l["wqkv"], 3, axis=-1)) for l in L])
    wo_s = jnp.stack([l["wo"] for l in L])                  # (DEPTH, 32, 32)
    w1_s = jnp.stack([l["w1"] for l in L])                  # (DEPTH, 32, 64)
    b1_s = jnp.stack([l["b1"] for l in L])                  # (DEPTH, 1, 64)
    w2_s = jnp.stack([l["w2"] for l in L])                  # (DEPTH, 64, 32)
    pad2 = jnp.zeros((2, DIM), jnp.float32)
    vec_s = jnp.stack([jnp.concatenate(
        [l["ln1_w"], l["ln1_b"], l["ln2_w"], l["ln2_b"], l["bo"], l["b2"],
         pad2], axis=0) for l in L])                        # (DEPTH, 8, 32)

    head_vec = jnp.concatenate([params["head_ln_w"], params["head_ln_b"]], 0)
    head_w = jnp.zeros((DIM, OUT_PAD), jnp.float32).at[:, :NUM_CLASSES].set(
        params["head_w"])
    head_b = jnp.zeros((1, OUT_PAD), jnp.float32).at[:, :NUM_CLASSES].set(
        params["head_b"])

    vmem_full = lambda: pl.BlockSpec(memory_space=pltpu.MemorySpace.VMEM)
    out = pl.pallas_call(
        vit_kernel,
        out_shape=jax.ShapeDtypeStruct((B, 1, OUT_PAD), jnp.float32),
        grid=(B,),
        in_specs=[pl.BlockSpec((1, SEQ_PAD, PATCH_DIM), lambda b: (b, 0, 0))]
        + [vmem_full() for _ in range(11)],
        out_specs=pl.BlockSpec((1, 1, OUT_PAD), lambda b: (b, 0, 0)),
        compiler_params=pltpu.CompilerParams(
            dimension_semantics=("parallel",)),
    )(patches_pad, params["patch_w"], embed_bias, qkv_s, wo_s, w1_s, b1_s,
      w2_s, vec_s, head_vec, head_w, head_b)
    return out[:, 0, :NUM_CLASSES]


# --------------------------- reference (pure JAX) ---------------------------
def vit_reference(img, params):
    B = img.shape[0]
    x = to_patches(img) @ params["patch_w"] + params["patch_b"]
    cls = jnp.broadcast_to(params["cls"], (B, 1, DIM))
    x = jnp.concatenate([cls, x], axis=1) + params["pos"]
    for L in params["layers"]:
        xn = _layernorm(x, L["ln1_w"], L["ln1_b"])
        qkv = xn @ L["wqkv"]
        q, k, v = jnp.split(qkv, 3, axis=-1)
        sh = lambda t: t.reshape(B, SEQ, HEADS, DIM_HEAD).transpose(0, 2, 1, 3)
        q, k, v = sh(q), sh(k), sh(v)
        dots = jnp.einsum("bhnd,bhmd->bhnm", q, k) * SCALE
        attn = jax.nn.softmax(dots, axis=-1)
        out = jnp.einsum("bhnm,bhmd->bhnd", attn, v)
        out = out.transpose(0, 2, 1, 3).reshape(B, SEQ, INNER)
        x = x + out @ L["wo"] + L["bo"]
        xn2 = _layernorm(x, L["ln2_w"], L["ln2_b"])
        x = x + _gelu(xn2 @ L["w1"] + L["b1"]) @ L["w2"] + L["b2"]
    cls_out = _layernorm(x[:, 0], params["head_ln_w"], params["head_ln_b"])
    return cls_out @ params["head_w"] + params["head_b"]


# ------------------------------- parameters ---------------------------------
def init_params(key):
    keys = iter(jax.random.split(key, 32))

    def nrm(shape, scale=0.02):
        return (scale * jax.random.normal(next(keys), shape)).astype(jnp.float32)

    ones = lambda s: jnp.ones(s, jnp.float32)
    zeros = lambda s: jnp.zeros(s, jnp.float32)

    params = {
        "patch_w": nrm((PATCH_DIM, DIM)),
        "patch_b": nrm((1, DIM)),
        "cls": nrm((1, 1, DIM), 1.0),
        "pos": nrm((1, SEQ, DIM), 1.0),
        "layers": [],
        "head_ln_w": ones((1, DIM)),
        "head_ln_b": zeros((1, DIM)),
        "head_w": nrm((DIM, NUM_CLASSES)),
        "head_b": nrm((1, NUM_CLASSES)),
    }
    for _ in range(DEPTH):
        params["layers"].append({
            "ln1_w": ones((1, DIM)), "ln1_b": zeros((1, DIM)),
            "wqkv": nrm((DIM, 3 * INNER)),
            "wo": nrm((INNER, DIM)), "bo": nrm((1, DIM)),
            "ln2_w": ones((1, DIM)), "ln2_b": zeros((1, DIM)),
            "w1": nrm((DIM, MLP_DIM)), "b1": nrm((1, MLP_DIM)),
            "w2": nrm((MLP_DIM, DIM)), "b2": nrm((1, DIM)),
        })
    return params


# ---------------------------------- main -------------------------------------
if __name__ == "__main__":
    root = jax.random.PRNGKey(0)
    pkey, ikey = jax.random.split(root)
    params = init_params(pkey)
    img = jax.random.normal(ikey, (BATCH, CHANNELS, IMAGE_SIZE, IMAGE_SIZE),
                            jnp.float32)

    out = jax.block_until_ready(vit_forward(img, params))
    ref = jax.block_until_ready(vit_reference(img, params))

    assert out.shape == (BATCH, NUM_CLASSES), out.shape
    assert bool(jnp.allclose(out, ref, atol=5e-2, rtol=5e-2)), "mismatch vs reference"
    print("KERNEL_OK")
</pallas_src>

<mosaic_0001>
module attributes {stable_mosaic.version = 11 : i64} {
  func.func @vit_kernel(%arg0: i32, %arg1: memref<1x24x64xf32, #tpu.memory_space<vmem>>, %arg2: memref<64x32xf32, #tpu.memory_space<vmem>>, %arg3: memref<24x32xf32, #tpu.memory_space<vmem>>, %arg4: memref<2x3x32x32xf32, #tpu.memory_space<vmem>>, %arg5: memref<2x32x32xf32, #tpu.memory_space<vmem>>, %arg6: memref<2x32x64xf32, #tpu.memory_space<vmem>>, %arg7: memref<2x1x64xf32, #tpu.memory_space<vmem>>, %arg8: memref<2x64x32xf32, #tpu.memory_space<vmem>>, %arg9: memref<2x8x32xf32, #tpu.memory_space<vmem>>, %arg10: memref<2x32xf32, #tpu.memory_space<vmem>>, %arg11: memref<32x128xf32, #tpu.memory_space<vmem>>, %arg12: memref<1x128xf32, #tpu.memory_space<vmem>>, %arg13: memref<1x1x128xf32, #tpu.memory_space<vmem>>) attributes {dimension_semantics = [#tpu.dimension_semantics<parallel>], iteration_bounds = array<i64: 2>, scalar_prefetch = 0 : i64, scratch_operands = 0 : i64, tpu.core_type = #tpu.core_type<tc>, window_params = [{transform_indices = @transform_0, window_bounds = array<i64: 1, 24, 64>}, {pipeline_mode = #tpu.pipeline_mode<synchronous>, transform_indices = @transform_1, window_bounds = array<i64: 64, 32>}, {pipeline_mode = #tpu.pipeline_mode<synchronous>, transform_indices = @transform_2, window_bounds = array<i64: 24, 32>}, {pipeline_mode = #tpu.pipeline_mode<synchronous>, transform_indices = @transform_3, window_bounds = array<i64: 2, 3, 32, 32>}, {pipeline_mode = #tpu.pipeline_mode<synchronous>, transform_indices = @transform_4, window_bounds = array<i64: 2, 32, 32>}, {pipeline_mode = #tpu.pipeline_mode<synchronous>, transform_indices = @transform_5, window_bounds = array<i64: 2, 32, 64>}, {pipeline_mode = #tpu.pipeline_mode<synchronous>, transform_indices = @transform_6, window_bounds = array<i64: 2, 1, 64>}, {pipeline_mode = #tpu.pipeline_mode<synchronous>, transform_indices = @transform_7, window_bounds = array<i64: 2, 64, 32>}, {pipeline_mode = #tpu.pipeline_mode<synchronous>, transform_indices = @transform_8, window_bounds = array<i64: 2, 8, 32>}, {pipeline_mode = #tpu.pipeline_mode<synchronous>, transform_indices = @transform_9, window_bounds = array<i64: 2, 32>}, {pipeline_mode = #tpu.pipeline_mode<synchronous>, transform_indices = @transform_10, window_bounds = array<i64: 32, 128>}, {pipeline_mode = #tpu.pipeline_mode<synchronous>, transform_indices = @transform_11, window_bounds = array<i64: 1, 128>}, {transform_indices = @transform_12, window_bounds = array<i64: 1, 1, 128>}]} {
    %c0 = arith.constant 0 : index
    %c0_0 = arith.constant 0 : index
    %c0_1 = arith.constant 0 : index
    %0 = vector.load %arg1[%c0, %c0_0, %c0_1] : memref<1x24x64xf32, #tpu.memory_space<vmem>>, vector<1x24x64xf32>
    %1 = vector.shape_cast %0 : vector<1x24x64xf32> to vector<24x64xf32>
    %c0_2 = arith.constant 0 : index
    %c0_3 = arith.constant 0 : index
    %2 = vector.load %arg2[%c0_2, %c0_3] : memref<64x32xf32, #tpu.memory_space<vmem>>, vector<64x32xf32>
    %cst = arith.constant dense<0.000000e+00> : vector<24x32xf32>
    %3 = tpu.matmul %1, %2, %cst {dimension_numbers = #tpu.dot_dimension_numbers<[1], [0], [0], [1], [0, 0, 1, 1], [], []>} : vector<24x64xf32>, vector<64x32xf32>, vector<24x32xf32> -> vector<24x32xf32>
    %c0_4 = arith.constant 0 : index
    %c0_5 = arith.constant 0 : index
    %4 = vector.load %arg3[%c0_4, %c0_5] : memref<24x32xf32, #tpu.memory_space<vmem>>, vector<24x32xf32>
    %5 = arith.addf %3, %4 : vector<24x32xf32>
    %6 = tpu.iota {dimensions = array<i32: 1>} : vector<24x24xi32>
    %c17_i32 = arith.constant 17 : i32
    %7 = vector.broadcast %c17_i32 : i32 to vector<24x24xi32>
    %8 = arith.cmpi slt, %6, %7 : vector<24x24xi32>
    %cst_6 = arith.constant 0.000000e+00 : f32
    %cst_7 = arith.constant -1.000000e+30 : f32
    %9 = vector.broadcast %cst_6 : f32 to vector<24x24xf32>
    %10 = vector.broadcast %cst_7 : f32 to vector<24x24xf32>
    %11 = arith.select %8, %9, %10 : vector<24x24xi1>, vector<24x24xf32>
    %c0_8 = arith.constant 0 : index
    %c0_9 = arith.constant 0 : index
    %c0_10 = arith.constant 0 : index
    %12 = vector.load %arg9[%c0_8, %c0_9, %c0_10] : memref<2x8x32xf32, #tpu.memory_space<vmem>>, vector<1x1x32xf32>
    %13 = vector.shape_cast %12 : vector<1x1x32xf32> to vector<1x32xf32>
    %c0_11 = arith.constant 0 : index
    %c1 = arith.constant 1 : index
    %c0_12 = arith.constant 0 : index
    %14 = vector.load %arg9[%c0_11, %c1, %c0_12] : memref<2x8x32xf32, #tpu.memory_space<vmem>>, vector<1x1x32xf32>
    %15 = vector.shape_cast %14 : vector<1x1x32xf32> to vector<1x32xf32>
    %c0_13 = arith.constant 0 : index
    %c2 = arith.constant 2 : index
    %c0_14 = arith.constant 0 : index
    %16 = vector.load %arg9[%c0_13, %c2, %c0_14] : memref<2x8x32xf32, #tpu.memory_space<vmem>>, vector<1x1x32xf32>
    %17 = vector.shape_cast %16 : vector<1x1x32xf32> to vector<1x32xf32>
    %c0_15 = arith.constant 0 : index
    %c3 = arith.constant 3 : index
    %c0_16 = arith.constant 0 : index
    %18 = vector.load %arg9[%c0_15, %c3, %c0_16] : memref<2x8x32xf32, #tpu.memory_space<vmem>>, vector<1x1x32xf32>
    %19 = vector.shape_cast %18 : vector<1x1x32xf32> to vector<1x32xf32>
    %c0_17 = arith.constant 0 : index
    %c4 = arith.constant 4 : index
    %c0_18 = arith.constant 0 : index
    %20 = vector.load %arg9[%c0_17, %c4, %c0_18] : memref<2x8x32xf32, #tpu.memory_space<vmem>>, vector<1x1x32xf32>
    %21 = vector.shape_cast %20 : vector<1x1x32xf32> to vector<1x32xf32>
    %c0_19 = arith.constant 0 : index
    %c5 = arith.constant 5 : index
    %c0_20 = arith.constant 0 : index
    %22 = vector.load %arg9[%c0_19, %c5, %c0_20] : memref<2x8x32xf32, #tpu.memory_space<vmem>>, vector<1x1x32xf32>
    %23 = vector.shape_cast %22 : vector<1x1x32xf32> to vector<1x32xf32>
    %cst_21 = arith.constant dense<0.000000e+00> : vector<24xf32>
    %24 = vector.multi_reduction <add>, %5, %cst_21 [1] : vector<24x32xf32> to vector<24xf32>
    %25 = vector.shape_cast %24 : vector<24xf32> to vector<24x1xf32>
    %cst_22 = arith.constant 3.200000e+01 : f32
    %26 = vector.broadcast %cst_22 : f32 to vector<24x1xf32>
    %27 = arith.divf %25, %26 : vector<24x1xf32>
    %28 = vector.broadcast %27 : vector<24x1xf32> to vector<24x32xf32>
    %29 = arith.subf %5, %28 : vector<24x32xf32>
    %30 = arith.mulf %29, %29 : vector<24x32xf32>
    %cst_23 = arith.constant dense<0.000000e+00> : vector<24xf32>
    %31 = vector.multi_reduction <add>, %30, %cst_23 [1] : vector<24x32xf32> to vector<24xf32>
    %32 = vector.shape_cast %31 : vector<24xf32> to vector<24x1xf32>
    %cst_24 = arith.constant 3.200000e+01 : f32
    %33 = vector.broadcast %cst_24 : f32 to vector<24x1xf32>
    %34 = arith.divf %32, %33 : vector<24x1xf32>
    %35 = vector.broadcast %27 : vector<24x1xf32> to vector<24x32xf32>
    %36 = arith.subf %5, %35 : vector<24x32xf32>
    %cst_25 = arith.constant 9.99999974E-6 : f32
    %37 = vector.broadcast %cst_25 : f32 to vector<24x1xf32>
    %38 = arith.addf %34, %37 : vector<24x1xf32>
    %39 = math.rsqrt %38 : vector<24x1xf32>
    %40 = vector.broadcast %39 : vector<24x1xf32> to vector<24x32xf32>
    %41 = arith.mulf %36, %40 : vector<24x32xf32>
    %42 = vector.broadcast %13 : vector<1x32xf32> to vector<24x32xf32>
    %43 = arith.mulf %41, %42 : vector<24x32xf32>
    %44 = vector.broadcast %15 : vector<1x32xf32> to vector<24x32xf32>
    %45 = arith.addf %43, %44 : vector<24x32xf32>
    %c0_26 = arith.constant 0 : index
    %c0_27 = arith.constant 0 : index
    %c0_28 = arith.constant 0 : index
    %c0_29 = arith.constant 0 : index
    %46 = vector.load %arg4[%c0_26, %c0_27, %c0_28, %c0_29] : memref<2x3x32x32xf32, #tpu.memory_space<vmem>>, vector<1x1x32x32xf32>
    %47 = vector.shape_cast %46 : vector<1x1x32x32xf32> to vector<32x32xf32>
    %cst_30 = arith.constant dense<0.000000e+00> : vector<24x32xf32>
    %48 = tpu.matmul %45, %47, %cst_30 {dimension_numbers = #tpu.dot_dimension_numbers<[1], [0], [0], [1], [0, 0, 1, 1], [], []>} : vector<24x32xf32>, vector<32x32xf32>, vector<24x32xf32> -> vector<24x32xf32>
    %c0_31 = arith.constant 0 : index
    %c1_32 = arith.constant 1 : index
    %c0_33 = arith.constant 0 : index
    %c0_34 = arith.constant 0 : index
    %49 = vector.load %arg4[%c0_31, %c1_32, %c0_33, %c0_34] : memref<2x3x32x32xf32, #tpu.memory_space<vmem>>, vector<1x1x32x32xf32>
    %50 = vector.shape_cast %49 : vector<1x1x32x32xf32> to vector<32x32xf32>
    %cst_35 = arith.constant dense<0.000000e+00> : vector<24x32xf32>
    %51 = tpu.matmul %45, %50, %cst_35 {dimension_numbers = #tpu.dot_dimension_numbers<[1], [0], [0], [1], [0, 0, 1, 1], [], []>} : vector<24x32xf32>, vector<32x32xf32>, vector<24x32xf32> -> vector<24x32xf32>
    %c0_36 = arith.constant 0 : index
    %c2_37 = arith.constant 2 : index
    %c0_38 = arith.constant 0 : index
    %c0_39 = arith.constant 0 : index
    %52 = vector.load %arg4[%c0_36, %c2_37, %c0_38, %c0_39] : memref<2x3x32x32xf32, #tpu.memory_space<vmem>>, vector<1x1x32x32xf32>
    %53 = vector.shape_cast %52 : vector<1x1x32x32xf32> to vector<32x32xf32>
    %cst_40 = arith.constant dense<0.000000e+00> : vector<24x32xf32>
    %54 = tpu.matmul %45, %53, %cst_40 {dimension_numbers = #tpu.dot_dimension_numbers<[1], [0], [0], [1], [0, 0, 1, 1], [], []>} : vector<24x32xf32>, vector<32x32xf32>, vector<24x32xf32> -> vector<24x32xf32>
    %cst_41 = arith.constant 0.000000e+00 : f32
    %55 = vector.broadcast %cst_41 : f32 to vector<24x32xf32>
    %56 = vector.extract_strided_slice %48 {offsets = [0, 0], sizes = [24, 8], strides = [1, 1]} : vector<24x32xf32> to vector<24x8xf32>
    %57 = vector.extract_strided_slice %51 {offsets = [0, 0], sizes = [24, 8], strides = [1, 1]} : vector<24x32xf32> to vector<24x8xf32>
    %58 = vector.extract_strided_slice %54 {offsets = [0, 0], sizes = [24, 8], strides = [1, 1]} : vector<24x32xf32> to vector<24x8xf32>
    %cst_42 = arith.constant dense<0.000000e+00> : vector<24x24xf32>
    %59 = tpu.matmul %56, %57, %cst_42 {dimension_numbers = #tpu.dot_dimension_numbers<[1], [1], [0], [0], [0, 0, 1, 0], [], []>} : vector<24x8xf32>, vector<24x8xf32>, vector<24x24xf32> -> vector<24x24xf32>
    %cst_43 = arith.constant 0.353553385 : f32
    %60 = vector.broadcast %cst_43 : f32 to vector<24x24xf32>
    %61 = arith.mulf %59, %60 : vector<24x24xf32>
    %62 = arith.addf %61, %11 : vector<24x24xf32>
    %cst_44 = arith.constant dense<0xFF800000> : vector<24xf32>
    %63 = vector.multi_reduction <maximumf>, %62, %cst_44 [1] : vector<24x24xf32> to vector<24xf32>
    %64 = vector.shape_cast %63 : vector<24xf32> to vector<24x1xf32>
    %65 = vector.broadcast %64 : vector<24x1xf32> to vector<24x24xf32>
    %66 = arith.subf %62, %65 : vector<24x24xf32>
    %67 = math.exp %66 : vector<24x24xf32>
    %cst_45 = arith.constant dense<0.000000e+00> : vector<24xf32>
    %68 = vector.multi_reduction <add>, %67, %cst_45 [1] : vector<24x24xf32> to vector<24xf32>
    %69 = vector.shape_cast %68 : vector<24xf32> to vector<24x1xf32>
    %70 = tpu.reciprocal %69 {approx = true} : vector<24x1xf32> -> vector<24x1xf32>
    %71 = vector.broadcast %70 : vector<24x1xf32> to vector<24x24xf32>
    %72 = arith.mulf %67, %71 : vector<24x24xf32>
    %cst_46 = arith.constant dense<0.000000e+00> : vector<24x8xf32>
    %73 = tpu.matmul %72, %58, %cst_46 {dimension_numbers = #tpu.dot_dimension_numbers<[1], [0], [0], [1], [0, 0, 1, 1], [], []>} : vector<24x24xf32>, vector<24x8xf32>, vector<24x8xf32> -> vector<24x8xf32>
    %c0_47 = arith.constant 0 : index
    %c0_48 = arith.constant 0 : index
    %c0_49 = arith.constant 0 : index
    %74 = vector.load %arg5[%c0_47, %c0_48, %c0_49] : memref<2x32x32xf32, #tpu.memory_space<vmem>>, vector<1x8x32xf32>
    %75 = vector.shape_cast %74 : vector<1x8x32xf32> to vector<8x32xf32>
    %cst_50 = arith.constant dense<0.000000e+00> : vector<24x32xf32>
    %76 = tpu.matmul %73, %75, %cst_50 {dimension_numbers = #tpu.dot_dimension_numbers<[1], [0], [0], [1], [0, 0, 1, 1], [], []>} : vector<24x8xf32>, vector<8x32xf32>, vector<24x32xf32> -> vector<24x32xf32>
    %77 = arith.addf %55, %76 : vector<24x32xf32>
    %78 = vector.extract_strided_slice %48 {offsets = [0, 8], sizes = [24, 8], strides = [1, 1]} : vector<24x32xf32> to vector<24x8xf32>
    %79 = vector.extract_strided_slice %51 {offsets = [0, 8], sizes = [24, 8], strides = [1, 1]} : vector<24x32xf32> to vector<24x8xf32>
    %80 = vector.extract_strided_slice %54 {offsets = [0, 8], sizes = [24, 8], strides = [1, 1]} : vector<24x32xf32> to vector<24x8xf32>
    %cst_51 = arith.constant dense<0.000000e+00> : vector<24x24xf32>
    %81 = tpu.matmul %78, %79, %cst_51 {dimension_numbers = #tpu.dot_dimension_numbers<[1], [1], [0], [0], [0, 0, 1, 0], [], []>} : vector<24x8xf32>, vector<24x8xf32>, vector<24x24xf32> -> vector<24x24xf32>
    %cst_52 = arith.constant 0.353553385 : f32
    %82 = vector.broadcast %cst_52 : f32 to vector<24x24xf32>
    %83 = arith.mulf %81, %82 : vector<24x24xf32>
    %84 = arith.addf %83, %11 : vector<24x24xf32>
    %cst_53 = arith.constant dense<0xFF800000> : vector<24xf32>
    %85 = vector.multi_reduction <maximumf>, %84, %cst_53 [1] : vector<24x24xf32> to vector<24xf32>
    %86 = vector.shape_cast %85 : vector<24xf32> to vector<24x1xf32>
    %87 = vector.broadcast %86 : vector<24x1xf32> to vector<24x24xf32>
    %88 = arith.subf %84, %87 : vector<24x24xf32>
    %89 = math.exp %88 : vector<24x24xf32>
    %cst_54 = arith.constant dense<0.000000e+00> : vector<24xf32>
    %90 = vector.multi_reduction <add>, %89, %cst_54 [1] : vector<24x24xf32> to vector<24xf32>
    %91 = vector.shape_cast %90 : vector<24xf32> to vector<24x1xf32>
    %92 = tpu.reciprocal %91 {approx = true} : vector<24x1xf32> -> vector<24x1xf32>
    %93 = vector.broadcast %92 : vector<24x1xf32> to vector<24x24xf32>
    %94 = arith.mulf %89, %93 : vector<24x24xf32>
    %cst_55 = arith.constant dense<0.000000e+00> : vector<24x8xf32>
    %95 = tpu.matmul %94, %80, %cst_55 {dimension_numbers = #tpu.dot_dimension_numbers<[1], [0], [0], [1], [0, 0, 1, 1], [], []>} : vector<24x24xf32>, vector<24x8xf32>, vector<24x8xf32> -> vector<24x8xf32>
    %c0_56 = arith.constant 0 : index
    %c8 = arith.constant 8 : index
    %c0_57 = arith.constant 0 : index
    %96 = vector.load %arg5[%c0_56, %c8, %c0_57] : memref<2x32x32xf32, #tpu.memory_space<vmem>>, vector<1x8x32xf32>
    %97 = vector.shape_cast %96 : vector<1x8x32xf32> to vector<8x32xf32>
    %cst_58 = arith.constant dense<0.000000e+00> : vector<24x32xf32>
    %98 = tpu.matmul %95, %97, %cst_58 {dimension_numbers = #tpu.dot_dimension_numbers<[1], [0], [0], [1], [0, 0, 1, 1], [], []>} : vector<24x8xf32>, vector<8x32xf32>, vector<24x32xf32> -> vector<24x32xf32>
    %99 = arith.addf %77, %98 : vector<24x32xf32>
    %100 = vector.extract_strided_slice %48 {offsets = [0, 16], sizes = [24, 8], strides = [1, 1]} : vector<24x32xf32> to vector<24x8xf32>
    %101 = vector.extract_strided_slice %51 {offsets = [0, 16], sizes = [24, 8], strides = [1, 1]} : vector<24x32xf32> to vector<24x8xf32>
    %102 = vector.extract_strided_slice %54 {offsets = [0, 16], sizes = [24, 8], strides = [1, 1]} : vector<24x32xf32> to vector<24x8xf32>
    %cst_59 = arith.constant dense<0.000000e+00> : vector<24x24xf32>
    %103 = tpu.matmul %100, %101, %cst_59 {dimension_numbers = #tpu.dot_dimension_numbers<[1], [1], [0], [0], [0, 0, 1, 0], [], []>} : vector<24x8xf32>, vector<24x8xf32>, vector<24x24xf32> -> vector<24x24xf32>
    %cst_60 = arith.constant 0.353553385 : f32
    %104 = vector.broadcast %cst_60 : f32 to vector<24x24xf32>
    %105 = arith.mulf %103, %104 : vector<24x24xf32>
    %106 = arith.addf %105, %11 : vector<24x24xf32>
    %cst_61 = arith.constant dense<0xFF800000> : vector<24xf32>
    %107 = vector.multi_reduction <maximumf>, %106, %cst_61 [1] : vector<24x24xf32> to vector<24xf32>
    %108 = vector.shape_cast %107 : vector<24xf32> to vector<24x1xf32>
    %109 = vector.broadcast %108 : vector<24x1xf32> to vector<24x24xf32>
    %110 = arith.subf %106, %109 : vector<24x24xf32>
    %111 = math.exp %110 : vector<24x24xf32>
    %cst_62 = arith.constant dense<0.000000e+00> : vector<24xf32>
    %112 = vector.multi_reduction <add>, %111, %cst_62 [1] : vector<24x24xf32> to vector<24xf32>
    %113 = vector.shape_cast %112 : vector<24xf32> to vector<24x1xf32>
    %114 = tpu.reciprocal %113 {approx = true} : vector<24x1xf32> -> vector<24x1xf32>
    %115 = vector.broadcast %114 : vector<24x1xf32> to vector<24x24xf32>
    %116 = arith.mulf %111, %115 : vector<24x24xf32>
    %cst_63 = arith.constant dense<0.000000e+00> : vector<24x8xf32>
    %117 = tpu.matmul %116, %102, %cst_63 {dimension_numbers = #tpu.dot_dimension_numbers<[1], [0], [0], [1], [0, 0, 1, 1], [], []>} : vector<24x24xf32>, vector<24x8xf32>, vector<24x8xf32> -> vector<24x8xf32>
    %c0_64 = arith.constant 0 : index
    %c16 = arith.constant 16 : index
    %c0_65 = arith.constant 0 : index
    %118 = vector.load %arg5[%c0_64, %c16, %c0_65] : memref<2x32x32xf32, #tpu.memory_space<vmem>>, vector<1x8x32xf32>
    %119 = vector.shape_cast %118 : vector<1x8x32xf32> to vector<8x32xf32>
    %cst_66 = arith.constant dense<0.000000e+00> : vector<24x32xf32>
    %120 = tpu.matmul %117, %119, %cst_66 {dimension_numbers = #tpu.dot_dimension_numbers<[1], [0], [0], [1], [0, 0, 1, 1], [], []>} : vector<24x8xf32>, vector<8x32xf32>, vector<24x32xf32> -> vector<24x32xf32>
    %121 = arith.addf %99, %120 : vector<24x32xf32>
    %122 = vector.extract_strided_slice %48 {offsets = [0, 24], sizes = [24, 8], strides = [1, 1]} : vector<24x32xf32> to vector<24x8xf32>
    %123 = vector.extract_strided_slice %51 {offsets = [0, 24], sizes = [24, 8], strides = [1, 1]} : vector<24x32xf32> to vector<24x8xf32>
    %124 = vector.extract_strided_slice %54 {offsets = [0, 24], sizes = [24, 8], strides = [1, 1]} : vector<24x32xf32> to vector<24x8xf32>
    %cst_67 = arith.constant dense<0.000000e+00> : vector<24x24xf32>
    %125 = tpu.matmul %122, %123, %cst_67 {dimension_numbers = #tpu.dot_dimension_numbers<[1], [1], [0], [0], [0, 0, 1, 0], [], []>} : vector<24x8xf32>, vector<24x8xf32>, vector<24x24xf32> -> vector<24x24xf32>
    %cst_68 = arith.constant 0.353553385 : f32
    %126 = vector.broadcast %cst_68 : f32 to vector<24x24xf32>
    %127 = arith.mulf %125, %126 : vector<24x24xf32>
    %128 = arith.addf %127, %11 : vector<24x24xf32>
    %cst_69 = arith.constant dense<0xFF800000> : vector<24xf32>
    %129 = vector.multi_reduction <maximumf>, %128, %cst_69 [1] : vector<24x24xf32> to vector<24xf32>
    %130 = vector.shape_cast %129 : vector<24xf32> to vector<24x1xf32>
    %131 = vector.broadcast %130 : vector<24x1xf32> to vector<24x24xf32>
    %132 = arith.subf %128, %131 : vector<24x24xf32>
    %133 = math.exp %132 : vector<24x24xf32>
    %cst_70 = arith.constant dense<0.000000e+00> : vector<24xf32>
    %134 = vector.multi_reduction <add>, %133, %cst_70 [1] : vector<24x24xf32> to vector<24xf32>
    %135 = vector.shape_cast %134 : vector<24xf32> to vector<24x1xf32>
    %136 = tpu.reciprocal %135 {approx = true} : vector<24x1xf32> -> vector<24x1xf32>
    %137 = vector.broadcast %136 : vector<24x1xf32> to vector<24x24xf32>
    %138 = arith.mulf %133, %137 : vector<24x24xf32>
    %cst_71 = arith.constant dense<0.000000e+00> : vector<24x8xf32>
    %139 = tpu.matmul %138, %124, %cst_71 {dimension_numbers = #tpu.dot_dimension_numbers<[1], [0], [0], [1], [0, 0, 1, 1], [], []>} : vector<24x24xf32>, vector<24x8xf32>, vector<24x8xf32> -> vector<24x8xf32>
    %c0_72 = arith.constant 0 : index
    %c24 = arith.constant 24 : index
    %c0_73 = arith.constant 0 : index
    %140 = vector.load %arg5[%c0_72, %c24, %c0_73] : memref<2x32x32xf32, #tpu.memory_space<vmem>>, vector<1x8x32xf32>
    %141 = vector.shape_cast %140 : vector<1x8x32xf32> to vector<8x32xf32>
    %cst_74 = arith.constant dense<0.000000e+00> : vector<24x32xf32>
    %142 = tpu.matmul %139, %141, %cst_74 {dimension_numbers = #tpu.dot_dimension_numbers<[1], [0], [0], [1], [0, 0, 1, 1], [], []>} : vector<24x8xf32>, vector<8x32xf32>, vector<24x32xf32> -> vector<24x32xf32>
    %143 = arith.addf %121, %142 : vector<24x32xf32>
    %144 = arith.addf %5, %143 : vector<24x32xf32>
    %145 = vector.broadcast %21 : vector<1x32xf32> to vector<24x32xf32>
    %146 = arith.addf %144, %145 : vector<24x32xf32>
    %cst_75 = arith.constant dense<0.000000e+00> : vector<24xf32>
    %147 = vector.multi_reduction <add>, %146, %cst_75 [1] : vector<24x32xf32> to vector<24xf32>
    %148 = vector.shape_cast %147 : vector<24xf32> to vector<24x1xf32>
    %cst_76 = arith.constant 3.200000e+01 : f32
    %149 = vector.broadcast %cst_76 : f32 to vector<24x1xf32>
    %150 = arith.divf %148, %149 : vector<24x1xf32>
    %151 = vector.broadcast %150 : vector<24x1xf32> to vector<24x32xf32>
    %152 = arith.subf %146, %151 : vector<24x32xf32>
    %153 = arith.mulf %152, %152 : vector<24x32xf32>
    %cst_77 = arith.constant dense<0.000000e+00> : vector<24xf32>
    %154 = vector.multi_reduction <add>, %153, %cst_77 [1] : vector<24x32xf32> to vector<24xf32>
    %155 = vector.shape_cast %154 : vector<24xf32> to vector<24x1xf32>
    %cst_78 = arith.constant 3.200000e+01 : f32
    %156 = vector.broadcast %cst_78 : f32 to vector<24x1xf32>
    %157 = arith.divf %155, %156 : vector<24x1xf32>
    %158 = vector.broadcast %150 : vector<24x1xf32> to vector<24x32xf32>
    %159 = arith.subf %146, %158 : vector<24x32xf32>
    %cst_79 = arith.constant 9.99999974E-6 : f32
    %160 = vector.broadcast %cst_79 : f32 to vector<24x1xf32>
    %161 = arith.addf %157, %160 : vector<24x1xf32>
    %162 = math.rsqrt %161 : vector<24x1xf32>
    %163 = vector.broadcast %162 : vector<24x1xf32> to vector<24x32xf32>
    %164 = arith.mulf %159, %163 : vector<24x32xf32>
    %165 = vector.broadcast %17 : vector<1x32xf32> to vector<24x32xf32>
    %166 = arith.mulf %164, %165 : vector<24x32xf32>
    %167 = vector.broadcast %19 : vector<1x32xf32> to vector<24x32xf32>
    %168 = arith.addf %166, %167 : vector<24x32xf32>
    %c0_80 = arith.constant 0 : index
    %c0_81 = arith.constant 0 : index
    %c0_82 = arith.constant 0 : index
    %169 = vector.load %arg6[%c0_80, %c0_81, %c0_82] : memref<2x32x64xf32, #tpu.memory_space<vmem>>, vector<1x32x64xf32>
    %170 = vector.shape_cast %169 : vector<1x32x64xf32> to vector<32x64xf32>
    %cst_83 = arith.constant dense<0.000000e+00> : vector<24x64xf32>
    %171 = tpu.matmul %168, %170, %cst_83 {dimension_numbers = #tpu.dot_dimension_numbers<[1], [0], [0], [1], [0, 0, 1, 1], [], []>} : vector<24x32xf32>, vector<32x64xf32>, vector<24x64xf32> -> vector<24x64xf32>
    %c0_84 = arith.constant 0 : index
    %c0_85 = arith.constant 0 : index
    %c0_86 = arith.constant 0 : index
    %172 = vector.load %arg7[%c0_84, %c0_85, %c0_86] : memref<2x1x64xf32, #tpu.memory_space<vmem>>, vector<1x1x64xf32>
    %173 = vector.shape_cast %172 : vector<1x1x64xf32> to vector<1x64xf32>
    %174 = vector.broadcast %173 : vector<1x64xf32> to vector<24x64xf32>
    %175 = arith.addf %171, %174 : vector<24x64xf32>
    %176 = arith.mulf %175, %175 : vector<24x64xf32>
    %177 = arith.mulf %175, %176 : vector<24x64xf32>
    %cst_87 = arith.constant 4.471500e-02 : f32
    %178 = vector.broadcast %cst_87 : f32 to vector<24x64xf32>
    %179 = arith.mulf %178, %177 : vector<24x64xf32>
    %180 = arith.addf %175, %179 : vector<24x64xf32>
    %cst_88 = arith.constant 0.797884583 : f32
    %181 = vector.broadcast %cst_88 : f32 to vector<24x64xf32>
    %182 = arith.mulf %181, %180 : vector<24x64xf32>
    %183 = math.tanh %182 : vector<24x64xf32>
    %cst_89 = arith.constant 1.000000e+00 : f32
    %184 = vector.broadcast %cst_89 : f32 to vector<24x64xf32>
    %185 = arith.addf %184, %183 : vector<24x64xf32>
    %cst_90 = arith.constant 5.000000e-01 : f32
    %186 = vector.broadcast %cst_90 : f32 to vector<24x64xf32>
    %187 = arith.mulf %186, %185 : vector<24x64xf32>
    %188 = arith.mulf %175, %187 : vector<24x64xf32>
    %c0_91 = arith.constant 0 : index
    %c0_92 = arith.constant 0 : index
    %c0_93 = arith.constant 0 : index
    %189 = vector.load %arg8[%c0_91, %c0_92, %c0_93] : memref<2x64x32xf32, #tpu.memory_space<vmem>>, vector<1x64x32xf32>
    %190 = vector.shape_cast %189 : vector<1x64x32xf32> to vector<64x32xf32>
    %cst_94 = arith.constant dense<0.000000e+00> : vector<24x32xf32>
    %191 = tpu.matmul %188, %190, %cst_94 {dimension_numbers = #tpu.dot_dimension_numbers<[1], [0], [0], [1], [0, 0, 1, 1], [], []>} : vector<24x64xf32>, vector<64x32xf32>, vector<24x32xf32> -> vector<24x32xf32>
    %192 = arith.addf %146, %191 : vector<24x32xf32>
    %193 = vector.broadcast %23 : vector<1x32xf32> to vector<24x32xf32>
    %194 = arith.addf %192, %193 : vector<24x32xf32>
    %c1_95 = arith.constant 1 : index
    %c0_96 = arith.constant 0 : index
    %c0_97 = arith.constant 0 : index
    %195 = vector.load %arg9[%c1_95, %c0_96, %c0_97] : memref<2x8x32xf32, #tpu.memory_space<vmem>>, vector<1x1x32xf32>
    %196 = vector.shape_cast %195 : vector<1x1x32xf32> to vector<1x32xf32>
    %c1_98 = arith.constant 1 : index
    %c1_99 = arith.constant 1 : index
    %c0_100 = arith.constant 0 : index
    %197 = vector.load %arg9[%c1_98, %c1_99, %c0_100] : memref<2x8x32xf32, #tpu.memory_space<vmem>>, vector<1x1x32xf32>
    %198 = vector.shape_cast %197 : vector<1x1x32xf32> to vector<1x32xf32>
    %c1_101 = arith.constant 1 : index
    %c2_102 = arith.constant 2 : index
    %c0_103 = arith.constant 0 : index
    %199 = vector.load %arg9[%c1_101, %c2_102, %c0_103] : memref<2x8x32xf32, #tpu.memory_space<vmem>>, vector<1x1x32xf32>
    %200 = vector.shape_cast %199 : vector<1x1x32xf32> to vector<1x32xf32>
    %c1_104 = arith.constant 1 : index
    %c3_105 = arith.constant 3 : index
    %c0_106 = arith.constant 0 : index
    %201 = vector.load %arg9[%c1_104, %c3_105, %c0_106] : memref<2x8x32xf32, #tpu.memory_space<vmem>>, vector<1x1x32xf32>
    %202 = vector.shape_cast %201 : vector<1x1x32xf32> to vector<1x32xf32>
    %c1_107 = arith.constant 1 : index
    %c4_108 = arith.constant 4 : index
    %c0_109 = arith.constant 0 : index
    %203 = vector.load %arg9[%c1_107, %c4_108, %c0_109] : memref<2x8x32xf32, #tpu.memory_space<vmem>>, vector<1x1x32xf32>
    %204 = vector.shape_cast %203 : vector<1x1x32xf32> to vector<1x32xf32>
    %c1_110 = arith.constant 1 : index
    %c5_111 = arith.constant 5 : index
    %c0_112 = arith.constant 0 : index
    %205 = vector.load %arg9[%c1_110, %c5_111, %c0_112] : memref<2x8x32xf32, #tpu.memory_space<vmem>>, vector<1x1x32xf32>
    %206 = vector.shape_cast %205 : vector<1x1x32xf32> to vector<1x32xf32>
    %cst_113 = arith.constant dense<0.000000e+00> : vector<24xf32>
    %207 = vector.multi_reduction <add>, %194, %cst_113 [1] : vector<24x32xf32> to vector<24xf32>
    %208 = vector.shape_cast %207 : vector<24xf32> to vector<24x1xf32>
    %cst_114 = arith.constant 3.200000e+01 : f32
    %209 = vector.broadcast %cst_114 : f32 to vector<24x1xf32>
    %210 = arith.divf %208, %209 : vector<24x1xf32>
    %211 = vector.broadcast %210 : vector<24x1xf32> to vector<24x32xf32>
    %212 = arith.subf %194, %211 : vector<24x32xf32>
    %213 = arith.mulf %212, %212 : vector<24x32xf32>
    %cst_115 = arith.constant dense<0.000000e+00> : vector<24xf32>
    %214 = vector.multi_reduction <add>, %213, %cst_115 [1] : vector<24x32xf32> to vector<24xf32>
    %215 = vector.shape_cast %214 : vector<24xf32> to vector<24x1xf32>
    %cst_116 = arith.constant 3.200000e+01 : f32
    %216 = vector.broadcast %cst_116 : f32 to vector<24x1xf32>
    %217 = arith.divf %215, %216 : vector<24x1xf32>
    %218 = vector.broadcast %210 : vector<24x1xf32> to vector<24x32xf32>
    %219 = arith.subf %194, %218 : vector<24x32xf32>
    %cst_117 = arith.constant 9.99999974E-6 : f32
    %220 = vector.broadcast %cst_117 : f32 to vector<24x1xf32>
    %221 = arith.addf %217, %220 : vector<24x1xf32>
    %222 = math.rsqrt %221 : vector<24x1xf32>
    %223 = vector.broadcast %222 : vector<24x1xf32> to vector<24x32xf32>
    %224 = arith.mulf %219, %223 : vector<24x32xf32>
    %225 = vector.broadcast %196 : vector<1x32xf32> to vector<24x32xf32>
    %226 = arith.mulf %224, %225 : vector<24x32xf32>
    %227 = vector.broadcast %198 : vector<1x32xf32> to vector<24x32xf32>
    %228 = arith.addf %226, %227 : vector<24x32xf32>
    %c1_118 = arith.constant 1 : index
    %c0_119 = arith.constant 0 : index
    %c0_120 = arith.constant 0 : index
    %c0_121 = arith.constant 0 : index
    %229 = vector.load %arg4[%c1_118, %c0_119, %c0_120, %c0_121] : memref<2x3x32x32xf32, #tpu.memory_space<vmem>>, vector<1x1x32x32xf32>
    %230 = vector.shape_cast %229 : vector<1x1x32x32xf32> to vector<32x32xf32>
    %cst_122 = arith.constant dense<0.000000e+00> : vector<24x32xf32>
    %231 = tpu.matmul %228, %230, %cst_122 {dimension_numbers = #tpu.dot_dimension_numbers<[1], [0], [0], [1], [0, 0, 1, 1], [], []>} : vector<24x32xf32>, vector<32x32xf32>, vector<24x32xf32> -> vector<24x32xf32>
    %c1_123 = arith.constant 1 : index
    %c1_124 = arith.constant 1 : index
    %c0_125 = arith.constant 0 : index
    %c0_126 = arith.constant 0 : index
    %232 = vector.load %arg4[%c1_123, %c1_124, %c0_125, %c0_126] : memref<2x3x32x32xf32, #tpu.memory_space<vmem>>, vector<1x1x32x32xf32>
    %233 = vector.shape_cast %232 : vector<1x1x32x32xf32> to vector<32x32xf32>
    %cst_127 = arith.constant dense<0.000000e+00> : vector<24x32xf32>
    %234 = tpu.matmul %228, %233, %cst_127 {dimension_numbers = #tpu.dot_dimension_numbers<[1], [0], [0], [1], [0, 0, 1, 1], [], []>} : vector<24x32xf32>, vector<32x32xf32>, vector<24x32xf32> -> vector<24x32xf32>
    %c1_128 = arith.constant 1 : index
    %c2_129 = arith.constant 2 : index
    %c0_130 = arith.constant 0 : index
    %c0_131 = arith.constant 0 : index
    %235 = vector.load %arg4[%c1_128, %c2_129, %c0_130, %c0_131] : memref<2x3x32x32xf32, #tpu.memory_space<vmem>>, vector<1x1x32x32xf32>
    %236 = vector.shape_cast %235 : vector<1x1x32x32xf32> to vector<32x32xf32>
    %cst_132 = arith.constant dense<0.000000e+00> : vector<24x32xf32>
    %237 = tpu.matmul %228, %236, %cst_132 {dimension_numbers = #tpu.dot_dimension_numbers<[1], [0], [0], [1], [0, 0, 1, 1], [], []>} : vector<24x32xf32>, vector<32x32xf32>, vector<24x32xf32> -> vector<24x32xf32>
    %cst_133 = arith.constant 0.000000e+00 : f32
    %238 = vector.broadcast %cst_133 : f32 to vector<24x32xf32>
    %239 = vector.extract_strided_slice %231 {offsets = [0, 0], sizes = [24, 8], strides = [1, 1]} : vector<24x32xf32> to vector<24x8xf32>
    %240 = vector.extract_strided_slice %234 {offsets = [0, 0], sizes = [24, 8], strides = [1, 1]} : vector<24x32xf32> to vector<24x8xf32>
    %241 = vector.extract_strided_slice %237 {offsets = [0, 0], sizes = [24, 8], strides = [1, 1]} : vector<24x32xf32> to vector<24x8xf32>
    %cst_134 = arith.constant dense<0.000000e+00> : vector<24x24xf32>
    %242 = tpu.matmul %239, %240, %cst_134 {dimension_numbers = #tpu.dot_dimension_numbers<[1], [1], [0], [0], [0, 0, 1, 0], [], []>} : vector<24x8xf32>, vector<24x8xf32>, vector<24x24xf32> -> vector<24x24xf32>
    %cst_135 = arith.constant 0.353553385 : f32
    %243 = vector.broadcast %cst_135 : f32 to vector<24x24xf32>
    %244 = arith.mulf %242, %243 : vector<24x24xf32>
    %245 = arith.addf %244, %11 : vector<24x24xf32>
    %cst_136 = arith.constant dense<0xFF800000> : vector<24xf32>
    %246 = vector.multi_reduction <maximumf>, %245, %cst_136 [1] : vector<24x24xf32> to vector<24xf32>
    %247 = vector.shape_cast %246 : vector<24xf32> to vector<24x1xf32>
    %248 = vector.broadcast %247 : vector<24x1xf32> to vector<24x24xf32>
    %249 = arith.subf %245, %248 : vector<24x24xf32>
    %250 = math.exp %249 : vector<24x24xf32>
    %cst_137 = arith.constant dense<0.000000e+00> : vector<24xf32>
    %251 = vector.multi_reduction <add>, %250, %cst_137 [1] : vector<24x24xf32> to vector<24xf32>
    %252 = vector.shape_cast %251 : vector<24xf32> to vector<24x1xf32>
    %253 = tpu.reciprocal %252 {approx = true} : vector<24x1xf32> -> vector<24x1xf32>
    %254 = vector.broadcast %253 : vector<24x1xf32> to vector<24x24xf32>
    %255 = arith.mulf %250, %254 : vector<24x24xf32>
    %cst_138 = arith.constant dense<0.000000e+00> : vector<24x8xf32>
    %256 = tpu.matmul %255, %241, %cst_138 {dimension_numbers = #tpu.dot_dimension_numbers<[1], [0], [0], [1], [0, 0, 1, 1], [], []>} : vector<24x24xf32>, vector<24x8xf32>, vector<24x8xf32> -> vector<24x8xf32>
    %c1_139 = arith.constant 1 : index
    %c0_140 = arith.constant 0 : index
    %c0_141 = arith.constant 0 : index
    %257 = vector.load %arg5[%c1_139, %c0_140, %c0_141] : memref<2x32x32xf32, #tpu.memory_space<vmem>>, vector<1x8x32xf32>
    %258 = vector.shape_cast %257 : vector<1x8x32xf32> to vector<8x32xf32>
    %cst_142 = arith.constant dense<0.000000e+00> : vector<24x32xf32>
    %259 = tpu.matmul %256, %258, %cst_142 {dimension_numbers = #tpu.dot_dimension_numbers<[1], [0], [0], [1], [0, 0, 1, 1], [], []>} : vector<24x8xf32>, vector<8x32xf32>, vector<24x32xf32> -> vector<24x32xf32>
    %260 = arith.addf %238, %259 : vector<24x32xf32>
    %261 = vector.extract_strided_slice %231 {offsets = [0, 8], sizes = [24, 8], strides = [1, 1]} : vector<24x32xf32> to vector<24x8xf32>
    %262 = vector.extract_strided_slice %234 {offsets = [0, 8], sizes = [24, 8], strides = [1, 1]} : vector<24x32xf32> to vector<24x8xf32>
    %263 = vector.extract_strided_slice %237 {offsets = [0, 8], sizes = [24, 8], strides = [1, 1]} : vector<24x32xf32> to vector<24x8xf32>
    %cst_143 = arith.constant dense<0.000000e+00> : vector<24x24xf32>
    %264 = tpu.matmul %261, %262, %cst_143 {dimension_numbers = #tpu.dot_dimension_numbers<[1], [1], [0], [0], [0, 0, 1, 0], [], []>} : vector<24x8xf32>, vector<24x8xf32>, vector<24x24xf32> -> vector<24x24xf32>
    %cst_144 = arith.constant 0.353553385 : f32
    %265 = vector.broadcast %cst_144 : f32 to vector<24x24xf32>
    %266 = arith.mulf %264, %265 : vector<24x24xf32>
    %267 = arith.addf %266, %11 : vector<24x24xf32>
    %cst_145 = arith.constant dense<0xFF800000> : vector<24xf32>
    %268 = vector.multi_reduction <maximumf>, %267, %cst_145 [1] : vector<24x24xf32> to vector<24xf32>
    %269 = vector.shape_cast %268 : vector<24xf32> to vector<24x1xf32>
    %270 = vector.broadcast %269 : vector<24x1xf32> to vector<24x24xf32>
    %271 = arith.subf %267, %270 : vector<24x24xf32>
    %272 = math.exp %271 : vector<24x24xf32>
    %cst_146 = arith.constant dense<0.000000e+00> : vector<24xf32>
    %273 = vector.multi_reduction <add>, %272, %cst_146 [1] : vector<24x24xf32> to vector<24xf32>
    %274 = vector.shape_cast %273 : vector<24xf32> to vector<24x1xf32>
    %275 = tpu.reciprocal %274 {approx = true} : vector<24x1xf32> -> vector<24x1xf32>
    %276 = vector.broadcast %275 : vector<24x1xf32> to vector<24x24xf32>
    %277 = arith.mulf %272, %276 : vector<24x24xf32>
    %cst_147 = arith.constant dense<0.000000e+00> : vector<24x8xf32>
    %278 = tpu.matmul %277, %263, %cst_147 {dimension_numbers = #tpu.dot_dimension_numbers<[1], [0], [0], [1], [0, 0, 1, 1], [], []>} : vector<24x24xf32>, vector<24x8xf32>, vector<24x8xf32> -> vector<24x8xf32>
    %c1_148 = arith.constant 1 : index
    %c8_149 = arith.constant 8 : index
    %c0_150 = arith.constant 0 : index
    %279 = vector.load %arg5[%c1_148, %c8_149, %c0_150] : memref<2x32x32xf32, #tpu.memory_space<vmem>>, vector<1x8x32xf32>
    %280 = vector.shape_cast %279 : vector<1x8x32xf32> to vector<8x32xf32>
    %cst_151 = arith.constant dense<0.000000e+00> : vector<24x32xf32>
    %281 = tpu.matmul %278, %280, %cst_151 {dimension_numbers = #tpu.dot_dimension_numbers<[1], [0], [0], [1], [0, 0, 1, 1], [], []>} : vector<24x8xf32>, vector<8x32xf32>, vector<24x32xf32> -> vector<24x32xf32>
    %282 = arith.addf %260, %281 : vector<24x32xf32>
    %283 = vector.extract_strided_slice %231 {offsets = [0, 16], sizes = [24, 8], strides = [1, 1]} : vector<24x32xf32> to vector<24x8xf32>
    %284 = vector.extract_strided_slice %234 {offsets = [0, 16], sizes = [24, 8], strides = [1, 1]} : vector<24x32xf32> to vector<24x8xf32>
    %285 = vector.extract_strided_slice %237 {offsets = [0, 16], sizes = [24, 8], strides = [1, 1]} : vector<24x32xf32> to vector<24x8xf32>
    %cst_152 = arith.constant dense<0.000000e+00> : vector<24x24xf32>
    %286 = tpu.matmul %283, %284, %cst_152 {dimension_numbers = #tpu.dot_dimension_numbers<[1], [1], [0], [0], [0, 0, 1, 0], [], []>} : vector<24x8xf32>, vector<24x8xf32>, vector<24x24xf32> -> vector<24x24xf32>
    %cst_153 = arith.constant 0.353553385 : f32
    %287 = vector.broadcast %cst_153 : f32 to vector<24x24xf32>
    %288 = arith.mulf %286, %287 : vector<24x24xf32>
    %289 = arith.addf %288, %11 : vector<24x24xf32>
    %cst_154 = arith.constant dense<0xFF800000> : vector<24xf32>
    %290 = vector.multi_reduction <maximumf>, %289, %cst_154 [1] : vector<24x24xf32> to vector<24xf32>
    %291 = vector.shape_cast %290 : vector<24xf32> to vector<24x1xf32>
    %292 = vector.broadcast %291 : vector<24x1xf32> to vector<24x24xf32>
    %293 = arith.subf %289, %292 : vector<24x24xf32>
    %294 = math.exp %293 : vector<24x24xf32>
    %cst_155 = arith.constant dense<0.000000e+00> : vector<24xf32>
    %295 = vector.multi_reduction <add>, %294, %cst_155 [1] : vector<24x24xf32> to vector<24xf32>
    %296 = vector.shape_cast %295 : vector<24xf32> to vector<24x1xf32>
    %297 = tpu.reciprocal %296 {approx = true} : vector<24x1xf32> -> vector<24x1xf32>
    %298 = vector.broadcast %297 : vector<24x1xf32> to vector<24x24xf32>
    %299 = arith.mulf %294, %298 : vector<24x24xf32>
    %cst_156 = arith.constant dense<0.000000e+00> : vector<24x8xf32>
    %300 = tpu.matmul %299, %285, %cst_156 {dimension_numbers = #tpu.dot_dimension_numbers<[1], [0], [0], [1], [0, 0, 1, 1], [], []>} : vector<24x24xf32>, vector<24x8xf32>, vector<24x8xf32> -> vector<24x8xf32>
    %c1_157 = arith.constant 1 : index
    %c16_158 = arith.constant 16 : index
    %c0_159 = arith.constant 0 : index
    %301 = vector.load %arg5[%c1_157, %c16_158, %c0_159] : memref<2x32x32xf32, #tpu.memory_space<vmem>>, vector<1x8x32xf32>
    %302 = vector.shape_cast %301 : vector<1x8x32xf32> to vector<8x32xf32>
    %cst_160 = arith.constant dense<0.000000e+00> : vector<24x32xf32>
    %303 = tpu.matmul %300, %302, %cst_160 {dimension_numbers = #tpu.dot_dimension_numbers<[1], [0], [0], [1], [0, 0, 1, 1], [], []>} : vector<24x8xf32>, vector<8x32xf32>, vector<24x32xf32> -> vector<24x32xf32>
    %304 = arith.addf %282, %303 : vector<24x32xf32>
    %305 = vector.extract_strided_slice %231 {offsets = [0, 24], sizes = [24, 8], strides = [1, 1]} : vector<24x32xf32> to vector<24x8xf32>
    %306 = vector.extract_strided_slice %234 {offsets = [0, 24], sizes = [24, 8], strides = [1, 1]} : vector<24x32xf32> to vector<24x8xf32>
    %307 = vector.extract_strided_slice %237 {offsets = [0, 24], sizes = [24, 8], strides = [1, 1]} : vector<24x32xf32> to vector<24x8xf32>
    %cst_161 = arith.constant dense<0.000000e+00> : vector<24x24xf32>
    %308 = tpu.matmul %305, %306, %cst_161 {dimension_numbers = #tpu.dot_dimension_numbers<[1], [1], [0], [0], [0, 0, 1, 0], [], []>} : vector<24x8xf32>, vector<24x8xf32>, vector<24x24xf32> -> vector<24x24xf32>
    %cst_162 = arith.constant 0.353553385 : f32
    %309 = vector.broadcast %cst_162 : f32 to vector<24x24xf32>
    %310 = arith.mulf %308, %309 : vector<24x24xf32>
    %311 = arith.addf %310, %11 : vector<24x24xf32>
    %cst_163 = arith.constant dense<0xFF800000> : vector<24xf32>
    %312 = vector.multi_reduction <maximumf>, %311, %cst_163 [1] : vector<24x24xf32> to vector<24xf32>
    %313 = vector.shape_cast %312 : vector<24xf32> to vector<24x1xf32>
    %314 = vector.broadcast %313 : vector<24x1xf32> to vector<24x24xf32>
    %315 = arith.subf %311, %314 : vector<24x24xf32>
    %316 = math.exp %315 : vector<24x24xf32>
    %cst_164 = arith.constant dense<0.000000e+00> : vector<24xf32>
    %317 = vector.multi_reduction <add>, %316, %cst_164 [1] : vector<24x24xf32> to vector<24xf32>
    %318 = vector.shape_cast %317 : vector<24xf32> to vector<24x1xf32>
    %319 = tpu.reciprocal %318 {approx = true} : vector<24x1xf32> -> vector<24x1xf32>
    %320 = vector.broadcast %319 : vector<24x1xf32> to vector<24x24xf32>
    %321 = arith.mulf %316, %320 : vector<24x24xf32>
    %cst_165 = arith.constant dense<0.000000e+00> : vector<24x8xf32>
    %322 = tpu.matmul %321, %307, %cst_165 {dimension_numbers = #tpu.dot_dimension_numbers<[1], [0], [0], [1], [0, 0, 1, 1], [], []>} : vector<24x24xf32>, vector<24x8xf32>, vector<24x8xf32> -> vector<24x8xf32>
    %c1_166 = arith.constant 1 : index
    %c24_167 = arith.constant 24 : index
    %c0_168 = arith.constant 0 : index
    %323 = vector.load %arg5[%c1_166, %c24_167, %c0_168] : memref<2x32x32xf32, #tpu.memory_space<vmem>>, vector<1x8x32xf32>
    %324 = vector.shape_cast %323 : vector<1x8x32xf32> to vector<8x32xf32>
    %cst_169 = arith.constant dense<0.000000e+00> : vector<24x32xf32>
    %325 = tpu.matmul %322, %324, %cst_169 {dimension_numbers = #tpu.dot_dimension_numbers<[1], [0], [0], [1], [0, 0, 1, 1], [], []>} : vector<24x8xf32>, vector<8x32xf32>, vector<24x32xf32> -> vector<24x32xf32>
    %326 = arith.addf %304, %325 : vector<24x32xf32>
    %327 = arith.addf %194, %326 : vector<24x32xf32>
    %328 = vector.broadcast %204 : vector<1x32xf32> to vector<24x32xf32>
    %329 = arith.addf %327, %328 : vector<24x32xf32>
    %cst_170 = arith.constant dense<0.000000e+00> : vector<24xf32>
    %330 = vector.multi_reduction <add>, %329, %cst_170 [1] : vector<24x32xf32> to vector<24xf32>
    %331 = vector.shape_cast %330 : vector<24xf32> to vector<24x1xf32>
    %cst_171 = arith.constant 3.200000e+01 : f32
    %332 = vector.broadcast %cst_171 : f32 to vector<24x1xf32>
    %333 = arith.divf %331, %332 : vector<24x1xf32>
    %334 = vector.broadcast %333 : vector<24x1xf32> to vector<24x32xf32>
    %335 = arith.subf %329, %334 : vector<24x32xf32>
    %336 = arith.mulf %335, %335 : vector<24x32xf32>
    %cst_172 = arith.constant dense<0.000000e+00> : vector<24xf32>
    %337 = vector.multi_reduction <add>, %336, %cst_172 [1] : vector<24x32xf32> to vector<24xf32>
    %338 = vector.shape_cast %337 : vector<24xf32> to vector<24x1xf32>
    %cst_173 = arith.constant 3.200000e+01 : f32
    %339 = vector.broadcast %cst_173 : f32 to vector<24x1xf32>
    %340 = arith.divf %338, %339 : vector<24x1xf32>
    %341 = vector.broadcast %333 : vector<24x1xf32> to vector<24x32xf32>
    %342 = arith.subf %329, %341 : vector<24x32xf32>
    %cst_174 = arith.constant 9.99999974E-6 : f32
    %343 = vector.broadcast %cst_174 : f32 to vector<24x1xf32>
    %344 = arith.addf %340, %343 : vector<24x1xf32>
    %345 = math.rsqrt %344 : vector<24x1xf32>
    %346 = vector.broadcast %345 : vector<24x1xf32> to vector<24x32xf32>
    %347 = arith.mulf %342, %346 : vector<24x32xf32>
    %348 = vector.broadcast %200 : vector<1x32xf32> to vector<24x32xf32>
    %349 = arith.mulf %347, %348 : vector<24x32xf32>
    %350 = vector.broadcast %202 : vector<1x32xf32> to vector<24x32xf32>
    %351 = arith.addf %349, %350 : vector<24x32xf32>
    %c1_175 = arith.constant 1 : index
    %c0_176 = arith.constant 0 : index
    %c0_177 = arith.constant 0 : index
    %352 = vector.load %arg6[%c1_175, %c0_176, %c0_177] : memref<2x32x64xf32, #tpu.memory_space<vmem>>, vector<1x32x64xf32>
    %353 = vector.shape_cast %352 : vector<1x32x64xf32> to vector<32x64xf32>
    %cst_178 = arith.constant dense<0.000000e+00> : vector<24x64xf32>
    %354 = tpu.matmul %351, %353, %cst_178 {dimension_numbers = #tpu.dot_dimension_numbers<[1], [0], [0], [1], [0, 0, 1, 1], [], []>} : vector<24x32xf32>, vector<32x64xf32>, vector<24x64xf32> -> vector<24x64xf32>
    %c1_179 = arith.constant 1 : index
    %c0_180 = arith.constant 0 : index
    %c0_181 = arith.constant 0 : index
    %355 = vector.load %arg7[%c1_179, %c0_180, %c0_181] : memref<2x1x64xf32, #tpu.memory_space<vmem>>, vector<1x1x64xf32>
    %356 = vector.shape_cast %355 : vector<1x1x64xf32> to vector<1x64xf32>
    %357 = vector.broadcast %356 : vector<1x64xf32> to vector<24x64xf32>
    %358 = arith.addf %354, %357 : vector<24x64xf32>
    %359 = arith.mulf %358, %358 : vector<24x64xf32>
    %360 = arith.mulf %358, %359 : vector<24x64xf32>
    %cst_182 = arith.constant 4.471500e-02 : f32
    %361 = vector.broadcast %cst_182 : f32 to vector<24x64xf32>
    %362 = arith.mulf %361, %360 : vector<24x64xf32>
    %363 = arith.addf %358, %362 : vector<24x64xf32>
    %cst_183 = arith.constant 0.797884583 : f32
    %364 = vector.broadcast %cst_183 : f32 to vector<24x64xf32>
    %365 = arith.mulf %364, %363 : vector<24x64xf32>
    %366 = math.tanh %365 : vector<24x64xf32>
    %cst_184 = arith.constant 1.000000e+00 : f32
    %367 = vector.broadcast %cst_184 : f32 to vector<24x64xf32>
    %368 = arith.addf %367, %366 : vector<24x64xf32>
    %cst_185 = arith.constant 5.000000e-01 : f32
    %369 = vector.broadcast %cst_185 : f32 to vector<24x64xf32>
    %370 = arith.mulf %369, %368 : vector<24x64xf32>
    %371 = arith.mulf %358, %370 : vector<24x64xf32>
    %c1_186 = arith.constant 1 : index
    %c0_187 = arith.constant 0 : index
    %c0_188 = arith.constant 0 : index
    %372 = vector.load %arg8[%c1_186, %c0_187, %c0_188] : memref<2x64x32xf32, #tpu.memory_space<vmem>>, vector<1x64x32xf32>
    %373 = vector.shape_cast %372 : vector<1x64x32xf32> to vector<64x32xf32>
    %cst_189 = arith.constant dense<0.000000e+00> : vector<24x32xf32>
    %374 = tpu.matmul %371, %373, %cst_189 {dimension_numbers = #tpu.dot_dimension_numbers<[1], [0], [0], [1], [0, 0, 1, 1], [], []>} : vector<24x64xf32>, vector<64x32xf32>, vector<24x32xf32> -> vector<24x32xf32>
    %375 = arith.addf %329, %374 : vector<24x32xf32>
    %376 = vector.broadcast %206 : vector<1x32xf32> to vector<24x32xf32>
    %377 = arith.addf %375, %376 : vector<24x32xf32>
    %378 = vector.extract_strided_slice %377 {offsets = [0, 0], sizes = [1, 32], strides = [1, 1]} : vector<24x32xf32> to vector<1x32xf32>
    %c0_190 = arith.constant 0 : index
    %c0_191 = arith.constant 0 : index
    %379 = vector.load %arg10[%c0_190, %c0_191] : memref<2x32xf32, #tpu.memory_space<vmem>>, vector<1x32xf32>
    %c1_192 = arith.constant 1 : index
    %c0_193 = arith.constant 0 : index
    %380 = vector.load %arg10[%c1_192, %c0_193] : memref<2x32xf32, #tpu.memory_space<vmem>>, vector<1x32xf32>
    %cst_194 = arith.constant dense<0.000000e+00> : vector<1xf32>
    %381 = vector.multi_reduction <add>, %378, %cst_194 [1] : vector<1x32xf32> to vector<1xf32>
    %382 = vector.shape_cast %381 : vector<1xf32> to vector<1x1xf32>
    %cst_195 = arith.constant 3.200000e+01 : f32
    %383 = vector.broadcast %cst_195 : f32 to vector<1x1xf32>
    %384 = arith.divf %382, %383 : vector<1x1xf32>
    %385 = vector.broadcast %384 : vector<1x1xf32> to vector<1x32xf32>
    %386 = arith.subf %378, %385 : vector<1x32xf32>
    %387 = arith.mulf %386, %386 : vector<1x32xf32>
    %cst_196 = arith.constant dense<0.000000e+00> : vector<1xf32>
    %388 = vector.multi_reduction <add>, %387, %cst_196 [1] : vector<1x32xf32> to vector<1xf32>
    %389 = vector.shape_cast %388 : vector<1xf32> to vector<1x1xf32>
    %cst_197 = arith.constant 3.200000e+01 : f32
    %390 = vector.broadcast %cst_197 : f32 to vector<1x1xf32>
    %391 = arith.divf %389, %390 : vector<1x1xf32>
    %392 = vector.broadcast %384 : vector<1x1xf32> to vector<1x32xf32>
    %393 = arith.subf %378, %392 : vector<1x32xf32>
    %cst_198 = arith.constant 9.99999974E-6 : f32
    %394 = vector.broadcast %cst_198 : f32 to vector<1x1xf32>
    %395 = arith.addf %391, %394 : vector<1x1xf32>
    %396 = math.rsqrt %395 : vector<1x1xf32>
    %397 = vector.broadcast %396 : vector<1x1xf32> to vector<1x32xf32>
    %398 = arith.mulf %393, %397 : vector<1x32xf32>
    %399 = arith.mulf %398, %379 : vector<1x32xf32>
    %400 = arith.addf %399, %380 : vector<1x32xf32>
    %c0_199 = arith.constant 0 : index
    %c0_200 = arith.constant 0 : index
    %401 = vector.load %arg11[%c0_199, %c0_200] : memref<32x128xf32, #tpu.memory_space<vmem>>, vector<32x128xf32>
    %cst_201 = arith.constant dense<0.000000e+00> : vector<1x128xf32>
    %402 = tpu.matmul %400, %401, %cst_201 {dimension_numbers = #tpu.dot_dimension_numbers<[1], [0], [0], [1], [0, 0, 1, 1], [], []>} : vector<1x32xf32>, vector<32x128xf32>, vector<1x128xf32> -> vector<1x128xf32>
    %c0_202 = arith.constant 0 : index
    %c0_203 = arith.constant 0 : index
    %403 = vector.load %arg12[%c0_202, %c0_203] : memref<1x128xf32, #tpu.memory_space<vmem>>, vector<1x128xf32>
    %404 = arith.addf %402, %403 : vector<1x128xf32>
    %c0_204 = arith.constant 0 : index
    %c0_205 = arith.constant 0 : index
    %c0_206 = arith.constant 0 : index
    %405 = vector.load %arg13[%c0_204, %c0_205, %c0_206] : memref<1x1x128xf32, #tpu.memory_space<vmem>>, vector<1x1x128xf32>
    %406 = vector.shape_cast %405 : vector<1x1x128xf32> to vector<1x128xf32>
    %407 = vector.shape_cast %404 : vector<1x128xf32> to vector<1x1x128xf32>
    tpu.vector_store %arg13[%c0_204, %c0_205, %c0_206], %407 {strides = array<i32>} : memref<1x1x128xf32, #tpu.memory_space<vmem>>, vector<1x1x128xf32>,
    return
  }
  func.func @transform_0(%arg0: i32) -> (i32, i32, i32) {
    %c0_i32 = arith.constant 0 : i32
    %c0_i32_0 = arith.constant 0 : i32
    %c0_i32_1 = arith.constant 0 : i32
    return %arg0, %c0_i32, %c0_i32_0 : i32, i32, i32
  }
  func.func @transform_1(%arg0: i32) -> (i32, i32) {
    %c0_i32 = arith.constant 0 : i32
    %c0_i32_0 = arith.constant 0 : i32
    %c0_i32_1 = arith.constant 0 : i32
    return %c0_i32, %c0_i32_0 : i32, i32
  }
  func.func @transform_2(%arg0: i32) -> (i32, i32) {
    %c0_i32 = arith.constant 0 : i32
    %c0_i32_0 = arith.constant 0 : i32
    %c0_i32_1 = arith.constant 0 : i32
    return %c0_i32, %c0_i32_0 : i32, i32
  }
  func.func @transform_3(%arg0: i32) -> (i32, i32, i32, i32) {
    %c0_i32 = arith.constant 0 : i32
    %c0_i32_0 = arith.constant 0 : i32
    %c0_i32_1 = arith.constant 0 : i32
    %c0_i32_2 = arith.constant 0 : i32
    %c0_i32_3 = arith.constant 0 : i32
    return %c0_i32, %c0_i32_0, %c0_i32_1, %c0_i32_2 : i32, i32, i32, i32
  }
  func.func @transform_4(%arg0: i32) -> (i32, i32, i32) {
    %c0_i32 = arith.constant 0 : i32
    %c0_i32_0 = arith.constant 0 : i32
    %c0_i32_1 = arith.constant 0 : i32
    %c0_i32_2 = arith.constant 0 : i32
    return %c0_i32, %c0_i32_0, %c0_i32_1 : i32, i32, i32
  }
  func.func @transform_5(%arg0: i32) -> (i32, i32, i32) {
    %c0_i32 = arith.constant 0 : i32
    %c0_i32_0 = arith.constant 0 : i32
    %c0_i32_1 = arith.constant 0 : i32
    %c0_i32_2 = arith.constant 0 : i32
    return %c0_i32, %c0_i32_0, %c0_i32_1 : i32, i32, i32
  }
  func.func @transform_6(%arg0: i32) -> (i32, i32, i32) {
    %c0_i32 = arith.constant 0 : i32
    %c0_i32_0 = arith.constant 0 : i32
    %c0_i32_1 = arith.constant 0 : i32
    %c0_i32_2 = arith.constant 0 : i32
    return %c0_i32, %c0_i32_0, %c0_i32_1 : i32, i32, i32
  }
  func.func @transform_7(%arg0: i32) -> (i32, i32, i32) {
    %c0_i32 = arith.constant 0 : i32
    %c0_i32_0 = arith.constant 0 : i32
    %c0_i32_1 = arith.constant 0 : i32
    %c0_i32_2 = arith.constant 0 : i32
    return %c0_i32, %c0_i32_0, %c0_i32_1 : i32, i32, i32
  }
  func.func @transform_8(%arg0: i32) -> (i32, i32, i32) {
    %c0_i32 = arith.constant 0 : i32
    %c0_i32_0 = arith.constant 0 : i32
    %c0_i32_1 = arith.constant 0 : i32
    %c0_i32_2 = arith.constant 0 : i32
    return %c0_i32, %c0_i32_0, %c0_i32_1 : i32, i32, i32
  }
  func.func @transform_9(%arg0: i32) -> (i32, i32) {
    %c0_i32 = arith.constant 0 : i32
    %c0_i32_0 = arith.constant 0 : i32
    %c0_i32_1 = arith.constant 0 : i32
    return %c0_i32, %c0_i32_0 : i32, i32
  }
  func.func @transform_10(%arg0: i32) -> (i32, i32) {
    %c0_i32 = arith.constant 0 : i32
    %c0_i32_0 = arith.constant 0 : i32
    %c0_i32_1 = arith.constant 0 : i32
    return %c0_i32, %c0_i32_0 : i32, i32
  }
  func.func @transform_11(%arg0: i32) -> (i32, i32) {
    %c0_i32 = arith.constant 0 : i32
    %c0_i32_0 = arith.constant 0 : i32
    %c0_i32_1 = arith.constant 0 : i32
    return %c0_i32, %c0_i32_0 : i32, i32
  }
  func.func @transform_12(%arg0: i32) -> (i32, i32, i32) {
    %c0_i32 = arith.constant 0 : i32
    %c0_i32_0 = arith.constant 0 : i32
    %c0_i32_1 = arith.constant 0 : i32
    return %arg0, %c0_i32, %c0_i32_0 : i32, i32, i32
  }
}

</mosaic_0001>

<llo_original>
// kernel: vit_forward.1
$region0: #{vit_forward.1}
  #allocation0 [shape = 'u32[]', space=smem, size = 0x4, offset = 0x4, fixed_abs, tag = 'smem constant byte address 0x4 - core index']
  #allocation1 [shape = 'u32[144,128]{1,0:T(1,128)}', space=vmem, size = 0x12000, scoped, tag = 'internal scratch']
  %s0 = inlined_call_operand.vmem [shape: f32[2,24,64], index: 0, kind: input, shape index: {}]
  %s1 = inlined_call_operand.vmem [shape: f32[64,32], index: 1, kind: input, shape index: {}]
  %s2 = inlined_call_operand.vmem [shape: f32[24,32], index: 2, kind: input, shape index: {}]
  %s3 = inlined_call_operand.vmem [shape: f32[2,3,32,32], index: 3, kind: input, shape index: {}]
  %s4 = inlined_call_operand.vmem [shape: f32[2,32,32], index: 4, kind: input, shape index: {}]
  %s5 = inlined_call_operand.vmem [shape: f32[2,32,64], index: 5, kind: input, shape index: {}]
  %s6 = inlined_call_operand.vmem [shape: f32[2,1,64], index: 6, kind: input, shape index: {}]
  %s7 = inlined_call_operand.vmem [shape: f32[2,64,32], index: 7, kind: input, shape index: {}]
  %s8 = inlined_call_operand.vmem [shape: f32[2,8,32], index: 8, kind: input, shape index: {}]
  %s9 = inlined_call_operand.vmem [shape: f32[2,32], index: 9, kind: input, shape index: {}]
  %s10 = inlined_call_operand.vmem [shape: f32[32,128], index: 10, kind: input, shape index: {}]
  %s11 = inlined_call_operand.vmem [shape: f32[1,128], index: 11, kind: input, shape index: {}]
  %s12 = inlined_call_operand.hbm [shape: f32[2,1,128], index: 12, kind: output, shape index: {}]
  %s13 = sld [smem:[#allocation0]]
  $region81: #{vit_forward.1} parent=0
    _
  %s15 = ssub.s32 1, %s13
  %s16 = scalar_select 0, %s15, %s13
  $region1: #{vit_forward.1} parent=0
    #allocation2 [shape = 'u8[1024]{0}', space=vmem, size = 0x400, scoped, tag = 'output window, operand 0']
    #allocation3 [shape = 's32[2]{0}', space=sflag, size = 0x8, scoped, tag = 'scoped memory for vit_forward.1']
    %17 = vsyncpa [#allocation3], 0
    %s18 = scalar_lea.sflag [#allocation3], 1
    %19 = vsyncpa %s18, 0
    loop: start=0, step=1, limit=4
    $region2: #{vit_forward.1} parent=1 // loop_pre_header
      _
    $region3: #{vit_forward.1} parent=1 // loop_header
      %s21 = sphi 0, %s25
      %p22 = scmp.ge.s32.totalorder %s21, 4
      %s31 = sphi 0, %s33
      %s34 = sphi 0, %s31
      %s35 = sphi 0, %s34
      %s51 = sphi 0, %s35
      %s55 = sphi 0, %s55
      %s57 = sphi 0, %s55
      %s58 = sphi 0, %s57
      %s72 = sphi 0, %s58
      %s76 = sphi 0, %s76
      %s78 = sphi 0, %s76
      %s79 = sphi 0, %s78
      %s93 = sphi 0, %s79
      %s97 = sphi 0, %s97
      %s99 = sphi 0, %s97
      %s100 = sphi 0, %s99
      %s114 = sphi 0, %s100
      %s118 = sphi 0, %s118
      %s120 = sphi 0, %s118
      %s121 = sphi 0, %s120
      %s135 = sphi 0, %s121
      %s139 = sphi 0, %s139
      %s141 = sphi 0, %s139
      %s142 = sphi 0, %s141
      %s156 = sphi 0, %s142
      %s160 = sphi 0, %s160
      %s162 = sphi 0, %s160
      %s163 = sphi 0, %s162
      %s177 = sphi 0, %s163
      %s181 = sphi 0, %s181
      %s183 = sphi 0, %s181
      %s184 = sphi 0, %s183
      %s198 = sphi 0, %s184
      %s202 = sphi 0, %s202
      %s204 = sphi 0, %s202
      %s205 = sphi 0, %s204
      %s219 = sphi 0, %s205
      %s223 = sphi 0, %s223
      %s225 = sphi 0, %s223
      %s226 = sphi 0, %s225
      %s240 = sphi 0, %s226
      %s244 = sphi 0, %s244
      %s246 = sphi 0, %s244
      %s247 = sphi 0, %s246
      %s261 = sphi 0, %s247
      %s265 = sphi 0, %s265
      %s267 = sphi 0, %s265
      %s268 = sphi 0, %s267
      %s282 = sphi 0, %s268
      %s288 = sphi 0, %s290
      %s291 = sphi 0, %s288
      %s292 = sphi 0, %s291
      %s308 = sphi 0, %s292
    $region4: #{vit_forward.1} parent=1 // loop_header_branch
      %24 = sbr.rel (%p22) target = $region8
    $region5: #{vit_forward.1} parent=1 // loop_body
      %s26 = ssub.s32 %s21, 1
      %s27 = ssub.s32 %s21, 2
      %s28 = sadd.s32 %s21, 1
      %s29 = ssub.s32 %s21, %s28
      %p30 = scmp.eq.s32.totalorder %s29, 0
      %s32 = sadd.s32 %s31, 1
      %s33 = scalar_select %p30, %s31, %s32
      %p36 = pneg %p30
      %p37 = scmp.eq.s32.totalorder %s21, 1
      %p38 = por %p36, %p37
      %p39 = scmp.ne.s32.totalorder %s31, %s34
      %p40 = scmp.eq.s32.totalorder %s21, 0
      %p41 = por %p39, %p40
      %p42 = scmp.ne.s32.totalorder %s31, %s34
      %p43 = scmp.eq.s32.totalorder %s26, 1
      %p44 = por %p42, %p43
      %p45 = scmp.ne.s32.totalorder %s34, %s35
      %p46 = scmp.eq.s32.totalorder %s26, 0
      %p47 = por %p45, %p46
      %p48 = scmp.ne.s32.totalorder %s34, %s35
      %p49 = scmp.eq.s32.totalorder %s27, 1
      %p50 = por %p48, %p49
      %p52 = scmp.ne.s32.totalorder %s35, %s51
      %p53 = scmp.eq.s32.totalorder %s27, 0
      %p54 = por %p52, %p53
      %s56 = sadd.s32 %s55, 1
      %p59 = scmp.eq.s32.totalorder %s21, 1
      %p60 = scmp.ne.s32.totalorder %s55, %s57
      %p61 = scmp.eq.s32.totalorder %s21, 0
      %p62 = por %p60, %p61
      %p63 = scmp.ne.s32.totalorder %s55, %s57
      %p64 = scmp.eq.s32.totalorder %s26, 1
      %p65 = por %p63, %p64
      %p66 = scmp.ne.s32.totalorder %s57, %s58
      %p67 = scmp.eq.s32.totalorder %s26, 0
      %p68 = por %p66, %p67
      %p69 = scmp.ne.s32.totalorder %s57, %s58
      %p70 = scmp.eq.s32.totalorder %s27, 1
      %p71 = por %p69, %p70
      %p73 = scmp.ne.s32.totalorder %s58, %s72
      %p74 = scmp.eq.s32.totalorder %s27, 0
      %p75 = por %p73, %p74
      %s77 = sadd.s32 %s76, 1
      %p80 = scmp.eq.s32.totalorder %s21, 1
      %p81 = scmp.ne.s32.totalorder %s76, %s78
      %p82 = scmp.eq.s32.totalorder %s21, 0
      %p83 = por %p81, %p82
      %p84 = scmp.ne.s32.totalorder %s76, %s78
      %p85 = scmp.eq.s32.totalorder %s26, 1
      %p86 = por %p84, %p85
      %p87 = scmp.ne.s32.totalorder %s78, %s79
      %p88 = scmp.eq.s32.totalorder %s26, 0
      %p89 = por %p87, %p88
      %p90 = scmp.ne.s32.totalorder %s78, %s79
      %p91 = scmp.eq.s32.totalorder %s27, 1
      %p92 = por %p90, %p91
      %p94 = scmp.ne.s32.totalorder %s79, %s93
      %p95 = scmp.eq.s32.totalorder %s27, 0
      %p96 = por %p94, %p95
      %s98 = sadd.s32 %s97, 1
      %p101 = scmp.eq.s32.totalorder %s21, 1
      %p102 = scmp.ne.s32.totalorder %s97, %s99
      %p103 = scmp.eq.s32.totalorder %s21, 0
      %p104 = por %p102, %p103
      %p105 = scmp.ne.s32.totalorder %s97, %s99
      %p106 = scmp.eq.s32.totalorder %s26, 1
      %p107 = por %p105, %p106
      %p108 = scmp.ne.s32.totalorder %s99, %s100
      %p109 = scmp.eq.s32.totalorder %s26, 0
      %p110 = por %p108, %p109
      %p111 = scmp.ne.s32.totalorder %s99, %s100
      %p112 = scmp.eq.s32.totalorder %s27, 1
      %p113 = por %p111, %p112
      %p115 = scmp.ne.s32.totalorder %s100, %s114
      %p116 = scmp.eq.s32.totalorder %s27, 0
      %p117 = por %p115, %p116
      %s119 = sadd.s32 %s118, 1
      %p122 = scmp.eq.s32.totalorder %s21, 1
      %p123 = scmp.ne.s32.totalorder %s118, %s120
      %p124 = scmp.eq.s32.totalorder %s21, 0
      %p125 = por %p123, %p124
      %p126 = scmp.ne.s32.totalorder %s118, %s120
      %p127 = scmp.eq.s32.totalorder %s26, 1
      %p128 = por %p126, %p127
      %p129 = scmp.ne.s32.totalorder %s120, %s121
      %p130 = scmp.eq.s32.totalorder %s26, 0
      %p131 = por %p129, %p130
      %p132 = scmp.ne.s32.totalorder %s120, %s121
      %p133 = scmp.eq.s32.totalorder %s27, 1
      %p134 = por %p132, %p133
      %p136 = scmp.ne.s32.totalorder %s121, %s135
      %p137 = scmp.eq.s32.totalorder %s27, 0
      %p138 = por %p136, %p137
      %s140 = sadd.s32 %s139, 1
      %p143 = scmp.eq.s32.totalorder %s21, 1
      %p144 = scmp.ne.s32.totalorder %s139, %s141
      %p145 = scmp.eq.s32.totalorder %s21, 0
      %p146 = por %p144, %p145
      %p147 = scmp.ne.s32.totalorder %s139, %s141
      %p148 = scmp.eq.s32.totalorder %s26, 1
      %p149 = por %p147, %p148
      %p150 = scmp.ne.s32.totalorder %s141, %s142
      %p151 = scmp.eq.s32.totalorder %s26, 0
      %p152 = por %p150, %p151
      %p153 = scmp.ne.s32.totalorder %s141, %s142
      %p154 = scmp.eq.s32.totalorder %s27, 1
      %p155 = por %p153, %p154
      %p157 = scmp.ne.s32.totalorder %s142, %s156
      %p158 = scmp.eq.s32.totalorder %s27, 0
      %p159 = por %p157, %p158
      %s161 = sadd.s32 %s160, 1
      %p164 = scmp.eq.s32.totalorder %s21, 1
      %p165 = scmp.ne.s32.totalorder %s160, %s162
      %p166 = scmp.eq.s32.totalorder %s21, 0
      %p167 = por %p165, %p166
      %p168 = scmp.ne.s32.totalorder %s160, %s162
      %p169 = scmp.eq.s32.totalorder %s26, 1
      %p170 = por %p168, %p169
      %p171 = scmp.ne.s32.totalorder %s162, %s163
      %p172 = scmp.eq.s32.totalorder %s26, 0
      %p173 = por %p171, %p172
      %p174 = scmp.ne.s32.totalorder %s162, %s163
      %p175 = scmp.eq.s32.totalorder %s27, 1
      %p176 = por %p174, %p175
      %p178 = scmp.ne.s32.totalorder %s163, %s177
      %p179 = scmp.eq.s32.totalorder %s27, 0
      %p180 = por %p178, %p179
      %s182 = sadd.s32 %s181, 1
      %p185 = scmp.eq.s32.totalorder %s21, 1
      %p186 = scmp.ne.s32.totalorder %s181, %s183
      %p187 = scmp.eq.s32.totalorder %s21, 0
      %p188 = por %p186, %p187
      %p189 = scmp.ne.s32.totalorder %s181, %s183
      %p190 = scmp.eq.s32.totalorder %s26, 1
      %p191 = por %p189, %p190
      %p192 = scmp.ne.s32.totalorder %s183, %s184
      %p193 = scmp.eq.s32.totalorder %s26, 0
      %p194 = por %p192, %p193
      %p195 = scmp.ne.s32.totalorder %s183, %s184
      %p196 = scmp.eq.s32.totalorder %s27, 1
      %p197 = por %p195, %p196
      %p199 = scmp.ne.s32.totalorder %s184, %s198
      %p200 = scmp.eq.s32.totalorder %s27, 0
      %p201 = por %p199, %p200
      %s203 = sadd.s32 %s202, 1
      %p206 = scmp.eq.s32.totalorder %s21, 1
      %p207 = scmp.ne.s32.totalorder %s202, %s204
      %p208 = scmp.eq.s32.totalorder %s21, 0
      %p209 = por %p207, %p208
      %p210 = scmp.ne.s32.totalorder %s202, %s204
      %p211 = scmp.eq.s32.totalorder %s26, 1
      %p212 = por %p210, %p211
      %p213 = scmp.ne.s32.totalorder %s204, %s205
      %p214 = scmp.eq.s32.totalorder %s26, 0
      %p215 = por %p213, %p214
      %p216 = scmp.ne.s32.totalorder %s204, %s205
      %p217 = scmp.eq.s32.totalorder %s27, 1
      %p218 = por %p216, %p217
      %p220 = scmp.ne.s32.totalorder %s205, %s219
      %p221 = scmp.eq.s32.totalorder %s27, 0
      %p222 = por %p220, %p221
      %s224 = sadd.s32 %s223, 1
      %p227 = scmp.eq.s32.totalorder %s21, 1
      %p228 = scmp.ne.s32.totalorder %s223, %s225
      %p229 = scmp.eq.s32.totalorder %s21, 0
      %p230 = por %p228, %p229
      %p231 = scmp.ne.s32.totalorder %s223, %s225
      %p232 = scmp.eq.s32.totalorder %s26, 1
      %p233 = por %p231, %p232
      %p234 = scmp.ne.s32.totalorder %s225, %s226
      %p235 = scmp.eq.s32.totalorder %s26, 0
      %p236 = por %p234, %p235
      %p237 = scmp.ne.s32.totalorder %s225, %s226
      %p238 = scmp.eq.s32.totalorder %s27, 1
      %p239 = por %p237, %p238
      %p241 = scmp.ne.s32.totalorder %s226, %s240
      %p242 = scmp.eq.s32.totalorder %s27, 0
      %p243 = por %p241, %p242
      %s245 = sadd.s32 %s244, 1
      %p248 = scmp.eq.s32.totalorder %s21, 1
      %p249 = scmp.ne.s32.totalorder %s244, %s246
      %p250 = scmp.eq.s32.totalorder %s21, 0
      %p251 = por %p249, %p250
      %p252 = scmp.ne.s32.totalorder %s244, %s246
      %p253 = scmp.eq.s32.totalorder %s26, 1
      %p254 = por %p252, %p253
      %p255 = scmp.ne.s32.totalorder %s246, %s247
      %p256 = scmp.eq.s32.totalorder %s26, 0
      %p257 = por %p255, %p256
      %p258 = scmp.ne.s32.totalorder %s246, %s247
      %p259 = scmp.eq.s32.totalorder %s27, 1
      %p260 = por %p258, %p259
      %p262 = scmp.ne.s32.totalorder %s247, %s261
      %p263 = scmp.eq.s32.totalorder %s27, 0
      %p264 = por %p262, %p263
      %s266 = sadd.s32 %s265, 1
      %p269 = scmp.eq.s32.totalorder %s21, 1
      %p270 = scmp.ne.s32.totalorder %s265, %s267
      %p271 = scmp.eq.s32.totalorder %s21, 0
      %p272 = por %p270, %p271
      %p273 = scmp.ne.s32.totalorder %s265, %s267
      %p274 = scmp.eq.s32.totalorder %s26, 1
      %p275 = por %p273, %p274
      %p276 = scmp.ne.s32.totalorder %s267, %s268
      %p277 = scmp.eq.s32.totalorder %s26, 0
      %p278 = por %p276, %p277
      %p279 = scmp.ne.s32.totalorder %s267, %s268
      %p280 = scmp.eq.s32.totalorder %s27, 1
      %p281 = por %p279, %p280
      %p283 = scmp.ne.s32.totalorder %s268, %s282
      %p284 = scmp.eq.s32.totalorder %s27, 0
      %p285 = por %p283, %p284
      %s286 = ssub.s32 %s21, %s28
      %p287 = scmp.eq.s32.totalorder %s286, 0
      %s289 = sadd.s32 %s288, 1
      %s290 = scalar_select %p287, %s288, %s289
      %p293 = pneg %p287
      %p294 = scmp.eq.s32.totalorder %s21, 1
      %p295 = por %p293, %p294
      %p296 = scmp.ne.s32.totalorder %s288, %s291
      %p297 = scmp.eq.s32.totalorder %s21, 0
      %p298 = por %p296, %p297
      %p299 = scmp.ne.s32.totalorder %s288, %s291
      %p300 = scmp.eq.s32.totalorder %s26, 1
      %p301 = por %p299, %p300
      %p302 = scmp.ne.s32.totalorder %s291, %s292
      %p303 = scmp.eq.s32.totalorder %s26, 0
      %p304 = por %p302, %p303
      %p305 = scmp.ne.s32.totalorder %s291, %s292
      %p306 = scmp.eq.s32.totalorder %s27, 1
      %p307 = por %p305, %p306
      %p309 = scmp.ne.s32.totalorder %s292, %s308
      %p310 = scmp.eq.s32.totalorder %s27, 0
      %p311 = por %p309, %p310
      %p312 = scmp.le.s32.totalorder 1, %s21
      %p313 = scmp.lt.s32.totalorder %s21, 3
      %p314 = pnand %p312, %p313
      %p315 = pneg %p314
      // Predicated region
      $region9: #{vit_forward.1} parent=5 // pred_check
        _
      $region10: #{vit_forward.1} parent=5 // pred_check_branch
        %317 = sbr.rel (%p314) target = $region12
      $region11: #{vit_forward.1} parent=5 // pred_region
        %s318 = ssub.s32 %s21, 1
        // Predicated region
        $region13: #{vit_forward.1} parent=11 // pred_check
          %p319 = pneg %p68
        $region14: #{vit_forward.1} parent=11 // pred_check_branch
          %321 = sbr.rel (%p319) target = $region16
        $region15: #{vit_forward.1} parent=11 // pred_region
          _
        $region16: #{vit_forward.1} parent=11 // pred_fallthru
          _
        // Predicated region
        $region17: #{vit_forward.1} parent=11 // pred_check
          %p322 = pneg %p89
        $region18: #{vit_forward.1} parent=11 // pred_check_branch
          %324 = sbr.rel (%p322) target = $region20
        $region19: #{vit_forward.1} parent=11 // pred_region
          _
        $region20: #{vit_forward.1} parent=11 // pred_fallthru
          _
        // Predicated region
        $region21: #{vit_forward.1} parent=11 // pred_check
          %p325 = pneg %p110
        $region22: #{vit_forward.1} parent=11 // pred_check_branch
          %327 = sbr.rel (%p325) target = $region24
        $region23: #{vit_forward.1} parent=11 // pred_region
          _
        $region24: #{vit_forward.1} parent=11 // pred_fallthru
          _
        // Predicated region
        $region25: #{vit_forward.1} parent=11 // pred_check
          %p328 = pneg %p131
        $region26: #{vit_forward.1} parent=11 // pred_check_branch
          %330 = sbr.rel (%p328) target = $region28
        $region27: #{vit_forward.1} parent=11 // pred_region
          _
        $region28: #{vit_forward.1} parent=11 // pred_fallthru
          _
        // Predicated region
        $region29: #{vit_forward.1} parent=11 // pred_check
          %p331 = pneg %p152
        $region30: #{vit_forward.1} parent=11 // pred_check_branch
          %333 = sbr.rel (%p331) target = $region32
        $region31: #{vit_forward.1} parent=11 // pred_region
          _
        $region32: #{vit_forward.1} parent=11 // pred_fallthru
          _
        // Predicated region
        $region33: #{vit_forward.1} parent=11 // pred_check
          %p334 = pneg %p173
        $region34: #{vit_forward.1} parent=11 // pred_check_branch
          %336 = sbr.rel (%p334) target = $region36
        $region35: #{vit_forward.1} parent=11 // pred_region
          _
        $region36: #{vit_forward.1} parent=11 // pred_fallthru
          _
        // Predicated region
        $region37: #{vit_forward.1} parent=11 // pred_check
          %p337 = pneg %p194
        $region38: #{vit_forward.1} parent=11 // pred_check_branch
          %339 = sbr.rel (%p337) target = $region40
        $region39: #{vit_forward.1} parent=11 // pred_region
          _
        $region40: #{vit_forward.1} parent=11 // pred_fallthru
          _
        // Predicated region
        $region41: #{vit_forward.1} parent=11 // pred_check
          %p340 = pneg %p215
        $region42: #{vit_forward.1} parent=11 // pred_check_branch
          %342 = sbr.rel (%p340) target = $region44
        $region43: #{vit_forward.1} parent=11 // pred_region
          _
        $region44: #{vit_forward.1} parent=11 // pred_fallthru
          _
        // Predicated region
        $region45: #{vit_forward.1} parent=11 // pred_check
          %p343 = pneg %p236
        $region46: #{vit_forward.1} parent=11 // pred_check_branch
          %345 = sbr.rel (%p343) target = $region48
        $region47: #{vit_forward.1} parent=11 // pred_region
          _
        $region48: #{vit_forward.1} parent=11 // pred_fallthru
          _
        // Predicated region
        $region49: #{vit_forward.1} parent=11 // pred_check
          %p346 = pneg %p257
        $region50: #{vit_forward.1} parent=11 // pred_check_branch
          %348 = sbr.rel (%p346) target = $region52
        $region51: #{vit_forward.1} parent=11 // pred_region
          _
        $region52: #{vit_forward.1} parent=11 // pred_fallthru
          _
        // Predicated region
        $region53: #{vit_forward.1} parent=11 // pred_check
          %p349 = pneg %p278
        $region54: #{vit_forward.1} parent=11 // pred_check_branch
          %351 = sbr.rel (%p349) target = $region56
        $region55: #{vit_forward.1} parent=11 // pred_region
          _
        $region56: #{vit_forward.1} parent=11 // pred_fallthru
          _
      $region12: #{vit_forward.1} parent=5 // pred_fallthru
        _
      %p352 = scmp.lt.s32.totalorder %s21, 2
      // Predicated region
      $region57: #{vit_forward.1} parent=5 // pred_check
        %p353 = pneg %p352
      $region58: #{vit_forward.1} parent=5 // pred_check_branch
        %355 = sbr.rel (%p353) target = $region60
      $region59: #{vit_forward.1} parent=5 // pred_region
        // Predicated region
        $region61: #{vit_forward.1} parent=59 // pred_check
          %p356 = pneg %p41
        $region62: #{vit_forward.1} parent=59 // pred_check_branch
          %358 = sbr.rel (%p356) target = $region64
        $region63: #{vit_forward.1} parent=59 // pred_region
          %p359 = scmp.lt.s32.totalorder %s21, 1
          %s360 = scalar_select %p359, %s21, 1
          %s361 = smul.addr %s360, 3
          %s362 = smul.addr %s361, 8
          %s363 = scalar_lea.vmem %s0, %s362
        $region64: #{vit_forward.1} parent=59 // pred_fallthru
          _
      $region60: #{vit_forward.1} parent=5 // pred_fallthru
        _
      %p364 = scmp.le.s32.totalorder 1, %s21
      %p365 = scmp.lt.s32.totalorder %s21, 3
      %p366 = pnand %p364, %p365
      %p367 = pneg %p366
      // Predicated region
      $region65: #{vit_forward.1} parent=5 // pred_check
        _
      $region66: #{vit_forward.1} parent=5 // pred_check_branch
        %369 = sbr.rel (%p366) target = $region68
      $region67: #{vit_forward.1} parent=5 // pred_region
        %s370 = ssub.s32 %s21, 1
        %p371 = scmp.lt.s32.totalorder %s26, 1
        %s372 = scalar_select %p371, %s26, 1
        %s373 = smul.addr %s372, 3
        %s374 = smul.addr %s373, 8
        %s375 = scalar_lea.vmem %s0, %s374
        %p376 = pneg %p47
        %p377 = pneg %p44
        %p378 = pneg %p68
        %p379 = pneg %p65
        %p380 = pneg %p89
        %p381 = pneg %p86
        %p382 = pneg %p110
        %p383 = pneg %p107
        %p384 = pneg %p131
        %p385 = pneg %p128
        %p386 = pneg %p152
        %p387 = pneg %p149
        %p388 = pneg %p173
        %p389 = pneg %p170
        %p390 = pneg %p194
        %p391 = pneg %p191
        %p392 = pneg %p215
        %p393 = pneg %p212
        %p394 = pneg %p236
        %p395 = pneg %p233
        %p396 = pneg %p257
        %p397 = pneg %p254
        %p398 = pneg %p278
        %p399 = pneg %p275
        %p400 = pneg %p304
        %p401 = pneg %p301
        %s402 = sand.u32 %s291, 1
        %s403 = scalar_lea.sflag [#allocation3], %s402
        %s404 = sand.u32 %s291, 1
        %s405 = scalar_lea.vmem [#allocation2], %s404
        %p406 = scmp.lt.s32.totalorder %s26, 1
        %s407 = scalar_select %p406, %s26, 1
        %s408 = smul.addr %s407, 3
        %s409 = smul.addr %s408, 8
        %s410 = scalar_lea.vmem %s0, %s409
        %v411 = vld [vmem:[%s410] sm:$0xff]
        %v412 = vld [vmem:[%s410 + $0x8] sm:$0xff]
        %v413 = vld [vmem:[%s410 + $0x10] sm:$0xff]
        %v414 = vld [vmem:[%s1] sm:$0xff]
        %v415 = vld [vmem:[%s1 + $0x8] sm:$0xff]
        %v416 = vld [vmem:[%s1 + $0x10] sm:$0xff]
        %v417 = vld [vmem:[%s1 + $0x18] sm:$0xff]
        %v418 = vld [vmem:[%s1 + $0x20] sm:$0xff]
        %v419 = vld [vmem:[%s1 + $0x28] sm:$0xff]
        %v420 = vld [vmem:[%s1 + $0x30] sm:$0xff]
        %v421 = vld [vmem:[%s1 + $0x38] sm:$0xff]
        %v422 = vld [vmem:[%s2] sm:$0xff]
        %v423 = vld [vmem:[%s2 + $0x8] sm:$0xff]
        %v424 = vld [vmem:[%s2 + $0x10] sm:$0xff]
        %vm425 = vcmask 523264
        %v427 = vsel %vm425, %v411, 0
        %v430 = vsel %vm425, %v412, 0
        %v433 = vsel %vm425, %v413, 0
        %435 = vmatprep.subr.mxu0 0.0
        %436 = vmatpush1.msra.mxu0 %v414
        %437 = vmatprep.subr.mxu0 0.0
        %438 = vmatpush1.msra.mxu0 %v415
        %439 = vmatprep.subr.mxu0 0.0
        %440 = vmatpush1.msra.mxu0 %v416
        %441 = vmatprep.subr.mxu0 0.0
        %442 = vmatpush1.msra.mxu0 %v417
        %443 = vmatprep.subr.mxu0 0.0
        %444 = vmatpush1.msra.mxu0 %v418
        %445 = vmatprep.subr.mxu0 0.0
        %446 = vmatpush1.msra.mxu0 %v419
        %447 = vmatprep.subr.mxu0 0.0
        %448 = vmatpush1.msra.mxu0 %v420
        %449 = vmatprep.subr.mxu0 0.0
        %450 = vmatpush1.msra.mxu0 %v421
        %451 = vmatprep.subr.mxu0 0.0
        %452 = vmatpush1.msra.mxu0 0.0
        %453 = vmatprep.subr.mxu0 0.0
        %454 = vmatpush1.msra.mxu0 0.0
        %455 = vmatprep.subr.mxu0 0.0
        %456 = vmatpush1.msra.mxu0 0.0
        %457 = vmatprep.subr.mxu0 0.0
        %458 = vmatpush1.msra.mxu0 0.0
        %459 = vmatprep.subr.mxu0 0.0
        %460 = vmatpush1.msra.mxu0 0.0
        %461 = vmatprep.subr.mxu0 0.0
        %462 = vmatpush1.msra.mxu0 0.0
        %463 = vmatprep.subr.mxu0 0.0
        %464 = vmatpush1.msra.mxu0 0.0
        %465 = vmatprep.subr.mxu0 0.0
        %466 = vmatpush1.msra.mxu0 0.0
        %467 = vmatprep.subr.mxu0 0.0
        %468 = vmatpush1.msra.mxu0 0.0
        %469 = vmatprep.subr.mxu0 0.0
        %470 = vmatpush1.msra.mxu0 0.0
        %471 = vmatprep.subr.mxu0 0.0
        %472 = vmatpush1.msra.mxu0 0.0
        %473 = vmatprep.subr.mxu0 0.0
        %474 = vmatpush1.msra.mxu0 0.0
        %475 = vmatprep.subr.mxu0 0.0
        %476 = vmatpush1.msra.mxu0 0.0
        %477 = vmatprep.subr.mxu0 0.0
        %478 = vmatpush1.msra.mxu0 0.0
        %479 = vmatprep.subr.mxu0 0.0
        %480 = vmatpush1.msra.mxu0 0.0
        %481 = vmatprep.subr.mxu0 0.0
        %482 = vmatpush1.msra.mxu0 0.0
        %483 = vmatprep.subr.mxu0 0.0
        %484 = vmatpush1.msra.mxu0 0.0
        %485 = vmatprep.subr.mxu0 0.0
        %486 = vmatpush1.msra.mxu0 0.0
        %487 = vmatprep.subr.mxu0 0.0
        %488 = vmatpush1.msra.mxu0 0.0
        %489 = vmatprep.subr.mxu0 0.0
        %490 = vmatpush1.msra.mxu0 0.0
        %491 = vmatprep.subr.mxu0 0.0
        %492 = vmatpush1.msra.mxu0 0.0
        %493 = vmatprep.subr.mxu0 0.0
        %494 = vmatpush1.msra.mxu0 0.0
        %495 = vmatprep.subr.mxu0 0.0
        %496 = vmatpush1.msra.mxu0 0.0
        %497 = vmatprep.subr.mxu0 0.0
        %498 = vmatpush1.msra.mxu0 0.0
        %499 = vmatprep.mubr.f32.mxu0 0.0
        %500 = vmatmul.mubr.f32.gmra.mrb[0].mxu0 %v427
        %v501 = vpop.f32.mrb[0].mxu0
        %v502 = vadd.f32 %v422, %v501
        %v503 = vpop.f32.mrb[0].mxu0
        %504 = vmatprep.mubr.f32.mxu0 0.0
        %505 = vmatmul.mubr.f32.gmra.mrb[0].mxu0 %v430
        %v506 = vpop.f32.mrb[0].mxu0
        %v507 = vadd.f32 %v423, %v506
        %v508 = vpop.f32.mrb[0].mxu0
        %509 = vmatprep.mubr.f32.mxu0 0.0
        %510 = vmatmul.mubr.f32.gmra.mrb[0].mxu0 %v433
        %v511 = vpop.f32.mrb[0].mxu0
        %v512 = vadd.f32 %v424, %v511
        %v513 = vpop.f32.mrb[0].mxu0
        %514 = vdwg.mxu0
        %v515 = vlaneseq
        %v516 = vand.u32 %v515, 127
        %vm517 = vcmp.lt.s32.totalorder %v516, 17
        %v518 = vsel %vm517, 0.0, -1e+30
        %v519 = vld [vmem:[%s8] sm:$0x1]
        %v520 = vld [vmem:[%s8 + $0x1] sm:$0x1]
        %v521 = vld [vmem:[%s8 + $0x2] sm:$0x1]
        %v522 = vld [vmem:[%s8 + $0x3] sm:$0x1]
        %v523 = vld [vmem:[%s8 + $0x4] sm:$0x1]
        %v524 = vld [vmem:[%s8 + $0x5] sm:$0x1]
        %vm525 = vcmask 261120
        %v526 = vsel %vm525, %v502, 0.0
        %527 = vadd.xlane.f32.xlu0 %v526
        %v528 = vpop.xlane.xlu0 %527
        %v529 = vsel %vm525, %v507, 0.0
        %530 = vadd.xlane.f32.xlu0 %v529
        %v531 = vpop.xlane.xlu0 %530
        %v532 = vsel %vm525, %v512, 0.0
        %533 = vadd.xlane.f32.xlu0 %v532
        %v534 = vpop.xlane.xlu0 %533
        %v535 = vrcp.pop 32.0
        %v536 = vmul.f32 %v528, %v535
        %v537 = vmul.f32 %v531, %v535
        %v538 = vmul.f32 %v534, %v535
        %v539 = vsub.f32 %v502, %v536
        %v540 = vsub.f32 %v507, %v537
        %v541 = vsub.f32 %v512, %v538
        %v542 = vmul.f32 %v539, %v539
        %v543 = vmul.f32 %v540, %v540
        %v544 = vmul.f32 %v541, %v541
        %v545 = vsel %vm525, %v542, 0.0
        %546 = vadd.xlane.f32.xlu0 %v545
        %v547 = vpop.xlane.xlu0 %546
        %v548 = vsel %vm525, %v543, 0.0
        %549 = vadd.xlane.f32.xlu0 %v548
        %v550 = vpop.xlane.xlu0 %549
        %v551 = vsel %vm525, %v544, 0.0
        %552 = vadd.xlane.f32.xlu0 %v551
        %v553 = vpop.xlane.xlu0 %552
        %v554 = vmul.f32 %v547, %v535
        %v555 = vmul.f32 %v550, %v535
        %v556 = vmul.f32 %v553, %v535
        %v557 = vadd.f32 %v554, 1e-05
        %v558 = vadd.f32 %v555, 1e-05
        %v559 = vadd.f32 %v556, 1e-05
        %v560 = vrsqrt.pop %v557
        %v561 = vrsqrt.pop %v558
        %v562 = vrsqrt.pop %v559
        %v563 = vmul.f32 %v539, %v560
        %v564 = vmul.f32 %v540, %v561
        %v565 = vmul.f32 %v541, %v562
        %v566 = vlaneseq
        %v567 = vshrl.u32 %v566, 7
        %v568 = vsub.s32 0, %v567
        %v569 = vrot.slane %v519, %v568
        %v570 = vmul.f32 %v563, %v569
        %v571 = vmul.f32 %v564, %v569
        %v572 = vmul.f32 %v565, %v569
        %v573 = vlaneseq
        %v574 = vshrl.u32 %v573, 7
        %v575 = vsub.s32 0, %v574
        %v576 = vrot.slane %v520, %v575
        %v577 = vadd.f32 %v570, %v576
        %v578 = vadd.f32 %v571, %v576
        %v579 = vadd.f32 %v572, %v576
        %v580 = vld [vmem:[%s3] sm:$0xff]
        %v581 = vld [vmem:[%s3 + $0x8] sm:$0xff]
        %v582 = vld [vmem:[%s3 + $0x10] sm:$0xff]
        %v583 = vld [vmem:[%s3 + $0x18] sm:$0xff]
        %v585 = vsel %vm525, %v577, 0
        %v588 = vsel %vm525, %v578, 0
        %v591 = vsel %vm525, %v579, 0
        %593 = vmatprep.subr.mxu0 0.0
        %594 = vmatpush1.msra.mxu0 %v580
        %595 = vmatprep.subr.mxu0 0.0
        %596 = vmatpush1.msra.mxu0 %v581
        %597 = vmatprep.subr.mxu0 0.0
        %598 = vmatpush1.msra.mxu0 %v582
        %599 = vmatprep.subr.mxu0 0.0
        %600 = vmatpush1.msra.mxu0 %v583
        %601 = vmatprep.subr.mxu0 0.0
        %602 = vmatpush1.msra.mxu0 0.0
        %603 = vmatprep.subr.mxu0 0.0
        %604 = vmatpush1.msra.mxu0 0.0
        %605 = vmatprep.subr.mxu0 0.0
        %606 = vmatpush1.msra.mxu0 0.0
        %607 = vmatprep.subr.mxu0 0.0
        %608 = vmatpush1.msra.mxu0 0.0
        %609 = vmatprep.subr.mxu0 0.0
        %610 = vmatpush1.msra.mxu0 0.0
        %611 = vmatprep.subr.mxu0 0.0
        %612 = vmatpush1.msra.mxu0 0.0
        %613 = vmatprep.subr.mxu0 0.0
        %614 = vmatpush1.msra.mxu0 0.0
        %615 = vmatprep.subr.mxu0 0.0
        %616 = vmatpush1.msra.mxu0 0.0
        %617 = vmatprep.subr.mxu0 0.0
        %618 = vmatpush1.msra.mxu0 0.0
        %619 = vmatprep.subr.mxu0 0.0
        %620 = vmatpush1.msra.mxu0 0.0
        %621 = vmatprep.subr.mxu0 0.0
        %622 = vmatpush1.msra.mxu0 0.0
        %623 = vmatprep.subr.mxu0 0.0
        %624 = vmatpush1.msra.mxu0 0.0
        %625 = vmatprep.subr.mxu0 0.0
        %626 = vmatpush1.msra.mxu0 0.0
        %627 = vmatprep.subr.mxu0 0.0
        %628 = vmatpush1.msra.mxu0 0.0
        %629 = vmatprep.subr.mxu0 0.0
        %630 = vmatpush1.msra.mxu0 0.0
        %631 = vmatprep.subr.mxu0 0.0
        %632 = vmatpush1.msra.mxu0 0.0
        %633 = vmatprep.subr.mxu0 0.0
        %634 = vmatpush1.msra.mxu0 0.0
        %635 = vmatprep.subr.mxu0 0.0
        %636 = vmatpush1.msra.mxu0 0.0
        %637 = vmatprep.subr.mxu0 0.0
        %638 = vmatpush1.msra.mxu0 0.0
        %639 = vmatprep.subr.mxu0 0.0
        %640 = vmatpush1.msra.mxu0 0.0
        %641 = vmatprep.subr.mxu0 0.0
        %642 = vmatpush1.msra.mxu0 0.0
        %643 = vmatprep.subr.mxu0 0.0
        %644 = vmatpush1.msra.mxu0 0.0
        %645 = vmatprep.subr.mxu0 0.0
        %646 = vmatpush1.msra.mxu0 0.0
        %647 = vmatprep.subr.mxu0 0.0
        %648 = vmatpush1.msra.mxu0 0.0
        %649 = vmatprep.subr.mxu0 0.0
        %650 = vmatpush1.msra.mxu0 0.0
        %651 = vmatprep.subr.mxu0 0.0
        %652 = vmatpush1.msra.mxu0 0.0
        %653 = vmatprep.subr.mxu0 0.0
        %654 = vmatpush1.msra.mxu0 0.0
        %655 = vmatprep.subr.mxu0 0.0
        %656 = vmatpush1.msra.mxu0 0.0
        %657 = vmatprep.mubr.f32.mxu0 0.0
        %658 = vmatmul.mubr.f32.gmra.mrb[0].mxu0 %v585
        %v659 = vpop.f32.mrb[0].mxu0
        %v660 = vadd.f32 0.0, %v659
        %v661 = vpop.f32.mrb[0].mxu0
        %662 = vmatprep.mubr.f32.mxu0 0.0
        %663 = vmatmul.mubr.f32.gmra.mrb[0].mxu0 %v588
        %v664 = vpop.f32.mrb[0].mxu0
        %v665 = vadd.f32 0.0, %v664
        %v666 = vpop.f32.mrb[0].mxu0
        %667 = vmatprep.mubr.f32.mxu0 0.0
        %668 = vmatmul.mubr.f32.gmra.mrb[0].mxu0 %v591
        %v669 = vpop.f32.mrb[0].mxu0
        %v670 = vadd.f32 0.0, %v669
        %v671 = vpop.f32.mrb[0].mxu0
        %672 = vdwg.mxu0
        %s673 = scalar_lea.vmem %s3, 32
        %v674 = vld [vmem:[%s673] sm:$0xff]
        %v675 = vld [vmem:[%s673 + $0x8] sm:$0xff]
        %v676 = vld [vmem:[%s673 + $0x10] sm:$0xff]
        %v677 = vld [vmem:[%s673 + $0x18] sm:$0xff]
        %678 = vmatprep.subr.mxu0 0.0
        %679 = vmatpush1.msra.mxu0 %v674
        %680 = vmatprep.subr.mxu0 0.0
        %681 = vmatpush1.msra.mxu0 %v675
        %682 = vmatprep.subr.mxu0 0.0
        %683 = vmatpush1.msra.mxu0 %v676
        %684 = vmatprep.subr.mxu0 0.0
        %685 = vmatpush1.msra.mxu0 %v677
        %686 = vmatprep.subr.mxu0 0.0
        %687 = vmatpush1.msra.mxu0 0.0
        %688 = vmatprep.subr.mxu0 0.0
        %689 = vmatpush1.msra.mxu0 0.0
        %690 = vmatprep.subr.mxu0 0.0
        %691 = vmatpush1.msra.mxu0 0.0
        %692 = vmatprep.subr.mxu0 0.0
        %693 = vmatpush1.msra.mxu0 0.0
        %694 = vmatprep.subr.mxu0 0.0
        %695 = vmatpush1.msra.mxu0 0.0
        %696 = vmatprep.subr.mxu0 0.0
        %697 = vmatpush1.msra.mxu0 0.0
        %698 = vmatprep.subr.mxu0 0.0
        %699 = vmatpush1.msra.mxu0 0.0
        %700 = vmatprep.subr.mxu0 0.0
        %701 = vmatpush1.msra.mxu0 0.0
        %702 = vmatprep.subr.mxu0 0.0
        %703 = vmatpush1.msra.mxu0 0.0
        %704 = vmatprep.subr.mxu0 0.0
        %705 = vmatpush1.msra.mxu0 0.0
        %706 = vmatprep.subr.mxu0 0.0
        %707 = vmatpush1.msra.mxu0 0.0
        %708 = vmatprep.subr.mxu0 0.0
        %709 = vmatpush1.msra.mxu0 0.0
        %710 = vmatprep.subr.mxu0 0.0
        %711 = vmatpush1.msra.mxu0 0.0
        %712 = vmatprep.subr.mxu0 0.0
        %713 = vmatpush1.msra.mxu0 0.0
        %714 = vmatprep.subr.mxu0 0.0
        %715 = vmatpush1.msra.mxu0 0.0
        %716 = vmatprep.subr.mxu0 0.0
        %717 = vmatpush1.msra.mxu0 0.0
        %718 = vmatprep.subr.mxu0 0.0
        %719 = vmatpush1.msra.mxu0 0.0
        %720 = vmatprep.subr.mxu0 0.0
        %721 = vmatpush1.msra.mxu0 0.0
        %722 = vmatprep.subr.mxu0 0.0
        %723 = vmatpush1.msra.mxu0 0.0
        %724 = vmatprep.subr.mxu0 0.0
        %725 = vmatpush1.msra.mxu0 0.0
        %726 = vmatprep.subr.mxu0 0.0
        %727 = vmatpush1.msra.mxu0 0.0
        %728 = vmatprep.subr.mxu0 0.0
        %729 = vmatpush1.msra.mxu0 0.0
        %730 = vmatprep.subr.mxu0 0.0
        %731 = vmatpush1.msra.mxu0 0.0
        %732 = vmatprep.subr.mxu0 0.0
        %733 = vmatpush1.msra.mxu0 0.0
        %734 = vmatprep.subr.mxu0 0.0
        %735 = vmatpush1.msra.mxu0 0.0
        %736 = vmatprep.subr.mxu0 0.0
        %737 = vmatpush1.msra.mxu0 0.0
        %738 = vmatprep.subr.mxu0 0.0
        %739 = vmatpush1.msra.mxu0 0.0
        %740 = vmatprep.subr.mxu0 0.0
        %741 = vmatpush1.msra.mxu0 0.0
        %742 = vmatprep.mubr.f32.mxu0 0.0
        %743 = vmatmul.mubr.f32.gmra.mrb[0].mxu0 %v585
        %v744 = vpop.f32.mrb[0].mxu0
        %v745 = vadd.f32 0.0, %v744
        %v746 = vpop.f32.mrb[0].mxu0
        %747 = vmatprep.mubr.f32.mxu0 0.0
        %748 = vmatmul.mubr.f32.gmra.mrb[0].mxu0 %v588
        %v749 = vpop.f32.mrb[0].mxu0
        %v750 = vadd.f32 0.0, %v749
        %v751 = vpop.f32.mrb[0].mxu0
        %752 = vmatprep.mubr.f32.mxu0 0.0
        %753 = vmatmul.mubr.f32.gmra.mrb[0].mxu0 %v591
        %v754 = vpop.f32.mrb[0].mxu0
        %v755 = vadd.f32 0.0, %v754
        %v756 = vpop.f32.mrb[0].mxu0
        %757 = vdwg.mxu0
        %s758 = scalar_lea.vmem %s3, 64
        %v759 = vld [vmem:[%s758] sm:$0xff]
        %v760 = vld [vmem:[%s758 + $0x8] sm:$0xff]
        %v761 = vld [vmem:[%s758 + $0x10] sm:$0xff]
        %v762 = vld [vmem:[%s758 + $0x18] sm:$0xff]
        %763 = vmatprep.subr.mxu0 0.0
        %764 = vmatpush1.msra.mxu0 %v759
        %765 = vmatprep.subr.mxu0 0.0
        %766 = vmatpush1.msra.mxu0 %v760
        %767 = vmatprep.subr.mxu0 0.0
        %768 = vmatpush1.msra.mxu0 %v761
        %769 = vmatprep.subr.mxu0 0.0
        %770 = vmatpush1.msra.mxu0 %v762
        %771 = vmatprep.subr.mxu0 0.0
        %772 = vmatpush1.msra.mxu0 0.0
        %773 = vmatprep.subr.mxu0 0.0
        %774 = vmatpush1.msra.mxu0 0.0
        %775 = vmatprep.subr.mxu0 0.0
        %776 = vmatpush1.msra.mxu0 0.0
        %777 = vmatprep.subr.mxu0 0.0
        %778 = vmatpush1.msra.mxu0 0.0
        %779 = vmatprep.subr.mxu0 0.0
        %780 = vmatpush1.msra.mxu0 0.0
        %781 = vmatprep.subr.mxu0 0.0
        %782 = vmatpush1.msra.mxu0 0.0
        %783 = vmatprep.subr.mxu0 0.0
        %784 = vmatpush1.msra.mxu0 0.0
        %785 = vmatprep.subr.mxu0 0.0
        %786 = vmatpush1.msra.mxu0 0.0
        %787 = vmatprep.subr.mxu0 0.0
        %788 = vmatpush1.msra.mxu0 0.0
        %789 = vmatprep.subr.mxu0 0.0
        %790 = vmatpush1.msra.mxu0 0.0
        %791 = vmatprep.subr.mxu0 0.0
        %792 = vmatpush1.msra.mxu0 0.0
        %793 = vmatprep.subr.mxu0 0.0
        %794 = vmatpush1.msra.mxu0 0.0
        %795 = vmatprep.subr.mxu0 0.0
        %796 = vmatpush1.msra.mxu0 0.0
        %797 = vmatprep.subr.mxu0 0.0
        %798 = vmatpush1.msra.mxu0 0.0
        %799 = vmatprep.subr.mxu0 0.0
        %800 = vmatpush1.msra.mxu0 0.0
        %801 = vmatprep.subr.mxu0 0.0
        %802 = vmatpush1.msra.mxu0 0.0
        %803 = vmatprep.subr.mxu0 0.0
        %804 = vmatpush1.msra.mxu0 0.0
        %805 = vmatprep.subr.mxu0 0.0
        %806 = vmatpush1.msra.mxu0 0.0
        %807 = vmatprep.subr.mxu0 0.0
        %808 = vmatpush1.msra.mxu0 0.0
        %809 = vmatprep.subr.mxu0 0.0
        %810 = vmatpush1.msra.mxu0 0.0
        %811 = vmatprep.subr.mxu0 0.0
        %812 = vmatpush1.msra.mxu0 0.0
        %813 = vmatprep.subr.mxu0 0.0
        %814 = vmatpush1.msra.mxu0 0.0
        %815 = vmatprep.subr.mxu0 0.0
        %816 = vmatpush1.msra.mxu0 0.0
        %817 = vmatprep.subr.mxu0 0.0
        %818 = vmatpush1.msra.mxu0 0.0
        %819 = vmatprep.subr.mxu0 0.0
        %820 = vmatpush1.msra.mxu0 0.0
        %821 = vmatprep.subr.mxu0 0.0
        %822 = vmatpush1.msra.mxu0 0.0
        %823 = vmatprep.subr.mxu0 0.0
        %824 = vmatpush1.msra.mxu0 0.0
        %825 = vmatprep.subr.mxu0 0.0
        %826 = vmatpush1.msra.mxu0 0.0
        %827 = vmatprep.mubr.f32.mxu0 0.0
        %828 = vmatmul.mubr.f32.gmra.mrb[0].mxu0 %v585
        %v829 = vpop.f32.mrb[0].mxu0
        %v830 = vadd.f32 0.0, %v829
        %v831 = vpop.f32.mrb[0].mxu0
        %832 = vmatprep.mubr.f32.mxu0 0.0
        %833 = vmatmul.mubr.f32.gmra.mrb[0].mxu0 %v588
        %v834 = vpop.f32.mrb[0].mxu0
        %v835 = vadd.f32 0.0, %v834
        %v836 = vpop.f32.mrb[0].mxu0
        %837 = vmatprep.mubr.f32.mxu0 0.0
        %838 = vmatmul.mubr.f32.gmra.mrb[0].mxu0 %v591
        %v839 = vpop.f32.mrb[0].mxu0
        %v840 = vadd.f32 0.0, %v839
        %v841 = vpop.f32.mrb[0].mxu0
        %842 = vdwg.mxu0
        %vm843 = vcmask 64512
        %v845 = vsel %vm843, %v660, 0
        %v848 = vsel %vm843, %v665, 0
        %v851 = vsel %vm843, %v670, 0
        %v854 = vsel %vm843, %v745, 0
        %v857 = vsel %vm843, %v750, 0
        %v860 = vsel %vm843, %v755, 0
        %862 = vmatprep.subr.mxu0 0.0
        %863 = vmatpush1.xpose.msra.mxu0 %v854
        %864 = vmatprep.subr.mxu0 0.0
        %865 = vmatpush1.xpose.msra.mxu0 %v857
        %866 = vmatprep.subr.mxu0 0.0
        %867 = vmatpush1.xpose.msra.mxu0 %v860
        %868 = vmatprep.subr.mxu0 0.0
        %869 = vmatpush1.xpose.msra.mxu0 0.0
        %870 = vmatprep.subr.mxu0 0.0
        %871 = vmatpush1.xpose.msra.mxu0 0.0
        %872 = vmatprep.subr.mxu0 0.0
        %873 = vmatpush1.xpose.msra.mxu0 0.0
        %874 = vmatprep.subr.mxu0 0.0
        %875 = vmatpush1.xpose.msra.mxu0 0.0
        %876 = vmatprep.subr.mxu0 0.0
        %877 = vmatpush1.xpose.msra.mxu0 0.0
        %878 = vmatprep.subr.mxu0 0.0
        %879 = vmatpush1.xpose.msra.mxu0 0.0
        %880 = vmatprep.subr.mxu0 0.0
        %881 = vmatpush1.xpose.msra.mxu0 0.0
        %882 = vmatprep.subr.mxu0 0.0
        %883 = vmatpush1.xpose.msra.mxu0 0.0
        %884 = vmatprep.subr.mxu0 0.0
        %885 = vmatpush1.xpose.msra.mxu0 0.0
        %886 = vmatprep.subr.mxu0 0.0
        %887 = vmatpush1.xpose.msra.mxu0 0.0
        %888 = vmatprep.subr.mxu0 0.0
        %889 = vmatpush1.xpose.msra.mxu0 0.0
        %890 = vmatprep.subr.mxu0 0.0
        %891 = vmatpush1.xpose.msra.mxu0 0.0
        %892 = vmatprep.subr.mxu0 0.0
        %893 = vmatpush1.xpose.msra.mxu0 0.0
        %894 = vmatprep.subr.mxu0 0.0
        %895 = vmatpush1.xpose.msra.mxu0 0.0
        %896 = vmatprep.subr.mxu0 0.0
        %897 = vmatpush1.xpose.msra.mxu0 0.0
        %898 = vmatprep.subr.mxu0 0.0
        %899 = vmatpush1.xpose.msra.mxu0 0.0
        %900 = vmatprep.subr.mxu0 0.0
        %901 = vmatpush1.xpose.msra.mxu0 0.0
        %902 = vmatprep.subr.mxu0 0.0
        %903 = vmatpush1.xpose.msra.mxu0 0.0
        %904 = vmatprep.subr.mxu0 0.0
        %905 = vmatpush1.xpose.msra.mxu0 0.0
        %906 = vmatprep.subr.mxu0 0.0
        %907 = vmatpush1.xpose.msra.mxu0 0.0
        %908 = vmatprep.subr.mxu0 0.0
        %909 = vmatpush1.xpose.msra.mxu0 0.0
        %910 = vmatprep.subr.mxu0 0.0
        %911 = vmatpush1.xpose.msra.mxu0 0.0
        %912 = vmatprep.subr.mxu0 0.0
        %913 = vmatpush1.xpose.msra.mxu0 0.0
        %914 = vmatprep.subr.mxu0 0.0
        %915 = vmatpush1.xpose.msra.mxu0 0.0
        %916 = vmatprep.subr.mxu0 0.0
        %917 = vmatpush1.xpose.msra.mxu0 0.0
        %918 = vmatprep.subr.mxu0 0.0
        %919 = vmatpush1.xpose.msra.mxu0 0.0
        %920 = vmatprep.subr.mxu0 0.0
        %921 = vmatpush1.xpose.msra.mxu0 0.0
        %922 = vmatprep.subr.mxu0 0.0
        %923 = vmatpush1.xpose.msra.mxu0 0.0
        %924 = vmatprep.subr.mxu0 0.0
        %925 = vmatpush1.xpose.msra.mxu0 0.0
        %926 = vmatprep.mubr.f32.mxu0 0.0
        %927 = vmatmul.mubr.f32.gmra.mrb[0].mxu0 %v845
        %v928 = vpop.f32.mrb[0].mxu0
        %v929 = vadd.f32 0.0, %v928
        %v930 = vpop.f32.mrb[0].mxu0
        %931 = vmatprep.mubr.f32.mxu0 0.0
        %932 = vmatmul.mubr.f32.gmra.mrb[0].mxu0 %v848
        %v933 = vpop.f32.mrb[0].mxu0
        %v934 = vadd.f32 0.0, %v933
        %v935 = vpop.f32.mrb[0].mxu0
        %936 = vmatprep.mubr.f32.mxu0 0.0
        %937 = vmatmul.mubr.f32.gmra.mrb[0].mxu0 %v851
        %v938 = vpop.f32.mrb[0].mxu0
        %v939 = vadd.f32 0.0, %v938
        %v940 = vpop.f32.mrb[0].mxu0
        %941 = vdwg.mxu0
        %v942 = vmul.f32 %v929, 0.35355338
        %v943 = vmul.f32 %v934, 0.35355338
        %v944 = vmul.f32 %v939, 0.35355338
        %v945 = vadd.f32 %v942, %v518
        %v946 = vadd.f32 %v943, %v518
        %v947 = vadd.f32 %v944, %v518
        %vm948 = vcmask 195584
        %v949 = vsel %vm948, %v945, -inf
        %950 = vmax.xlane.f32.xlu0 %v949
        %v951 = vpop.xlane.xlu0 %950
        %v952 = vsel %vm948, %v946, -inf
        %953 = vmax.xlane.f32.xlu0 %v952
        %v954 = vpop.xlane.xlu0 %953
        %v955 = vsel %vm948, %v947, -inf
        %956 = vmax.xlane.f32.xlu0 %v955
        %v957 = vpop.xlane.xlu0 %956
        %v958 = vsub.f32 %v945, %v951
        %v959 = vsub.f32 %v946, %v954
        %v960 = vsub.f32 %v947, %v957
        %v961 = vmul.f32 %v958, 1.442695
        %v962 = vpow.pop %v961
        %v963 = vmul.f32 %v959, 1.442695
        %v964 = vpow.pop %v963
        %v965 = vmul.f32 %v960, 1.442695
        %v966 = vpow.pop %v965
        %v967 = vsel %vm948, %v962, 0.0
        %968 = vadd.xlane.f32.xlu0 %v967
        %v969 = vpop.xlane.xlu0 %968
        %v970 = vsel %vm948, %v964, 0.0
        %971 = vadd.xlane.f32.xlu0 %v970
        %v972 = vpop.xlane.xlu0 %971
        %v973 = vsel %vm948, %v966, 0.0
        %974 = vadd.xlane.f32.xlu0 %v973
        %v975 = vpop.xlane.xlu0 %974
        %v976 = vrcp.pop %v969
        %v977 = vrcp.pop %v972
        %v978 = vrcp.pop %v975
        %v979 = vmul.f32 %v962, %v976
        %v980 = vmul.f32 %v964, %v977
        %v981 = vmul.f32 %v966, %v978
        %v983 = vsel %vm948, %v979, 0
        %v986 = vsel %vm948, %v980, 0
        %v989 = vsel %vm948, %v981, 0
        %991 = vmatprep.subr.mxu0 0.0
        %992 = vmatpush1.msra.mxu0 %v830
        %993 = vmatprep.subr.mxu0 0.0
        %994 = vmatpush1.msra.mxu0 %v835
        %995 = vmatprep.subr.mxu0 0.0
        %996 = vmatpush1.msra.mxu0 %v840
        %997 = vmatprep.subr.mxu0 0.0
        %998 = vmatpush1.msra.mxu0 0.0
        %999 = vmatprep.subr.mxu0 0.0
        %1000 = vmatpush1.msra.mxu0 0.0
        %1001 = vmatprep.subr.mxu0 0.0
        %1002 = vmatpush1.msra.mxu0 0.0
        %1003 = vmatprep.subr.mxu0 0.0
        %1004 = vmatpush1.msra.mxu0 0.0
        %1005 = vmatprep.subr.mxu0 0.0
        %1006 = vmatpush1.msra.mxu0 0.0
        %1007 = vmatprep.subr.mxu0 0.0
        %1008 = vmatpush1.msra.mxu0 0.0
        %1009 = vmatprep.subr.mxu0 0.0
        %1010 = vmatpush1.msra.mxu0 0.0
        %1011 = vmatprep.subr.mxu0 0.0
        %1012 = vmatpush1.msra.mxu0 0.0
        %1013 = vmatprep.subr.mxu0 0.0
        %1014 = vmatpush1.msra.mxu0 0.0
        %1015 = vmatprep.subr.mxu0 0.0
        %1016 = vmatpush1.msra.mxu0 0.0
        %1017 = vmatprep.subr.mxu0 0.0
        %1018 = vmatpush1.msra.mxu0 0.0
        %1019 = vmatprep.subr.mxu0 0.0
        %1020 = vmatpush1.msra.mxu0 0.0
        %1021 = vmatprep.subr.mxu0 0.0
        %1022 = vmatpush1.msra.mxu0 0.0
        %1023 = vmatprep.subr.mxu0 0.0
        %1024 = vmatpush1.msra.mxu0 0.0
        %1025 = vmatprep.subr.mxu0 0.0
        %1026 = vmatpush1.msra.mxu0 0.0
        %1027 = vmatprep.subr.mxu0 0.0
        %1028 = vmatpush1.msra.mxu0 0.0
        %1029 = vmatprep.subr.mxu0 0.0
        %1030 = vmatpush1.msra.mxu0 0.0
        %1031 = vmatprep.subr.mxu0 0.0
        %1032 = vmatpush1.msra.mxu0 0.0
        %1033 = vmatprep.subr.mxu0 0.0
        %1034 = vmatpush1.msra.mxu0 0.0
        %1035 = vmatprep.subr.mxu0 0.0
        %1036 = vmatpush1.msra.mxu0 0.0
        %1037 = vmatprep.subr.mxu0 0.0
        %1038 = vmatpush1.msra.mxu0 0.0
        %1039 = vmatprep.subr.mxu0 0.0
        %1040 = vmatpush1.msra.mxu0 0.0
        %1041 = vmatprep.subr.mxu0 0.0
        %1042 = vmatpush1.msra.mxu0 0.0
        %1043 = vmatprep.subr.mxu0 0.0
        %1044 = vmatpush1.msra.mxu0 0.0
        %1045 = vmatprep.subr.mxu0 0.0
        %1046 = vmatpush1.msra.mxu0 0.0
        %1047 = vmatprep.subr.mxu0 0.0
        %1048 = vmatpush1.msra.mxu0 0.0
        %1049 = vmatprep.subr.mxu0 0.0
        %1050 = vmatpush1.msra.mxu0 0.0
        %1051 = vmatprep.subr.mxu0 0.0
        %1052 = vmatpush1.msra.mxu0 0.0
        %1053 = vmatprep.subr.mxu0 0.0
        %1054 = vmatpush1.msra.mxu0 0.0
        %1055 = vmatprep.mubr.f32.mxu0 0.0
        %1056 = vmatmul.mubr.f32.gmra.mrb[0].mxu0 %v983
        %v1057 = vpop.f32.mrb[0].mxu0
        %v1058 = vadd.f32 0.0, %v1057
        %v1059 = vpop.f32.mrb[0].mxu0
        %1060 = vmatprep.mubr.f32.mxu0 0.0
        %1061 = vmatmul.mubr.f32.gmra.mrb[0].mxu0 %v986
        %v1062 = vpop.f32.mrb[0].mxu0
        %v1063 = vadd.f32 0.0, %v1062
        %v1064 = vpop.f32.mrb[0].mxu0
        %1065 = vmatprep.mubr.f32.mxu0 0.0
        %1066 = vmatmul.mubr.f32.gmra.mrb[0].mxu0 %v989
        %v1067 = vpop.f32.mrb[0].mxu0
        %v1068 = vadd.f32 0.0, %v1067
        %v1069 = vpop.f32.mrb[0].mxu0
        %1070 = vdwg.mxu0
        %v1071 = vld [vmem:[%s4] sm:$0xff]
        %1072 = vrot.lane.b32.xlu0 %v660, 120
        %v1073 = vpop.permute.xlu0 %1072
        %1074 = vrot.lane.b32.xlu0 %v665, 120
        %v1075 = vpop.permute.xlu0 %1074
        %1076 = vrot.lane.b32.xlu0 %v670, 120
        %v1077 = vpop.permute.xlu0 %1076
        %1078 = vrot.lane.b32.xlu0 %v745, 120
        %v1079 = vpop.permute.xlu0 %1078
        %1080 = vrot.lane.b32.xlu0 %v750, 120
        %v1081 = vpop.permute.xlu0 %1080
        %1082 = vrot.lane.b32.xlu0 %v755, 120
        %v1083 = vpop.permute.xlu0 %1082
        %v1084 = vsel %vm843, %v1073, 0
        %v1086 = vsel %vm843, %v1075, 0
        %v1088 = vsel %vm843, %v1077, 0
        %v1090 = vsel %vm843, %v1079, 0
        %v1092 = vsel %vm843, %v1081, 0
        %v1094 = vsel %vm843, %v1083, 0
        %1096 = vmatprep.subr.mxu0 0.0
        %1097 = vmatpush1.xpose.msra.mxu0 %v1090
        %1098 = vmatprep.subr.mxu0 0.0
        %1099 = vmatpush1.xpose.msra.mxu0 %v1092
        %1100 = vmatprep.subr.mxu0 0.0
        %1101 = vmatpush1.xpose.msra.mxu0 %v1094
        %1102 = vmatprep.subr.mxu0 0.0
        %1103 = vmatpush1.xpose.msra.mxu0 0.0
        %1104 = vmatprep.subr.mxu0 0.0
        %1105 = vmatpush1.xpose.msra.mxu0 0.0
        %1106 = vmatprep.subr.mxu0 0.0
        %1107 = vmatpush1.xpose.msra.mxu0 0.0
        %1108 = vmatprep.subr.mxu0 0.0
        %1109 = vmatpush1.xpose.msra.mxu0 0.0
        %1110 = vmatprep.subr.mxu0 0.0
        %1111 = vmatpush1.xpose.msra.mxu0 0.0
        %1112 = vmatprep.subr.mxu0 0.0
        %1113 = vmatpush1.xpose.msra.mxu0 0.0
        %1114 = vmatprep.subr.mxu0 0.0
        %1115 = vmatpush1.xpose.msra.mxu0 0.0
        %1116 = vmatprep.subr.mxu0 0.0
        %1117 = vmatpush1.xpose.msra.mxu0 0.0
        %1118 = vmatprep.subr.mxu0 0.0
        %1119 = vmatpush1.xpose.msra.mxu0 0.0
        %1120 = vmatprep.subr.mxu0 0.0
        %1121 = vmatpush1.xpose.msra.mxu0 0.0
        %1122 = vmatprep.subr.mxu0 0.0
        %1123 = vmatpush1.xpose.msra.mxu0 0.0
        %1124 = vmatprep.subr.mxu0 0.0
        %1125 = vmatpush1.xpose.msra.mxu0 0.0
        %1126 = vmatprep.subr.mxu0 0.0
        %1127 = vmatpush1.xpose.msra.mxu0 0.0
        %1128 = vmatprep.subr.mxu0 0.0
        %1129 = vmatpush1.xpose.msra.mxu0 0.0
        %1130 = vmatprep.subr.mxu0 0.0
        %1131 = vmatpush1.xpose.msra.mxu0 0.0
        %1132 = vmatprep.subr.mxu0 0.0
        %1133 = vmatpush1.xpose.msra.mxu0 0.0
        %1134 = vmatprep.subr.mxu0 0.0
        %1135 = vmatpush1.xpose.msra.mxu0 0.0
        %1136 = vmatprep.subr.mxu0 0.0
        %1137 = vmatpush1.xpose.msra.mxu0 0.0
        %1138 = vmatprep.subr.mxu0 0.0
        %1139 = vmatpush1.xpose.msra.mxu0 0.0
        %1140 = vmatprep.subr.mxu0 0.0
        %1141 = vmatpush1.xpose.msra.mxu0 0.0
        %1142 = vmatprep.subr.mxu0 0.0
        %1143 = vmatpush1.xpose.msra.mxu0 0.0
        %1144 = vmatprep.subr.mxu0 0.0
        %1145 = vmatpush1.xpose.msra.mxu0 0.0
        %1146 = vmatprep.subr.mxu0 0.0
        %1147 = vmatpush1.xpose.msra.mxu0 0.0
        %1148 = vmatprep.subr.mxu0 0.0
        %1149 = vmatpush1.xpose.msra.mxu0 0.0
        %1150 = vmatprep.subr.mxu0 0.0
        %1151 = vmatpush1.xpose.msra.mxu0 0.0
        %1152 = vmatprep.subr.mxu0 0.0
        %1153 = vmatpush1.xpose.msra.mxu0 0.0
        %1154 = vmatprep.subr.mxu0 0.0
        %1155 = vmatpush1.xpose.msra.mxu0 0.0
        %1156 = vmatprep.subr.mxu0 0.0
        %1157 = vmatpush1.xpose.msra.mxu0 0.0
        %1158 = vmatprep.subr.mxu0 0.0
        %1159 = vmatpush1.xpose.msra.mxu0 0.0
        %1160 = vmatprep.mubr.f32.mxu0 0.0
        %1161 = vmatmul.mubr.f32.gmra.mrb[0].mxu0 %v1084
        %v1162 = vpop.f32.mrb[0].mxu0
        %v1163 = vadd.f32 0.0, %v1162
        %v1164 = vpop.f32.mrb[0].mxu0
        %1165 = vmatprep.mubr.f32.mxu0 0.0
        %1166 = vmatmul.mubr.f32.gmra.mrb[0].mxu0 %v1086
        %v1167 = vpop.f32.mrb[0].mxu0
        %v1168 = vadd.f32 0.0, %v1167
        %v1169 = vpop.f32.mrb[0].mxu0
        %1170 = vmatprep.mubr.f32.mxu0 0.0
        %1171 = vmatmul.mubr.f32.gmra.mrb[0].mxu0 %v1088
        %v1172 = vpop.f32.mrb[0].mxu0
        %v1173 = vadd.f32 0.0, %v1172
        %v1174 = vpop.f32.mrb[0].mxu0
        %1175 = vdwg.mxu0
        %v1176 = vmul.f32 %v1163, 0.35355338
        %v1177 = vmul.f32 %v1168, 0.35355338
        %v1178 = vmul.f32 %v1173, 0.35355338
        %v1179 = vadd.f32 %v1176, %v518
        %v1180 = vadd.f32 %v1177, %v518
        %v1181 = vadd.f32 %v1178, %v518
        %v1182 = vsel %vm948, %v1179, -inf
        %1183 = vmax.xlane.f32.xlu0 %v1182
        %v1184 = vpop.xlane.xlu0 %1183
        %v1185 = vsel %vm948, %v1180, -inf
        %1186 = vmax.xlane.f32.xlu0 %v1185
        %v1187 = vpop.xlane.xlu0 %1186
        %v1188 = vsel %vm948, %v1181, -inf
        %1189 = vmax.xlane.f32.xlu0 %v1188
        %v1190 = vpop.xlane.xlu0 %1189
        %v1191 = vsub.f32 %v1179, %v1184
        %v1192 = vsub.f32 %v1180, %v1187
        %v1193 = vsub.f32 %v1181, %v1190
        %v1194 = vmul.f32 %v1191, 1.442695
        %v1195 = vpow.pop %v1194
        %v1196 = vmul.f32 %v1192, 1.442695
        %v1197 = vpow.pop %v1196
        %v1198 = vmul.f32 %v1193, 1.442695
        %v1199 = vpow.pop %v1198
        %v1200 = vsel %vm948, %v1195, 0.0
        %1201 = vadd.xlane.f32.xlu0 %v1200
        %v1202 = vpop.xlane.xlu0 %1201
        %v1203 = vsel %vm948, %v1197, 0.0
        %1204 = vadd.xlane.f32.xlu0 %v1203
        %v1205 = vpop.xlane.xlu0 %1204
        %v1206 = vsel %vm948, %v1199, 0.0
        %1207 = vadd.xlane.f32.xlu0 %v1206
        %v1208 = vpop.xlane.xlu0 %1207
        %v1209 = vrcp.pop %v1202
        %v1210 = vrcp.pop %v1205
        %v1211 = vrcp.pop %v1208
        %v1212 = vmul.f32 %v1195, %v1209
        %v1213 = vmul.f32 %v1197, %v1210
        %v1214 = vmul.f32 %v1199, %v1211
        %1218 = vrot.lane.b32.xlu0 %v830, 120
        %v1219 = vpop.permute.xlu0 %1218
        %1220 = vrot.lane.b32.xlu0 %v835, 120
        %v1221 = vpop.permute.xlu0 %1220
        %1222 = vrot.lane.b32.xlu0 %v840, 120
        %v1223 = vpop.permute.xlu0 %1222
        %v1228 = vsel %vm948, %v1212, 0
        %v1231 = vsel %vm948, %v1213, 0
        %v1234 = vsel %vm948, %v1214, 0
        %1236 = vmatprep.subr.mxu0 0.0
        %1237 = vmatpush1.msra.mxu0 %v1219
        %1238 = vmatprep.subr.mxu0 0.0
        %1239 = vmatpush1.msra.mxu0 %v1221
        %1240 = vmatprep.subr.mxu0 0.0
        %1241 = vmatpush1.msra.mxu0 %v1223
        %1242 = vmatprep.subr.mxu0 0.0
        %1243 = vmatpush1.msra.mxu0 0.0
        %1244 = vmatprep.subr.mxu0 0.0
        %1245 = vmatpush1.msra.mxu0 0.0
        %1246 = vmatprep.subr.mxu0 0.0
        %1247 = vmatpush1.msra.mxu0 0.0
        %1248 = vmatprep.subr.mxu0 0.0
        %1249 = vmatpush1.msra.mxu0 0.0
        %1250 = vmatprep.subr.mxu0 0.0
        %1251 = vmatpush1.msra.mxu0 0.0
        %1252 = vmatprep.subr.mxu0 0.0
        %1253 = vmatpush1.msra.mxu0 0.0
        %1254 = vmatprep.subr.mxu0 0.0
        %1255 = vmatpush1.msra.mxu0 0.0
        %1256 = vmatprep.subr.mxu0 0.0
        %1257 = vmatpush1.msra.mxu0 0.0
        %1258 = vmatprep.subr.mxu0 0.0
        %1259 = vmatpush1.msra.mxu0 0.0
        %1260 = vmatprep.subr.mxu0 0.0
        %1261 = vmatpush1.msra.mxu0 0.0
        %1262 = vmatprep.subr.mxu0 0.0
        %1263 = vmatpush1.msra.mxu0 0.0
        %1264 = vmatprep.subr.mxu0 0.0
        %1265 = vmatpush1.msra.mxu0 0.0
        %1266 = vmatprep.subr.mxu0 0.0
        %1267 = vmatpush1.msra.mxu0 0.0
        %1268 = vmatprep.subr.mxu0 0.0
        %1269 = vmatpush1.msra.mxu0 0.0
        %1270 = vmatprep.subr.mxu0 0.0
        %1271 = vmatpush1.msra.mxu0 0.0
        %1272 = vmatprep.subr.mxu0 0.0
        %1273 = vmatpush1.msra.mxu0 0.0
        %1274 = vmatprep.subr.mxu0 0.0
        %1275 = vmatpush1.msra.mxu0 0.0
        %1276 = vmatprep.subr.mxu0 0.0
        %1277 = vmatpush1.msra.mxu0 0.0
        %1278 = vmatprep.subr.mxu0 0.0
        %1279 = vmatpush1.msra.mxu0 0.0
        %1280 = vmatprep.subr.mxu0 0.0
        %1281 = vmatpush1.msra.mxu0 0.0
        %1282 = vmatprep.subr.mxu0 0.0
        %1283 = vmatpush1.msra.mxu0 0.0
        %1284 = vmatprep.subr.mxu0 0.0
        %1285 = vmatpush1.msra.mxu0 0.0
        %1286 = vmatprep.subr.mxu0 0.0
        %1287 = vmatpush1.msra.mxu0 0.0
        %1288 = vmatprep.subr.mxu0 0.0
        %1289 = vmatpush1.msra.mxu0 0.0
        %1290 = vmatprep.subr.mxu0 0.0
        %1291 = vmatpush1.msra.mxu0 0.0
        %1292 = vmatprep.subr.mxu0 0.0
        %1293 = vmatpush1.msra.mxu0 0.0
        %1294 = vmatprep.subr.mxu0 0.0
        %1295 = vmatpush1.msra.mxu0 0.0
        %1296 = vmatprep.subr.mxu0 0.0
        %1297 = vmatpush1.msra.mxu0 0.0
        %1298 = vmatprep.subr.mxu0 0.0
        %1299 = vmatpush1.msra.mxu0 0.0
        %1300 = vmatprep.mubr.f32.mxu0 0.0
        %1301 = vmatmul.mubr.f32.gmra.mrb[0].mxu0 %v1228
        %v1302 = vpop.f32.mrb[0].mxu0
        %v1303 = vadd.f32 0.0, %v1302
        %v1304 = vpop.f32.mrb[0].mxu0
        %1305 = vmatprep.mubr.f32.mxu0 0.0
        %1306 = vmatmul.mubr.f32.gmra.mrb[0].mxu0 %v1231
        %v1307 = vpop.f32.mrb[0].mxu0
        %v1308 = vadd.f32 0.0, %v1307
        %v1309 = vpop.f32.mrb[0].mxu0
        %1310 = vmatprep.mubr.f32.mxu0 0.0
        %1311 = vmatmul.mubr.f32.gmra.mrb[0].mxu0 %v1234
        %v1312 = vpop.f32.mrb[0].mxu0
        %v1313 = vadd.f32 0.0, %v1312
        %v1314 = vpop.f32.mrb[0].mxu0
        %1315 = vdwg.mxu0
        %v1316 = vld [vmem:[%s4 + $0x8] sm:$0xff]
        %v1318 = vsel %vm843, %v1303, 0
        %v1321 = vsel %vm843, %v1308, 0
        %v1324 = vsel %vm843, %v1313, 0
        %1326 = vmatprep.subr.mxu0 0.0
        %1327 = vmatpush1.msra.mxu0 %v1316
        %1328 = vmatprep.subr.mxu0 0.0
        %1329 = vmatpush1.msra.mxu0 0.0
        %1330 = vmatprep.subr.mxu0 0.0
        %1331 = vmatpush1.msra.mxu0 0.0
        %1332 = vmatprep.subr.mxu0 0.0
        %1333 = vmatpush1.msra.mxu0 0.0
        %1334 = vmatprep.subr.mxu0 0.0
        %1335 = vmatpush1.msra.mxu0 0.0
        %1336 = vmatprep.subr.mxu0 0.0
        %1337 = vmatpush1.msra.mxu0 0.0
        %1338 = vmatprep.subr.mxu0 0.0
        %1339 = vmatpush1.msra.mxu0 0.0
        %1340 = vmatprep.subr.mxu0 0.0
        %1341 = vmatpush1.msra.mxu0 0.0
        %1342 = vmatprep.subr.mxu0 0.0
        %1343 = vmatpush1.msra.mxu0 0.0
        %1344 = vmatprep.subr.mxu0 0.0
        %1345 = vmatpush1.msra.mxu0 0.0
        %1346 = vmatprep.subr.mxu0 0.0
        %1347 = vmatpush1.msra.mxu0 0.0
        %1348 = vmatprep.subr.mxu0 0.0
        %1349 = vmatpush1.msra.mxu0 0.0
        %1350 = vmatprep.subr.mxu0 0.0
        %1351 = vmatpush1.msra.mxu0 0.0
        %1352 = vmatprep.subr.mxu0 0.0
        %1353 = vmatpush1.msra.mxu0 0.0
        %1354 = vmatprep.subr.mxu0 0.0
        %1355 = vmatpush1.msra.mxu0 0.0
        %1356 = vmatprep.subr.mxu0 0.0
        %1357 = vmatpush1.msra.mxu0 0.0
        %1358 = vmatprep.subr.mxu0 0.0
        %1359 = vmatpush1.msra.mxu0 0.0
        %1360 = vmatprep.subr.mxu0 0.0
        %1361 = vmatpush1.msra.mxu0 0.0
        %1362 = vmatprep.subr.mxu0 0.0
        %1363 = vmatpush1.msra.mxu0 0.0
        %1364 = vmatprep.subr.mxu0 0.0
        %1365 = vmatpush1.msra.mxu0 0.0
        %1366 = vmatprep.subr.mxu0 0.0
        %1367 = vmatpush1.msra.mxu0 0.0
        %1368 = vmatprep.subr.mxu0 0.0
        %1369 = vmatpush1.msra.mxu0 0.0
        %1370 = vmatprep.subr.mxu0 0.0
        %1371 = vmatpush1.msra.mxu0 0.0
        %1372 = vmatprep.subr.mxu0 0.0
        %1373 = vmatpush1.msra.mxu0 0.0
        %1374 = vmatprep.subr.mxu0 0.0
        %1375 = vmatpush1.msra.mxu0 0.0
        %1376 = vmatprep.subr.mxu0 0.0
        %1377 = vmatpush1.msra.mxu0 0.0
        %1378 = vmatprep.subr.mxu0 0.0
        %1379 = vmatpush1.msra.mxu0 0.0
        %1380 = vmatprep.subr.mxu0 0.0
        %1381 = vmatpush1.msra.mxu0 0.0
        %1382 = vmatprep.subr.mxu0 0.0
        %1383 = vmatpush1.msra.mxu0 0.0
        %1384 = vmatprep.subr.mxu0 0.0
        %1385 = vmatpush1.msra.mxu0 0.0
        %1386 = vmatprep.subr.mxu0 0.0
        %1387 = vmatpush1.msra.mxu0 0.0
        %1388 = vmatprep.subr.mxu0 0.0
        %1389 = vmatpush1.msra.mxu0 0.0
        %1390 = vmatprep.mubr.f32.mxu0 0.0
        %1391 = vmatmul.mubr.f32.gmra.mrb[0].mxu0 %v1318
        %v1392 = vpop.f32.mrb[0].mxu0
        %v1393 = vadd.f32 0.0, %v1392
        %v1394 = vpop.f32.mrb[0].mxu0
        %1395 = vmatprep.mubr.f32.mxu0 0.0
        %1396 = vmatmul.mubr.f32.gmra.mrb[0].mxu0 %v1321
        %v1397 = vpop.f32.mrb[0].mxu0
        %v1398 = vadd.f32 0.0, %v1397
        %v1399 = vpop.f32.mrb[0].mxu0
        %1400 = vmatprep.mubr.f32.mxu0 0.0
        %1401 = vmatmul.mubr.f32.gmra.mrb[0].mxu0 %v1324
        %v1402 = vpop.f32.mrb[0].mxu0
        %v1403 = vadd.f32 0.0, %v1402
        %v1404 = vpop.f32.mrb[0].mxu0
        %1405 = vdwg.mxu0
        %v1407 = vsel %vm843, %v1058, 0
        %v1410 = vsel %vm843, %v1063, 0
        %v1413 = vsel %vm843, %v1068, 0
        %1415 = vmatprep.subr.mxu0 0.0
        %1416 = vmatpush1.msra.mxu0 %v1071
        %1417 = vmatprep.subr.mxu0 0.0
        %1418 = vmatpush1.msra.mxu0 0.0
        %1419 = vmatprep.subr.mxu0 0.0
        %1420 = vmatpush1.msra.mxu0 0.0
        %1421 = vmatprep.subr.mxu0 0.0
        %1422 = vmatpush1.msra.mxu0 0.0
        %1423 = vmatprep.subr.mxu0 0.0
        %1424 = vmatpush1.msra.mxu0 0.0
        %1425 = vmatprep.subr.mxu0 0.0
        %1426 = vmatpush1.msra.mxu0 0.0
        %1427 = vmatprep.subr.mxu0 0.0
        %1428 = vmatpush1.msra.mxu0 0.0
        %1429 = vmatprep.subr.mxu0 0.0
        %1430 = vmatpush1.msra.mxu0 0.0
        %1431 = vmatprep.subr.mxu0 0.0
        %1432 = vmatpush1.msra.mxu0 0.0
        %1433 = vmatprep.subr.mxu0 0.0
        %1434 = vmatpush1.msra.mxu0 0.0
        %1435 = vmatprep.subr.mxu0 0.0
        %1436 = vmatpush1.msra.mxu0 0.0
        %1437 = vmatprep.subr.mxu0 0.0
        %1438 = vmatpush1.msra.mxu0 0.0
        %1439 = vmatprep.subr.mxu0 0.0
        %1440 = vmatpush1.msra.mxu0 0.0
        %1441 = vmatprep.subr.mxu0 0.0
        %1442 = vmatpush1.msra.mxu0 0.0
        %1443 = vmatprep.subr.mxu0 0.0
        %1444 = vmatpush1.msra.mxu0 0.0
        %1445 = vmatprep.subr.mxu0 0.0
        %1446 = vmatpush1.msra.mxu0 0.0
        %1447 = vmatprep.subr.mxu0 0.0
        %1448 = vmatpush1.msra.mxu0 0.0
        %1449 = vmatprep.subr.mxu0 0.0
        %1450 = vmatpush1.msra.mxu0 0.0
        %1451 = vmatprep.subr.mxu0 0.0
        %1452 = vmatpush1.msra.mxu0 0.0
        %1453 = vmatprep.subr.mxu0 0.0
        %1454 = vmatpush1.msra.mxu0 0.0
        %1455 = vmatprep.subr.mxu0 0.0
        %1456 = vmatpush1.msra.mxu0 0.0
        %1457 = vmatprep.subr.mxu0 0.0
        %1458 = vmatpush1.msra.mxu0 0.0
        %1459 = vmatprep.subr.mxu0 0.0
        %1460 = vmatpush1.msra.mxu0 0.0
        %1461 = vmatprep.subr.mxu0 0.0
        %1462 = vmatpush1.msra.mxu0 0.0
        %1463 = vmatprep.subr.mxu0 0.0
        %1464 = vmatpush1.msra.mxu0 0.0
        %1465 = vmatprep.subr.mxu0 0.0
        %1466 = vmatpush1.msra.mxu0 0.0
        %1467 = vmatprep.subr.mxu0 0.0
        %1468 = vmatpush1.msra.mxu0 0.0
        %1469 = vmatprep.subr.mxu0 0.0
        %1470 = vmatpush1.msra.mxu0 0.0
        %1471 = vmatprep.subr.mxu0 0.0
        %1472 = vmatpush1.msra.mxu0 0.0
        %1473 = vmatprep.subr.mxu0 0.0
        %1474 = vmatpush1.msra.mxu0 0.0
        %1475 = vmatprep.subr.mxu0 0.0
        %1476 = vmatpush1.msra.mxu0 0.0
        %1477 = vmatprep.subr.mxu0 0.0
        %1478 = vmatpush1.msra.mxu0 0.0
        %1479 = vmatprep.mubr.f32.mxu0 0.0
        %1480 = vmatmul.mubr.f32.gmra.mrb[0].mxu0 %v1407
        %v1481 = vpop.f32.mrb[0].mxu0
        %v1482 = vadd.f32 %v1393, %v1481
        %v1483 = vpop.f32.mrb[0].mxu0
        %1484 = vmatprep.mubr.f32.mxu0 0.0
        %1485 = vmatmul.mubr.f32.gmra.mrb[0].mxu0 %v1410
        %v1486 = vpop.f32.mrb[0].mxu0
        %v1487 = vadd.f32 %v1398, %v1486
        %v1488 = vpop.f32.mrb[0].mxu0
        %1489 = vmatprep.mubr.f32.mxu0 0.0
        %1490 = vmatmul.mubr.f32.gmra.mrb[0].mxu0 %v1413
        %v1491 = vpop.f32.mrb[0].mxu0
        %v1492 = vadd.f32 %v1403, %v1491
        %v1493 = vpop.f32.mrb[0].mxu0
        %1494 = vdwg.mxu0
        %1495 = vrot.lane.b32.xlu0 %v660, 112
        %v1496 = vpop.permute.xlu0 %1495
        %1497 = vrot.lane.b32.xlu0 %v665, 112
        %v1498 = vpop.permute.xlu0 %1497
        %1499 = vrot.lane.b32.xlu0 %v670, 112
        %v1500 = vpop.permute.xlu0 %1499
        %1501 = vrot.lane.b32.xlu0 %v745, 112
        %v1502 = vpop.permute.xlu0 %1501
        %1503 = vrot.lane.b32.xlu0 %v750, 112
        %v1504 = vpop.permute.xlu0 %1503
        %1505 = vrot.lane.b32.xlu0 %v755, 112
        %v1506 = vpop.permute.xlu0 %1505
        %v1507 = vsel %vm843, %v1496, 0
        %v1509 = vsel %vm843, %v1498, 0
        %v1511 = vsel %vm843, %v1500, 0
        %v1513 = vsel %vm843, %v1502, 0
        %v1515 = vsel %vm843, %v1504, 0
        %v1517 = vsel %vm843, %v1506, 0
        %1519 = vmatprep.subr.mxu0 0.0
        %1520 = vmatpush1.xpose.msra.mxu0 %v1513
        %1521 = vmatprep.subr.mxu0 0.0
        %1522 = vmatpush1.xpose.msra.mxu0 %v1515
        %1523 = vmatprep.subr.mxu0 0.0
        %1524 = vmatpush1.xpose.msra.mxu0 %v1517
        %1525 = vmatprep.subr.mxu0 0.0
        %1526 = vmatpush1.xpose.msra.mxu0 0.0
        %1527 = vmatprep.subr.mxu0 0.0
        %1528 = vmatpush1.xpose.msra.mxu0 0.0
        %1529 = vmatprep.subr.mxu0 0.0
        %1530 = vmatpush1.xpose.msra.mxu0 0.0
        %1531 = vmatprep.subr.mxu0 0.0
        %1532 = vmatpush1.xpose.msra.mxu0 0.0
        %1533 = vmatprep.subr.mxu0 0.0
        %1534 = vmatpush1.xpose.msra.mxu0 0.0
        %1535 = vmatprep.subr.mxu0 0.0
        %1536 = vmatpush1.xpose.msra.mxu0 0.0
        %1537 = vmatprep.subr.mxu0 0.0
        %1538 = vmatpush1.xpose.msra.mxu0 0.0
        %1539 = vmatprep.subr.mxu0 0.0
        %1540 = vmatpush1.xpose.msra.mxu0 0.0
        %1541 = vmatprep.subr.mxu0 0.0
        %1542 = vmatpush1.xpose.msra.mxu0 0.0
        %1543 = vmatprep.subr.mxu0 0.0
        %1544 = vmatpush1.xpose.msra.mxu0 0.0
        %1545 = vmatprep.subr.mxu0 0.0
        %1546 = vmatpush1.xpose.msra.mxu0 0.0
        %1547 = vmatprep.subr.mxu0 0.0
        %1548 = vmatpush1.xpose.msra.mxu0 0.0
        %1549 = vmatprep.subr.mxu0 0.0
        %1550 = vmatpush1.xpose.msra.mxu0 0.0
        %1551 = vmatprep.subr.mxu0 0.0
        %1552 = vmatpush1.xpose.msra.mxu0 0.0
        %1553 = vmatprep.subr.mxu0 0.0
        %1554 = vmatpush1.xpose.msra.mxu0 0.0
        %1555 = vmatprep.subr.mxu0 0.0
        %1556 = vmatpush1.xpose.msra.mxu0 0.0
        %1557 = vmatprep.subr.mxu0 0.0
        %1558 = vmatpush1.xpose.msra.mxu0 0.0
        %1559 = vmatprep.subr.mxu0 0.0
        %1560 = vmatpush1.xpose.msra.mxu0 0.0
        %1561 = vmatprep.subr.mxu0 0.0
        %1562 = vmatpush1.xpose.msra.mxu0 0.0
        %1563 = vmatprep.subr.mxu0 0.0
        %1564 = vmatpush1.xpose.msra.mxu0 0.0
        %1565 = vmatprep.subr.mxu0 0.0
        %1566 = vmatpush1.xpose.msra.mxu0 0.0
        %1567 = vmatprep.subr.mxu0 0.0
        %1568 = vmatpush1.xpose.msra.mxu0 0.0
        %1569 = vmatprep.subr.mxu0 0.0
        %1570 = vmatpush1.xpose.msra.mxu0 0.0
        %1571 = vmatprep.subr.mxu0 0.0
        %1572 = vmatpush1.xpose.msra.mxu0 0.0
        %1573 = vmatprep.subr.mxu0 0.0
        %1574 = vmatpush1.xpose.msra.mxu0 0.0
        %1575 = vmatprep.subr.mxu0 0.0
        %1576 = vmatpush1.xpose.msra.mxu0 0.0
        %1577 = vmatprep.subr.mxu0 0.0
        %1578 = vmatpush1.xpose.msra.mxu0 0.0
        %1579 = vmatprep.subr.mxu0 0.0
        %1580 = vmatpush1.xpose.msra.mxu0 0.0
        %1581 = vmatprep.subr.mxu0 0.0
        %1582 = vmatpush1.xpose.msra.mxu0 0.0
        %1583 = vmatprep.mubr.f32.mxu0 0.0
        %1584 = vmatmul.mubr.f32.gmra.mrb[0].mxu0 %v1507
        %v1585 = vpop.f32.mrb[0].mxu0
        %v1586 = vadd.f32 0.0, %v1585
        %v1587 = vpop.f32.mrb[0].mxu0
        %1588 = vmatprep.mubr.f32.mxu0 0.0
        %1589 = vmatmul.mubr.f32.gmra.mrb[0].mxu0 %v1509
        %v1590 = vpop.f32.mrb[0].mxu0
        %v1591 = vadd.f32 0.0, %v1590
        %v1592 = vpop.f32.mrb[0].mxu0
        %1593 = vmatprep.mubr.f32.mxu0 0.0
        %1594 = vmatmul.mubr.f32.gmra.mrb[0].mxu0 %v1511
        %v1595 = vpop.f32.mrb[0].mxu0
        %v1596 = vadd.f32 0.0, %v1595
        %v1597 = vpop.f32.mrb[0].mxu0
        %1598 = vdwg.mxu0
        %v1599 = vmul.f32 %v1586, 0.35355338
        %v1600 = vmul.f32 %v1591, 0.35355338
        %v1601 = vmul.f32 %v1596, 0.35355338
        %v1602 = vadd.f32 %v1599, %v518
        %v1603 = vadd.f32 %v1600, %v518
        %v1604 = vadd.f32 %v1601, %v518
        %v1605 = vsel %vm948, %v1602, -inf
        %1606 = vmax.xlane.f32.xlu0 %v1605
        %v1607 = vpop.xlane.xlu0 %1606
        %v1608 = vsel %vm948, %v1603, -inf
        %1609 = vmax.xlane.f32.xlu0 %v1608
        %v1610 = vpop.xlane.xlu0 %1609
        %v1611 = vsel %vm948, %v1604, -inf
        %1612 = vmax.xlane.f32.xlu0 %v1611
        %v1613 = vpop.xlane.xlu0 %1612
        %v1614 = vsub.f32 %v1602, %v1607
        %v1615 = vsub.f32 %v1603, %v1610
        %v1616 = vsub.f32 %v1604, %v1613
        %v1617 = vmul.f32 %v1614, 1.442695
        %v1618 = vpow.pop %v1617
        %v1619 = vmul.f32 %v1615, 1.442695
        %v1620 = vpow.pop %v1619
        %v1621 = vmul.f32 %v1616, 1.442695
        %v1622 = vpow.pop %v1621
        %v1623 = vsel %vm948, %v1618, 0.0
        %1624 = vadd.xlane.f32.xlu0 %v1623
        %v1625 = vpop.xlane.xlu0 %1624
        %v1626 = vsel %vm948, %v1620, 0.0
        %1627 = vadd.xlane.f32.xlu0 %v1626
        %v1628 = vpop.xlane.xlu0 %1627
        %v1629 = vsel %vm948, %v1622, 0.0
        %1630 = vadd.xlane.f32.xlu0 %v1629
        %v1631 = vpop.xlane.xlu0 %1630
        %v1632 = vrcp.pop %v1625
        %v1633 = vrcp.pop %v1628
        %v1634 = vrcp.pop %v1631
        %v1635 = vmul.f32 %v1618, %v1632
        %v1636 = vmul.f32 %v1620, %v1633
        %v1637 = vmul.f32 %v1622, %v1634
        %1638 = vrot.lane.b32.xlu0 %v830, 112
        %v1639 = vpop.permute.xlu0 %1638
        %1640 = vrot.lane.b32.xlu0 %v835, 112
        %v1641 = vpop.permute.xlu0 %1640
        %1642 = vrot.lane.b32.xlu0 %v840, 112
        %v1643 = vpop.permute.xlu0 %1642
        %v1648 = vsel %vm948, %v1635, 0
        %v1651 = vsel %vm948, %v1636, 0
        %v1654 = vsel %vm948, %v1637, 0
        %1656 = vmatprep.subr.mxu0 0.0
        %1657 = vmatpush1.msra.mxu0 %v1639
        %1658 = vmatprep.subr.mxu0 0.0
        %1659 = vmatpush1.msra.mxu0 %v1641
        %1660 = vmatprep.subr.mxu0 0.0
        %1661 = vmatpush1.msra.mxu0 %v1643
        %1662 = vmatprep.subr.mxu0 0.0
        %1663 = vmatpush1.msra.mxu0 0.0
        %1664 = vmatprep.subr.mxu0 0.0
        %1665 = vmatpush1.msra.mxu0 0.0
        %1666 = vmatprep.subr.mxu0 0.0
        %1667 = vmatpush1.msra.mxu0 0.0
        %1668 = vmatprep.subr.mxu0 0.0
        %1669 = vmatpush1.msra.mxu0 0.0
        %1670 = vmatprep.subr.mxu0 0.0
        %1671 = vmatpush1.msra.mxu0 0.0
        %1672 = vmatprep.subr.mxu0 0.0
        %1673 = vmatpush1.msra.mxu0 0.0
        %1674 = vmatprep.subr.mxu0 0.0
        %1675 = vmatpush1.msra.mxu0 0.0
        %1676 = vmatprep.subr.mxu0 0.0
        %1677 = vmatpush1.msra.mxu0 0.0
        %1678 = vmatprep.subr.mxu0 0.0
        %1679 = vmatpush1.msra.mxu0 0.0
        %1680 = vmatprep.subr.mxu0 0.0
        %1681 = vmatpush1.msra.mxu0 0.0
        %1682 = vmatprep.subr.mxu0 0.0
        %1683 = vmatpush1.msra.mxu0 0.0
        %1684 = vmatprep.subr.mxu0 0.0
        %1685 = vmatpush1.msra.mxu0 0.0
        %1686 = vmatprep.subr.mxu0 0.0
        %1687 = vmatpush1.msra.mxu0 0.0
        %1688 = vmatprep.subr.mxu0 0.0
        %1689 = vmatpush1.msra.mxu0 0.0
        %1690 = vmatprep.subr.mxu0 0.0
        %1691 = vmatpush1.msra.mxu0 0.0
        %1692 = vmatprep.subr.mxu0 0.0
        %1693 = vmatpush1.msra.mxu0 0.0
        %1694 = vmatprep.subr.mxu0 0.0
        %1695 = vmatpush1.msra.mxu0 0.0
        %1696 = vmatprep.subr.mxu0 0.0
        %1697 = vmatpush1.msra.mxu0 0.0
        %1698 = vmatprep.subr.mxu0 0.0
        %1699 = vmatpush1.msra.mxu0 0.0
        %1700 = vmatprep.subr.mxu0 0.0
        %1701 = vmatpush1.msra.mxu0 0.0
        %1702 = vmatprep.subr.mxu0 0.0
        %1703 = vmatpush1.msra.mxu0 0.0
        %1704 = vmatprep.subr.mxu0 0.0
        %1705 = vmatpush1.msra.mxu0 0.0
        %1706 = vmatprep.subr.mxu0 0.0
        %1707 = vmatpush1.msra.mxu0 0.0
        %1708 = vmatprep.subr.mxu0 0.0
        %1709 = vmatpush1.msra.mxu0 0.0
        %1710 = vmatprep.subr.mxu0 0.0
        %1711 = vmatpush1.msra.mxu0 0.0
        %1712 = vmatprep.subr.mxu0 0.0
        %1713 = vmatpush1.msra.mxu0 0.0
        %1714 = vmatprep.subr.mxu0 0.0
        %1715 = vmatpush1.msra.mxu0 0.0
        %1716 = vmatprep.subr.mxu0 0.0
        %1717 = vmatpush1.msra.mxu0 0.0
        %1718 = vmatprep.subr.mxu0 0.0
        %1719 = vmatpush1.msra.mxu0 0.0
        %1720 = vmatprep.mubr.f32.mxu0 0.0
        %1721 = vmatmul.mubr.f32.gmra.mrb[0].mxu0 %v1648
        %v1722 = vpop.f32.mrb[0].mxu0
        %v1723 = vadd.f32 0.0, %v1722
        %v1724 = vpop.f32.mrb[0].mxu0
        %1725 = vmatprep.mubr.f32.mxu0 0.0
        %1726 = vmatmul.mubr.f32.gmra.mrb[0].mxu0 %v1651
        %v1727 = vpop.f32.mrb[0].mxu0
        %v1728 = vadd.f32 0.0, %v1727
        %v1729 = vpop.f32.mrb[0].mxu0
        %1730 = vmatprep.mubr.f32.mxu0 0.0
        %1731 = vmatmul.mubr.f32.gmra.mrb[0].mxu0 %v1654
        %v1732 = vpop.f32.mrb[0].mxu0
        %v1733 = vadd.f32 0.0, %v1732
        %v1734 = vpop.f32.mrb[0].mxu0
        %1735 = vdwg.mxu0
        %v1736 = vld [vmem:[%s4 + $0x10] sm:$0xff]
        %v1738 = vsel %vm843, %v1723, 0
        %v1741 = vsel %vm843, %v1728, 0
        %v1744 = vsel %vm843, %v1733, 0
        %1746 = vmatprep.subr.mxu0 0.0
        %1747 = vmatpush1.msra.mxu0 %v1736
        %1748 = vmatprep.subr.mxu0 0.0
        %1749 = vmatpush1.msra.mxu0 0.0
        %1750 = vmatprep.subr.mxu0 0.0
        %1751 = vmatpush1.msra.mxu0 0.0
        %1752 = vmatprep.subr.mxu0 0.0
        %1753 = vmatpush1.msra.mxu0 0.0
        %1754 = vmatprep.subr.mxu0 0.0
        %1755 = vmatpush1.msra.mxu0 0.0
        %1756 = vmatprep.subr.mxu0 0.0
        %1757 = vmatpush1.msra.mxu0 0.0
        %1758 = vmatprep.subr.mxu0 0.0
        %1759 = vmatpush1.msra.mxu0 0.0
        %1760 = vmatprep.subr.mxu0 0.0
        %1761 = vmatpush1.msra.mxu0 0.0
        %1762 = vmatprep.subr.mxu0 0.0
        %1763 = vmatpush1.msra.mxu0 0.0
        %1764 = vmatprep.subr.mxu0 0.0
        %1765 = vmatpush1.msra.mxu0 0.0
        %1766 = vmatprep.subr.mxu0 0.0
        %1767 = vmatpush1.msra.mxu0 0.0
        %1768 = vmatprep.subr.mxu0 0.0
        %1769 = vmatpush1.msra.mxu0 0.0
        %1770 = vmatprep.subr.mxu0 0.0
        %1771 = vmatpush1.msra.mxu0 0.0
        %1772 = vmatprep.subr.mxu0 0.0
        %1773 = vmatpush1.msra.mxu0 0.0
        %1774 = vmatprep.subr.mxu0 0.0
        %1775 = vmatpush1.msra.mxu0 0.0
        %1776 = vmatprep.subr.mxu0 0.0
        %1777 = vmatpush1.msra.mxu0 0.0
        %1778 = vmatprep.subr.mxu0 0.0
        %1779 = vmatpush1.msra.mxu0 0.0
        %1780 = vmatprep.subr.mxu0 0.0
        %1781 = vmatpush1.msra.mxu0 0.0
        %1782 = vmatprep.subr.mxu0 0.0
        %1783 = vmatpush1.msra.mxu0 0.0
        %1784 = vmatprep.subr.mxu0 0.0
        %1785 = vmatpush1.msra.mxu0 0.0
        %1786 = vmatprep.subr.mxu0 0.0
        %1787 = vmatpush1.msra.mxu0 0.0
        %1788 = vmatprep.subr.mxu0 0.0
        %1789 = vmatpush1.msra.mxu0 0.0
        %1790 = vmatprep.subr.mxu0 0.0
        %1791 = vmatpush1.msra.mxu0 0.0
        %1792 = vmatprep.subr.mxu0 0.0
        %1793 = vmatpush1.msra.mxu0 0.0
        %1794 = vmatprep.subr.mxu0 0.0
        %1795 = vmatpush1.msra.mxu0 0.0
        %1796 = vmatprep.subr.mxu0 0.0
        %1797 = vmatpush1.msra.mxu0 0.0
        %1798 = vmatprep.subr.mxu0 0.0
        %1799 = vmatpush1.msra.mxu0 0.0
        %1800 = vmatprep.subr.mxu0 0.0
        %1801 = vmatpush1.msra.mxu0 0.0
        %1802 = vmatprep.subr.mxu0 0.0
        %1803 = vmatpush1.msra.mxu0 0.0
        %1804 = vmatprep.subr.mxu0 0.0
        %1805 = vmatpush1.msra.mxu0 0.0
        %1806 = vmatprep.subr.mxu0 0.0
        %1807 = vmatpush1.msra.mxu0 0.0
        %1808 = vmatprep.subr.mxu0 0.0
        %1809 = vmatpush1.msra.mxu0 0.0
        %1810 = vmatprep.mubr.f32.mxu0 0.0
        %1811 = vmatmul.mubr.f32.gmra.mrb[0].mxu0 %v1738
        %v1812 = vpop.f32.mrb[0].mxu0
        %v1813 = vadd.f32 0.0, %v1812
        %v1814 = vpop.f32.mrb[0].mxu0
        %1815 = vmatprep.mubr.f32.mxu0 0.0
        %1816 = vmatmul.mubr.f32.gmra.mrb[0].mxu0 %v1741
        %v1817 = vpop.f32.mrb[0].mxu0
        %v1818 = vadd.f32 0.0, %v1817
        %v1819 = vpop.f32.mrb[0].mxu0
        %1820 = vmatprep.mubr.f32.mxu0 0.0
        %1821 = vmatmul.mubr.f32.gmra.mrb[0].mxu0 %v1744
        %v1822 = vpop.f32.mrb[0].mxu0
        %v1823 = vadd.f32 0.0, %v1822
        %v1824 = vpop.f32.mrb[0].mxu0
        %1825 = vdwg.mxu0
        %v1826 = vadd.f32 %v1482, %v1813
        %v1827 = vadd.f32 %v1487, %v1818
        %v1828 = vadd.f32 %v1492, %v1823
        %1829 = vrot.lane.b32.xlu0 %v660, 104
        %v1830 = vpop.permute.xlu0 %1829
        %1831 = vrot.lane.b32.xlu0 %v665, 104
        %v1832 = vpop.permute.xlu0 %1831
        %1833 = vrot.lane.b32.xlu0 %v670, 104
        %v1834 = vpop.permute.xlu0 %1833
        %1835 = vrot.lane.b32.xlu0 %v745, 104
        %v1836 = vpop.permute.xlu0 %1835
        %1837 = vrot.lane.b32.xlu0 %v750, 104
        %v1838 = vpop.permute.xlu0 %1837
        %1839 = vrot.lane.b32.xlu0 %v755, 104
        %v1840 = vpop.permute.xlu0 %1839
        %v1841 = vsel %vm843, %v1830, 0
        %v1843 = vsel %vm843, %v1832, 0
        %v1845 = vsel %vm843, %v1834, 0
        %v1847 = vsel %vm843, %v1836, 0
        %v1849 = vsel %vm843, %v1838, 0
        %v1851 = vsel %vm843, %v1840, 0
        %1853 = vmatprep.subr.mxu0 0.0
        %1854 = vmatpush1.xpose.msra.mxu0 %v1847
        %1855 = vmatprep.subr.mxu0 0.0
        %1856 = vmatpush1.xpose.msra.mxu0 %v1849
        %1857 = vmatprep.subr.mxu0 0.0
        %1858 = vmatpush1.xpose.msra.mxu0 %v1851
        %1859 = vmatprep.subr.mxu0 0.0
        %1860 = vmatpush1.xpose.msra.mxu0 0.0
        %1861 = vmatprep.subr.mxu0 0.0
        %1862 = vmatpush1.xpose.msra.mxu0 0.0
        %1863 = vmatprep.subr.mxu0 0.0
        %1864 = vmatpush1.xpose.msra.mxu0 0.0
        %1865 = vmatprep.subr.mxu0 0.0
        %1866 = vmatpush1.xpose.msra.mxu0 0.0
        %1867 = vmatprep.subr.mxu0 0.0
        %1868 = vmatpush1.xpose.msra.mxu0 0.0
        %1869 = vmatprep.subr.mxu0 0.0
        %1870 = vmatpush1.xpose.msra.mxu0 0.0
        %1871 = vmatprep.subr.mxu0 0.0
        %1872 = vmatpush1.xpose.msra.mxu0 0.0
        %1873 = vmatprep.subr.mxu0 0.0
        %1874 = vmatpush1.xpose.msra.mxu0 0.0
        %1875 = vmatprep.subr.mxu0 0.0
        %1876 = vmatpush1.xpose.msra.mxu0 0.0
        %1877 = vmatprep.subr.mxu0 0.0
        %1878 = vmatpush1.xpose.msra.mxu0 0.0
        %1879 = vmatprep.subr.mxu0 0.0
        %1880 = vmatpush1.xpose.msra.mxu0 0.0
        %1881 = vmatprep.subr.mxu0 0.0
        %1882 = vmatpush1.xpose.msra.mxu0 0.0
        %1883 = vmatprep.subr.mxu0 0.0
        %1884 = vmatpush1.xpose.msra.mxu0 0.0
        %1885 = vmatprep.subr.mxu0 0.0
        %1886 = vmatpush1.xpose.msra.mxu0 0.0
        %1887 = vmatprep.subr.mxu0 0.0
        %1888 = vmatpush1.xpose.msra.mxu0 0.0
        %1889 = vmatprep.subr.mxu0 0.0
        %1890 = vmatpush1.xpose.msra.mxu0 0.0
        %1891 = vmatprep.subr.mxu0 0.0
        %1892 = vmatpush1.xpose.msra.mxu0 0.0
        %1893 = vmatprep.subr.mxu0 0.0
        %1894 = vmatpush1.xpose.msra.mxu0 0.0
        %1895 = vmatprep.subr.mxu0 0.0
        %1896 = vmatpush1.xpose.msra.mxu0 0.0
        %1897 = vmatprep.subr.mxu0 0.0
        %1898 = vmatpush1.xpose.msra.mxu0 0.0
        %1899 = vmatprep.subr.mxu0 0.0
        %1900 = vmatpush1.xpose.msra.mxu0 0.0
        %1901 = vmatprep.subr.mxu0 0.0
        %1902 = vmatpush1.xpose.msra.mxu0 0.0
        %1903 = vmatprep.subr.mxu0 0.0
        %1904 = vmatpush1.xpose.msra.mxu0 0.0
        %1905 = vmatprep.subr.mxu0 0.0
        %1906 = vmatpush1.xpose.msra.mxu0 0.0
        %1907 = vmatprep.subr.mxu0 0.0
        %1908 = vmatpush1.xpose.msra.mxu0 0.0
        %1909 = vmatprep.subr.mxu0 0.0
        %1910 = vmatpush1.xpose.msra.mxu0 0.0
        %1911 = vmatprep.subr.mxu0 0.0
        %1912 = vmatpush1.xpose.msra.mxu0 0.0
        %1913 = vmatprep.subr.mxu0 0.0
        %1914 = vmatpush1.xpose.msra.mxu0 0.0
        %1915 = vmatprep.subr.mxu0 0.0
        %1916 = vmatpush1.xpose.msra.mxu0 0.0
        %1917 = vmatprep.mubr.f32.mxu0 0.0
        %1918 = vmatmul.mubr.f32.gmra.mrb[0].mxu0 %v1841
        %v1919 = vpop.f32.mrb[0].mxu0
        %v1920 = vadd.f32 0.0, %v1919
        %v1921 = vpop.f32.mrb[0].mxu0
        %1922 = vmatprep.mubr.f32.mxu0 0.0
        %1923 = vmatmul.mubr.f32.gmra.mrb[0].mxu0 %v1843
        %v1924 = vpop.f32.mrb[0].mxu0
        %v1925 = vadd.f32 0.0, %v1924
        %v1926 = vpop.f32.mrb[0].mxu0
        %1927 = vmatprep.mubr.f32.mxu0 0.0
        %1928 = vmatmul.mubr.f32.gmra.mrb[0].mxu0 %v1845
        %v1929 = vpop.f32.mrb[0].mxu0
        %v1930 = vadd.f32 0.0, %v1929
        %v1931 = vpop.f32.mrb[0].mxu0
        %1932 = vdwg.mxu0
        %v1933 = vmul.f32 %v1920, 0.35355338
        %v1934 = vmul.f32 %v1925, 0.35355338
        %v1935 = vmul.f32 %v1930, 0.35355338
        %v1936 = vadd.f32 %v1933, %v518
        %v1937 = vadd.f32 %v1934, %v518
        %v1938 = vadd.f32 %v1935, %v518
        %v1939 = vsel %vm948, %v1936, -inf
        %1940 = vmax.xlane.f32.xlu0 %v1939
        %v1941 = vpop.xlane.xlu0 %1940
        %v1942 = vsel %vm948, %v1937, -inf
        %1943 = vmax.xlane.f32.xlu0 %v1942
        %v1944 = vpop.xlane.xlu0 %1943
        %v1945 = vsel %vm948, %v1938, -inf
        %1946 = vmax.xlane.f32.xlu0 %v1945
        %v1947 = vpop.xlane.xlu0 %1946
        %v1948 = vsub.f32 %v1936, %v1941
        %v1949 = vsub.f32 %v1937, %v1944
        %v1950 = vsub.f32 %v1938, %v1947
        %v1951 = vmul.f32 %v1948, 1.442695
        %v1952 = vpow.pop %v1951
        %v1953 = vmul.f32 %v1949, 1.442695
        %v1954 = vpow.pop %v1953
        %v1955 = vmul.f32 %v1950, 1.442695
        %v1956 = vpow.pop %v1955
        %v1957 = vsel %vm948, %v1952, 0.0
        %1958 = vadd.xlane.f32.xlu0 %v1957
        %v1959 = vpop.xlane.xlu0 %1958
        %v1960 = vsel %vm948, %v1954, 0.0
        %1961 = vadd.xlane.f32.xlu0 %v1960
        %v1962 = vpop.xlane.xlu0 %1961
        %v1963 = vsel %vm948, %v1956, 0.0
        %1964 = vadd.xlane.f32.xlu0 %v1963
        %v1965 = vpop.xlane.xlu0 %1964
        %v1966 = vrcp.pop %v1959
        %v1967 = vrcp.pop %v1962
        %v1968 = vrcp.pop %v1965
        %v1969 = vmul.f32 %v1952, %v1966
        %v1970 = vmul.f32 %v1954, %v1967
        %v1971 = vmul.f32 %v1956, %v1968
        %1972 = vrot.lane.b32.xlu0 %v830, 104
        %v1973 = vpop.permute.xlu0 %1972
        %1974 = vrot.lane.b32.xlu0 %v835, 104
        %v1975 = vpop.permute.xlu0 %1974
        %1976 = vrot.lane.b32.xlu0 %v840, 104
        %v1977 = vpop.permute.xlu0 %1976
        %v1982 = vsel %vm948, %v1969, 0
        %v1985 = vsel %vm948, %v1970, 0
        %v1988 = vsel %vm948, %v1971, 0
        %1990 = vmatprep.subr.mxu0 0.0
        %1991 = vmatpush1.msra.mxu0 %v1973
        %1992 = vmatprep.subr.mxu0 0.0
        %1993 = vmatpush1.msra.mxu0 %v1975
        %1994 = vmatprep.subr.mxu0 0.0
        %1995 = vmatpush1.msra.mxu0 %v1977
        %1996 = vmatprep.subr.mxu0 0.0
        %1997 = vmatpush1.msra.mxu0 0.0
        %1998 = vmatprep.subr.mxu0 0.0
        %1999 = vmatpush1.msra.mxu0 0.0
        %2000 = vmatprep.subr.mxu0 0.0
        %2001 = vmatpush1.msra.mxu0 0.0
        %2002 = vmatprep.subr.mxu0 0.0
        %2003 = vmatpush1.msra.mxu0 0.0
        %2004 = vmatprep.subr.mxu0 0.0
        %2005 = vmatpush1.msra.mxu0 0.0
        %2006 = vmatprep.subr.mxu0 0.0
        %2007 = vmatpush1.msra.mxu0 0.0
        %2008 = vmatprep.subr.mxu0 0.0
        %2009 = vmatpush1.msra.mxu0 0.0
        %2010 = vmatprep.subr.mxu0 0.0
        %2011 = vmatpush1.msra.mxu0 0.0
        %2012 = vmatprep.subr.mxu0 0.0
        %2013 = vmatpush1.msra.mxu0 0.0
        %2014 = vmatprep.subr.mxu0 0.0
        %2015 = vmatpush1.msra.mxu0 0.0
        %2016 = vmatprep.subr.mxu0 0.0
        %2017 = vmatpush1.msra.mxu0 0.0
        %2018 = vmatprep.subr.mxu0 0.0
        %2019 = vmatpush1.msra.mxu0 0.0
        %2020 = vmatprep.subr.mxu0 0.0
        %2021 = vmatpush1.msra.mxu0 0.0
        %2022 = vmatprep.subr.mxu0 0.0
        %2023 = vmatpush1.msra.mxu0 0.0
        %2024 = vmatprep.subr.mxu0 0.0
        %2025 = vmatpush1.msra.mxu0 0.0
        %2026 = vmatprep.subr.mxu0 0.0
        %2027 = vmatpush1.msra.mxu0 0.0
        %2028 = vmatprep.subr.mxu0 0.0
        %2029 = vmatpush1.msra.mxu0 0.0
        %2030 = vmatprep.subr.mxu0 0.0
        %2031 = vmatpush1.msra.mxu0 0.0
        %2032 = vmatprep.subr.mxu0 0.0
        %2033 = vmatpush1.msra.mxu0 0.0
        %2034 = vmatprep.subr.mxu0 0.0
        %2035 = vmatpush1.msra.mxu0 0.0
        %2036 = vmatprep.subr.mxu0 0.0
        %2037 = vmatpush1.msra.mxu0 0.0
        %2038 = vmatprep.subr.mxu0 0.0
        %2039 = vmatpush1.msra.mxu0 0.0
        %2040 = vmatprep.subr.mxu0 0.0
        %2041 = vmatpush1.msra.mxu0 0.0
        %2042 = vmatprep.subr.mxu0 0.0
        %2043 = vmatpush1.msra.mxu0 0.0
        %2044 = vmatprep.subr.mxu0 0.0
        %2045 = vmatpush1.msra.mxu0 0.0
        %2046 = vmatprep.subr.mxu0 0.0
        %2047 = vmatpush1.msra.mxu0 0.0
        %2048 = vmatprep.subr.mxu0 0.0
        %2049 = vmatpush1.msra.mxu0 0.0
        %2050 = vmatprep.subr.mxu0 0.0
        %2051 = vmatpush1.msra.mxu0 0.0
        %2052 = vmatprep.subr.mxu0 0.0
        %2053 = vmatpush1.msra.mxu0 0.0
        %2054 = vmatprep.mubr.f32.mxu0 0.0
        %2055 = vmatmul.mubr.f32.gmra.mrb[0].mxu0 %v1982
        %v2056 = vpop.f32.mrb[0].mxu0
        %v2057 = vadd.f32 0.0, %v2056
        %v2058 = vpop.f32.mrb[0].mxu0
        %2059 = vmatprep.mubr.f32.mxu0 0.0
        %2060 = vmatmul.mubr.f32.gmra.mrb[0].mxu0 %v1985
        %v2061 = vpop.f32.mrb[0].mxu0
        %v2062 = vadd.f32 0.0, %v2061
        %v2063 = vpop.f32.mrb[0].mxu0
        %2064 = vmatprep.mubr.f32.mxu0 0.0
        %2065 = vmatmul.mubr.f32.gmra.mrb[0].mxu0 %v1988
        %v2066 = vpop.f32.mrb[0].mxu0
        %v2067 = vadd.f32 0.0, %v2066
        %v2068 = vpop.f32.mrb[0].mxu0
        %2069 = vdwg.mxu0
        %v2070 = vld [vmem:[%s4 + $0x18] sm:$0xff]
        %v2072 = vsel %vm843, %v2057, 0
        %v2075 = vsel %vm843, %v2062, 0
        %v2078 = vsel %vm843, %v2067, 0
        %2080 = vmatprep.subr.mxu0 0.0
        %2081 = vmatpush1.msra.mxu0 %v2070
        %2082 = vmatprep.subr.mxu0 0.0
        %2083 = vmatpush1.msra.mxu0 0.0
        %2084 = vmatprep.subr.mxu0 0.0
        %2085 = vmatpush1.msra.mxu0 0.0
        %2086 = vmatprep.subr.mxu0 0.0
        %2087 = vmatpush1.msra.mxu0 0.0
        %2088 = vmatprep.subr.mxu0 0.0
        %2089 = vmatpush1.msra.mxu0 0.0
        %2090 = vmatprep.subr.mxu0 0.0
        %2091 = vmatpush1.msra.mxu0 0.0
        %2092 = vmatprep.subr.mxu0 0.0
        %2093 = vmatpush1.msra.mxu0 0.0
        %2094 = vmatprep.subr.mxu0 0.0
        %2095 = vmatpush1.msra.mxu0 0.0
        %2096 = vmatprep.subr.mxu0 0.0
        %2097 = vmatpush1.msra.mxu0 0.0
        %2098 = vmatprep.subr.mxu0 0.0
        %2099 = vmatpush1.msra.mxu0 0.0
        %2100 = vmatprep.subr.mxu0 0.0
        %2101 = vmatpush1.msra.mxu0 0.0
        %2102 = vmatprep.subr.mxu0 0.0
        %2103 = vmatpush1.msra.mxu0 0.0
        %2104 = vmatprep.subr.mxu0 0.0
        %2105 = vmatpush1.msra.mxu0 0.0
        %2106 = vmatprep.subr.mxu0 0.0
        %2107 = vmatpush1.msra.mxu0 0.0
        %2108 = vmatprep.subr.mxu0 0.0
        %2109 = vmatpush1.msra.mxu0 0.0
        %2110 = vmatprep.subr.mxu0 0.0
        %2111 = vmatpush1.msra.mxu0 0.0
        %2112 = vmatprep.subr.mxu0 0.0
        %2113 = vmatpush1.msra.mxu0 0.0
        %2114 = vmatprep.subr.mxu0 0.0
        %2115 = vmatpush1.msra.mxu0 0.0
        %2116 = vmatprep.subr.mxu0 0.0
        %2117 = vmatpush1.msra.mxu0 0.0
        %2118 = vmatprep.subr.mxu0 0.0
        %2119 = vmatpush1.msra.mxu0 0.0
        %2120 = vmatprep.subr.mxu0 0.0
        %2121 = vmatpush1.msra.mxu0 0.0
        %2122 = vmatprep.subr.mxu0 0.0
        %2123 = vmatpush1.msra.mxu0 0.0
        %2124 = vmatprep.subr.mxu0 0.0
        %2125 = vmatpush1.msra.mxu0 0.0
        %2126 = vmatprep.subr.mxu0 0.0
        %2127 = vmatpush1.msra.mxu0 0.0
        %2128 = vmatprep.subr.mxu0 0.0
        %2129 = vmatpush1.msra.mxu0 0.0
        %2130 = vmatprep.subr.mxu0 0.0
        %2131 = vmatpush1.msra.mxu0 0.0
        %2132 = vmatprep.subr.mxu0 0.0
        %2133 = vmatpush1.msra.mxu0 0.0
        %2134 = vmatprep.subr.mxu0 0.0
        %2135 = vmatpush1.msra.mxu0 0.0
        %2136 = vmatprep.subr.mxu0 0.0
        %2137 = vmatpush1.msra.mxu0 0.0
        %2138 = vmatprep.subr.mxu0 0.0
        %2139 = vmatpush1.msra.mxu0 0.0
        %2140 = vmatprep.subr.mxu0 0.0
        %2141 = vmatpush1.msra.mxu0 0.0
        %2142 = vmatprep.subr.mxu0 0.0
        %2143 = vmatpush1.msra.mxu0 0.0
        %2144 = vmatprep.mubr.f32.mxu0 0.0
        %2145 = vmatmul.mubr.f32.gmra.mrb[0].mxu0 %v2072
        %v2146 = vpop.f32.mrb[0].mxu0
        %v2147 = vadd.f32 0.0, %v2146
        %v2148 = vpop.f32.mrb[0].mxu0
        %2149 = vmatprep.mubr.f32.mxu0 0.0
        %2150 = vmatmul.mubr.f32.gmra.mrb[0].mxu0 %v2075
        %v2151 = vpop.f32.mrb[0].mxu0
        %v2152 = vadd.f32 0.0, %v2151
        %v2153 = vpop.f32.mrb[0].mxu0
        %2154 = vmatprep.mubr.f32.mxu0 0.0
        %2155 = vmatmul.mubr.f32.gmra.mrb[0].mxu0 %v2078
        %v2156 = vpop.f32.mrb[0].mxu0
        %v2157 = vadd.f32 0.0, %v2156
        %v2158 = vpop.f32.mrb[0].mxu0
        %2159 = vdwg.mxu0
        %v2160 = vadd.f32 %v1826, %v2147
        %v2161 = vadd.f32 %v1827, %v2152
        %v2162 = vadd.f32 %v1828, %v2157
        %v2163 = vadd.f32 %v502, %v2160
        %v2164 = vadd.f32 %v507, %v2161
        %v2165 = vadd.f32 %v512, %v2162
        %v2166 = vlaneseq
        %v2167 = vshrl.u32 %v2166, 7
        %v2168 = vsub.s32 0, %v2167
        %v2169 = vrot.slane %v523, %v2168
        %v2170 = vadd.f32 %v2163, %v2169
        %v2171 = vadd.f32 %v2164, %v2169
        %v2172 = vadd.f32 %v2165, %v2169
        %v2173 = vsel %vm525, %v2170, 0.0
        %2174 = vadd.xlane.f32.xlu0 %v2173
        %v2175 = vpop.xlane.xlu0 %2174
        %v2176 = vsel %vm525, %v2171, 0.0
        %2177 = vadd.xlane.f32.xlu0 %v2176
        %v2178 = vpop.xlane.xlu0 %2177
        %v2179 = vsel %vm525, %v2172, 0.0
        %2180 = vadd.xlane.f32.xlu0 %v2179
        %v2181 = vpop.xlane.xlu0 %2180
        %v2182 = vmul.f32 %v2175, %v535
        %v2183 = vmul.f32 %v2178, %v535
        %v2184 = vmul.f32 %v2181, %v535
        %v2185 = vsub.f32 %v2170, %v2182
        %v2186 = vsub.f32 %v2171, %v2183
        %v2187 = vsub.f32 %v2172, %v2184
        %v2188 = vmul.f32 %v2185, %v2185
        %v2189 = vmul.f32 %v2186, %v2186
        %v2190 = vmul.f32 %v2187, %v2187
        %v2191 = vsel %vm525, %v2188, 0.0
        %2192 = vadd.xlane.f32.xlu0 %v2191
        %v2193 = vpop.xlane.xlu0 %2192
        %v2194 = vsel %vm525, %v2189, 0.0
        %2195 = vadd.xlane.f32.xlu0 %v2194
        %v2196 = vpop.xlane.xlu0 %2195
        %v2197 = vsel %vm525, %v2190, 0.0
        %2198 = vadd.xlane.f32.xlu0 %v2197
        %v2199 = vpop.xlane.xlu0 %2198
        %v2200 = vmul.f32 %v2193, %v535
        %v2201 = vmul.f32 %v2196, %v535
        %v2202 = vmul.f32 %v2199, %v535
        %v2203 = vadd.f32 %v2200, 1e-05
        %v2204 = vadd.f32 %v2201, 1e-05
        %v2205 = vadd.f32 %v2202, 1e-05
        %v2206 = vrsqrt.pop %v2203
        %v2207 = vrsqrt.pop %v2204
        %v2208 = vrsqrt.pop %v2205
        %v2209 = vmul.f32 %v2185, %v2206
        %v2210 = vmul.f32 %v2186, %v2207
        %v2211 = vmul.f32 %v2187, %v2208
        %v2212 = vlaneseq
        %v2213 = vshrl.u32 %v2212, 7
        %v2214 = vsub.s32 0, %v2213
        %v2215 = vrot.slane %v521, %v2214
        %v2216 = vmul.f32 %v2209, %v2215
        %v2217 = vmul.f32 %v2210, %v2215
        %v2218 = vmul.f32 %v2211, %v2215
        %v2219 = vlaneseq
        %v2220 = vshrl.u32 %v2219, 7
        %v2221 = vsub.s32 0, %v2220
        %v2222 = vrot.slane %v522, %v2221
        %v2223 = vadd.f32 %v2216, %v2222
        %v2224 = vadd.f32 %v2217, %v2222
        %v2225 = vadd.f32 %v2218, %v2222
        %v2226 = vld [vmem:[%s5] sm:$0xff]
        %v2227 = vld [vmem:[%s5 + $0x8] sm:$0xff]
        %v2228 = vld [vmem:[%s5 + $0x10] sm:$0xff]
        %v2229 = vld [vmem:[%s5 + $0x18] sm:$0xff]
        %v2230 = vld [vmem:[%s6] sm:$0x1]
        %v2232 = vlaneseq
        %v2233 = vshrl.u32 %v2232, 7
        %v2234 = vsub.s32 0, %v2233
        %v2235 = vrot.slane %v2230, %v2234
        %v2238 = vsel %vm525, %v2223, 0
        %v2241 = vsel %vm525, %v2224, 0
        %v2244 = vsel %vm525, %v2225, 0
        %2246 = vmatprep.subr.mxu0 0.0
        %2247 = vmatpush1.msra.mxu0 %v2226
        %2248 = vmatprep.subr.mxu0 0.0
        %2249 = vmatpush1.msra.mxu0 %v2227
        %2250 = vmatprep.subr.mxu0 0.0
        %2251 = vmatpush1.msra.mxu0 %v2228
        %2252 = vmatprep.subr.mxu0 0.0
        %2253 = vmatpush1.msra.mxu0 %v2229
        %2254 = vmatprep.subr.mxu0 0.0
        %2255 = vmatpush1.msra.mxu0 0.0
        %2256 = vmatprep.subr.mxu0 0.0
        %2257 = vmatpush1.msra.mxu0 0.0
        %2258 = vmatprep.subr.mxu0 0.0
        %2259 = vmatpush1.msra.mxu0 0.0
        %2260 = vmatprep.subr.mxu0 0.0
        %2261 = vmatpush1.msra.mxu0 0.0
        %2262 = vmatprep.subr.mxu0 0.0
        %2263 = vmatpush1.msra.mxu0 0.0
        %2264 = vmatprep.subr.mxu0 0.0
        %2265 = vmatpush1.msra.mxu0 0.0
        %2266 = vmatprep.subr.mxu0 0.0
        %2267 = vmatpush1.msra.mxu0 0.0
        %2268 = vmatprep.subr.mxu0 0.0
        %2269 = vmatpush1.msra.mxu0 0.0
        %2270 = vmatprep.subr.mxu0 0.0
        %2271 = vmatpush1.msra.mxu0 0.0
        %2272 = vmatprep.subr.mxu0 0.0
        %2273 = vmatpush1.msra.mxu0 0.0
        %2274 = vmatprep.subr.mxu0 0.0
        %2275 = vmatpush1.msra.mxu0 0.0
        %2276 = vmatprep.subr.mxu0 0.0
        %2277 = vmatpush1.msra.mxu0 0.0
        %2278 = vmatprep.subr.mxu0 0.0
        %2279 = vmatpush1.msra.mxu0 0.0
        %2280 = vmatprep.subr.mxu0 0.0
        %2281 = vmatpush1.msra.mxu0 0.0
        %2282 = vmatprep.subr.mxu0 0.0
        %2283 = vmatpush1.msra.mxu0 0.0
        %2284 = vmatprep.subr.mxu0 0.0
        %2285 = vmatpush1.msra.mxu0 0.0
        %2286 = vmatprep.subr.mxu0 0.0
        %2287 = vmatpush1.msra.mxu0 0.0
        %2288 = vmatprep.subr.mxu0 0.0
        %2289 = vmatpush1.msra.mxu0 0.0
        %2290 = vmatprep.subr.mxu0 0.0
        %2291 = vmatpush1.msra.mxu0 0.0
        %2292 = vmatprep.subr.mxu0 0.0
        %2293 = vmatpush1.msra.mxu0 0.0
        %2294 = vmatprep.subr.mxu0 0.0
        %2295 = vmatpush1.msra.mxu0 0.0
        %2296 = vmatprep.subr.mxu0 0.0
        %2297 = vmatpush1.msra.mxu0 0.0
        %2298 = vmatprep.subr.mxu0 0.0
        %2299 = vmatpush1.msra.mxu0 0.0
        %2300 = vmatprep.subr.mxu0 0.0
        %2301 = vmatpush1.msra.mxu0 0.0
        %2302 = vmatprep.subr.mxu0 0.0
        %2303 = vmatpush1.msra.mxu0 0.0
        %2304 = vmatprep.subr.mxu0 0.0
        %2305 = vmatpush1.msra.mxu0 0.0
        %2306 = vmatprep.subr.mxu0 0.0
        %2307 = vmatpush1.msra.mxu0 0.0
        %2308 = vmatprep.subr.mxu0 0.0
        %2309 = vmatpush1.msra.mxu0 0.0
        %2310 = vmatprep.mubr.f32.mxu0 0.0
        %2311 = vmatmul.mubr.f32.gmra.mrb[0].mxu0 %v2238
        %v2312 = vpop.f32.mrb[0].mxu0
        %v2313 = vadd.f32 %v2235, %v2312
        %v2314 = vpop.f32.mrb[0].mxu0
        %2315 = vmatprep.mubr.f32.mxu0 0.0
        %2316 = vmatmul.mubr.f32.gmra.mrb[0].mxu0 %v2241
        %v2317 = vpop.f32.mrb[0].mxu0
        %v2318 = vadd.f32 %v2235, %v2317
        %v2319 = vpop.f32.mrb[0].mxu0
        %2320 = vmatprep.mubr.f32.mxu0 0.0
        %2321 = vmatmul.mubr.f32.gmra.mrb[0].mxu0 %v2244
        %v2322 = vpop.f32.mrb[0].mxu0
        %v2323 = vadd.f32 %v2235, %v2322
        %v2324 = vpop.f32.mrb[0].mxu0
        %2325 = vdwg.mxu0
        %v2326 = vmul.f32 %v2313, %v2313
        %v2327 = vmul.f32 %v2318, %v2318
        %v2328 = vmul.f32 %v2323, %v2323
        %v2329 = vmul.f32 %v2313, %v2326
        %v2330 = vmul.f32 %v2318, %v2327
        %v2331 = vmul.f32 %v2323, %v2328
        %v2332 = vmul.f32 %v2329, 0.044715
        %v2333 = vmul.f32 %v2330, 0.044715
        %v2334 = vmul.f32 %v2331, 0.044715
        %v2335 = vadd.f32 %v2313, %v2332
        %v2336 = vadd.f32 %v2318, %v2333
        %v2337 = vadd.f32 %v2323, %v2334
        %v2338 = vmul.f32 %v2335, 0.7978846
        %v2339 = vmul.f32 %v2336, 0.7978846
        %v2340 = vmul.f32 %v2337, 0.7978846
        %v2341 = vtanh.pop %v2338
        %v2342 = vtanh.pop %v2339
        %v2343 = vtanh.pop %v2340
        %v2344 = vadd.f32 %v2341, 1.0
        %v2345 = vadd.f32 %v2342, 1.0
        %v2346 = vadd.f32 %v2343, 1.0
        %v2347 = vmul.f32 %v2344, 0.5
        %v2348 = vmul.f32 %v2345, 0.5
        %v2349 = vmul.f32 %v2346, 0.5
        %v2350 = vmul.f32 %v2313, %v2347
        %v2351 = vmul.f32 %v2318, %v2348
        %v2352 = vmul.f32 %v2323, %v2349
        %v2353 = vld [vmem:[%s7] sm:$0xff]
        %v2354 = vld [vmem:[%s7 + $0x8] sm:$0xff]
        %v2355 = vld [vmem:[%s7 + $0x10] sm:$0xff]
        %v2356 = vld [vmem:[%s7 + $0x18] sm:$0xff]
        %v2357 = vld [vmem:[%s7 + $0x20] sm:$0xff]
        %v2358 = vld [vmem:[%s7 + $0x28] sm:$0xff]
        %v2359 = vld [vmem:[%s7 + $0x30] sm:$0xff]
        %v2360 = vld [vmem:[%s7 + $0x38] sm:$0xff]
        %v2362 = vsel %vm425, %v2350, 0
        %v2365 = vsel %vm425, %v2351, 0
        %v2368 = vsel %vm425, %v2352, 0
        %2370 = vmatprep.subr.mxu0 0.0
        %2371 = vmatpush1.msra.mxu0 %v2353
        %2372 = vmatprep.subr.mxu0 0.0
        %2373 = vmatpush1.msra.mxu0 %v2354
        %2374 = vmatprep.subr.mxu0 0.0
        %2375 = vmatpush1.msra.mxu0 %v2355
        %2376 = vmatprep.subr.mxu0 0.0
        %2377 = vmatpush1.msra.mxu0 %v2356
        %2378 = vmatprep.subr.mxu0 0.0
        %2379 = vmatpush1.msra.mxu0 %v2357
        %2380 = vmatprep.subr.mxu0 0.0
        %2381 = vmatpush1.msra.mxu0 %v2358
        %2382 = vmatprep.subr.mxu0 0.0
        %2383 = vmatpush1.msra.mxu0 %v2359
        %2384 = vmatprep.subr.mxu0 0.0
        %2385 = vmatpush1.msra.mxu0 %v2360
        %2386 = vmatprep.subr.mxu0 0.0
        %2387 = vmatpush1.msra.mxu0 0.0
        %2388 = vmatprep.subr.mxu0 0.0
        %2389 = vmatpush1.msra.mxu0 0.0
        %2390 = vmatprep.subr.mxu0 0.0
        %2391 = vmatpush1.msra.mxu0 0.0
        %2392 = vmatprep.subr.mxu0 0.0
        %2393 = vmatpush1.msra.mxu0 0.0
        %2394 = vmatprep.subr.mxu0 0.0
        %2395 = vmatpush1.msra.mxu0 0.0
        %2396 = vmatprep.subr.mxu0 0.0
        %2397 = vmatpush1.msra.mxu0 0.0
        %2398 = vmatprep.subr.mxu0 0.0
        %2399 = vmatpush1.msra.mxu0 0.0
        %2400 = vmatprep.subr.mxu0 0.0
        %2401 = vmatpush1.msra.mxu0 0.0
        %2402 = vmatprep.subr.mxu0 0.0
        %2403 = vmatpush1.msra.mxu0 0.0
        %2404 = vmatprep.subr.mxu0 0.0
        %2405 = vmatpush1.msra.mxu0 0.0
        %2406 = vmatprep.subr.mxu0 0.0
        %2407 = vmatpush1.msra.mxu0 0.0
        %2408 = vmatprep.subr.mxu0 0.0
        %2409 = vmatpush1.msra.mxu0 0.0
        %2410 = vmatprep.subr.mxu0 0.0
        %2411 = vmatpush1.msra.mxu0 0.0
        %2412 = vmatprep.subr.mxu0 0.0
        %2413 = vmatpush1.msra.mxu0 0.0
        %2414 = vmatprep.subr.mxu0 0.0
        %2415 = vmatpush1.msra.mxu0 0.0
        %2416 = vmatprep.subr.mxu0 0.0
        %2417 = vmatpush1.msra.mxu0 0.0
        %2418 = vmatprep.subr.mxu0 0.0
        %2419 = vmatpush1.msra.mxu0 0.0
        %2420 = vmatprep.subr.mxu0 0.0
        %2421 = vmatpush1.msra.mxu0 0.0
        %2422 = vmatprep.subr.mxu0 0.0
        %2423 = vmatpush1.msra.mxu0 0.0
        %2424 = vmatprep.subr.mxu0 0.0
        %2425 = vmatpush1.msra.mxu0 0.0
        %2426 = vmatprep.subr.mxu0 0.0
        %2427 = vmatpush1.msra.mxu0 0.0
        %2428 = vmatprep.subr.mxu0 0.0
        %2429 = vmatpush1.msra.mxu0 0.0
        %2430 = vmatprep.subr.mxu0 0.0
        %2431 = vmatpush1.msra.mxu0 0.0
        %2432 = vmatprep.subr.mxu0 0.0
        %2433 = vmatpush1.msra.mxu0 0.0
        %2434 = vmatprep.mubr.f32.mxu0 0.0
        %2435 = vmatmul.mubr.f32.gmra.mrb[0].mxu0 %v2362
        %v2436 = vpop.f32.mrb[0].mxu0
        %v2437 = vadd.f32 0.0, %v2436
        %v2438 = vpop.f32.mrb[0].mxu0
        %2439 = vmatprep.mubr.f32.mxu0 0.0
        %2440 = vmatmul.mubr.f32.gmra.mrb[0].mxu0 %v2365
        %v2441 = vpop.f32.mrb[0].mxu0
        %v2442 = vadd.f32 0.0, %v2441
        %v2443 = vpop.f32.mrb[0].mxu0
        %2444 = vmatprep.mubr.f32.mxu0 0.0
        %2445 = vmatmul.mubr.f32.gmra.mrb[0].mxu0 %v2368
        %v2446 = vpop.f32.mrb[0].mxu0
        %v2447 = vadd.f32 0.0, %v2446
        %v2448 = vpop.f32.mrb[0].mxu0
        %2449 = vdwg.mxu0
        %v2450 = vadd.f32 %v2170, %v2437
        %v2451 = vadd.f32 %v2171, %v2442
        %v2452 = vadd.f32 %v2172, %v2447
        %v2453 = vlaneseq
        %v2454 = vshrl.u32 %v2453, 7
        %v2455 = vsub.s32 0, %v2454
        %v2456 = vrot.slane %v524, %v2455
        %v2457 = vadd.f32 %v2450, %v2456
        %v2458 = vadd.f32 %v2451, %v2456
        %v2459 = vadd.f32 %v2452, %v2456
        %s2460 = scalar_lea.vmem %s8, 8
        %v2461 = vld [vmem:[%s2460] sm:$0x1]
        %v2462 = vld [vmem:[%s2460 + $0x1] sm:$0x1]
        %v2463 = vld [vmem:[%s2460 + $0x2] sm:$0x1]
        %v2464 = vld [vmem:[%s2460 + $0x3] sm:$0x1]
        %v2465 = vld [vmem:[%s2460 + $0x4] sm:$0x1]
        %v2466 = vld [vmem:[%s2460 + $0x5] sm:$0x1]
        %v2467 = vsel %vm525, %v2457, 0.0
        %2468 = vadd.xlane.f32.xlu0 %v2467
        %v2469 = vpop.xlane.xlu0 %2468
        %v2470 = vsel %vm525, %v2458, 0.0
        %2471 = vadd.xlane.f32.xlu0 %v2470
        %v2472 = vpop.xlane.xlu0 %2471
        %v2473 = vsel %vm525, %v2459, 0.0
        %2474 = vadd.xlane.f32.xlu0 %v2473
        %v2475 = vpop.xlane.xlu0 %2474
        %v2476 = vmul.f32 %v2469, %v535
        %v2477 = vmul.f32 %v2472, %v535
        %v2478 = vmul.f32 %v2475, %v535
        %v2479 = vsub.f32 %v2457, %v2476
        %v2480 = vsub.f32 %v2458, %v2477
        %v2481 = vsub.f32 %v2459, %v2478
        %v2482 = vmul.f32 %v2479, %v2479
        %v2483 = vmul.f32 %v2480, %v2480
        %v2484 = vmul.f32 %v2481, %v2481
        %v2485 = vsel %vm525, %v2482, 0.0
        %2486 = vadd.xlane.f32.xlu0 %v2485
        %v2487 = vpop.xlane.xlu0 %2486
        %v2488 = vsel %vm525, %v2483, 0.0
        %2489 = vadd.xlane.f32.xlu0 %v2488
        %v2490 = vpop.xlane.xlu0 %2489
        %v2491 = vsel %vm525, %v2484, 0.0
        %2492 = vadd.xlane.f32.xlu0 %v2491
        %v2493 = vpop.xlane.xlu0 %2492
        %v2494 = vmul.f32 %v2487, %v535
        %v2495 = vmul.f32 %v2490, %v535
        %v2496 = vmul.f32 %v2493, %v535
        %v2497 = vadd.f32 %v2494, 1e-05
        %v2498 = vadd.f32 %v2495, 1e-05
        %v2499 = vadd.f32 %v2496, 1e-05
        %v2500 = vrsqrt.pop %v2497
        %v2501 = vrsqrt.pop %v2498
        %v2502 = vrsqrt.pop %v2499
        %v2503 = vmul.f32 %v2479, %v2500
        %v2504 = vmul.f32 %v2480, %v2501
        %v2505 = vmul.f32 %v2481, %v2502
        %v2506 = vlaneseq
        %v2507 = vshrl.u32 %v2506, 7
        %v2508 = vsub.s32 0, %v2507
        %v2509 = vrot.slane %v2461, %v2508
        %v2510 = vmul.f32 %v2503, %v2509
        %v2511 = vmul.f32 %v2504, %v2509
        %v2512 = vmul.f32 %v2505, %v2509
        %v2513 = vlaneseq
        %v2514 = vshrl.u32 %v2513, 7
        %v2515 = vsub.s32 0, %v2514
        %v2516 = vrot.slane %v2462, %v2515
        %v2517 = vadd.f32 %v2510, %v2516
        %v2518 = vadd.f32 %v2511, %v2516
        %v2519 = vadd.f32 %v2512, %v2516
        %s2520 = scalar_lea.vmem %s3, 96
        %v2521 = vld [vmem:[%s2520] sm:$0xff]
        %v2522 = vld [vmem:[%s2520 + $0x8] sm:$0xff]
        %v2523 = vld [vmem:[%s2520 + $0x10] sm:$0xff]
        %v2524 = vld [vmem:[%s2520 + $0x18] sm:$0xff]
        %v2526 = vsel %vm525, %v2517, 0
        %v2529 = vsel %vm525, %v2518, 0
        %v2532 = vsel %vm525, %v2519, 0
        %2534 = vmatprep.subr.mxu0 0.0
        %2535 = vmatpush1.msra.mxu0 %v2521
        %2536 = vmatprep.subr.mxu0 0.0
        %2537 = vmatpush1.msra.mxu0 %v2522
        %2538 = vmatprep.subr.mxu0 0.0
        %2539 = vmatpush1.msra.mxu0 %v2523
        %2540 = vmatprep.subr.mxu0 0.0
        %2541 = vmatpush1.msra.mxu0 %v2524
        %2542 = vmatprep.subr.mxu0 0.0
        %2543 = vmatpush1.msra.mxu0 0.0
        %2544 = vmatprep.subr.mxu0 0.0
        %2545 = vmatpush1.msra.mxu0 0.0
        %2546 = vmatprep.subr.mxu0 0.0
        %2547 = vmatpush1.msra.mxu0 0.0
        %2548 = vmatprep.subr.mxu0 0.0
        %2549 = vmatpush1.msra.mxu0 0.0
        %2550 = vmatprep.subr.mxu0 0.0
        %2551 = vmatpush1.msra.mxu0 0.0
        %2552 = vmatprep.subr.mxu0 0.0
        %2553 = vmatpush1.msra.mxu0 0.0
        %2554 = vmatprep.subr.mxu0 0.0
        %2555 = vmatpush1.msra.mxu0 0.0
        %2556 = vmatprep.subr.mxu0 0.0
        %2557 = vmatpush1.msra.mxu0 0.0
        %2558 = vmatprep.subr.mxu0 0.0
        %2559 = vmatpush1.msra.mxu0 0.0
        %2560 = vmatprep.subr.mxu0 0.0
        %2561 = vmatpush1.msra.mxu0 0.0
        %2562 = vmatprep.subr.mxu0 0.0
        %2563 = vmatpush1.msra.mxu0 0.0
        %2564 = vmatprep.subr.mxu0 0.0
        %2565 = vmatpush1.msra.mxu0 0.0
        %2566 = vmatprep.subr.mxu0 0.0
        %2567 = vmatpush1.msra.mxu0 0.0
        %2568 = vmatprep.subr.mxu0 0.0
        %2569 = vmatpush1.msra.mxu0 0.0
        %2570 = vmatprep.subr.mxu0 0.0
        %2571 = vmatpush1.msra.mxu0 0.0
        %2572 = vmatprep.subr.mxu0 0.0
        %2573 = vmatpush1.msra.mxu0 0.0
        %2574 = vmatprep.subr.mxu0 0.0
        %2575 = vmatpush1.msra.mxu0 0.0
        %2576 = vmatprep.subr.mxu0 0.0
        %2577 = vmatpush1.msra.mxu0 0.0
        %2578 = vmatprep.subr.mxu0 0.0
        %2579 = vmatpush1.msra.mxu0 0.0
        %2580 = vmatprep.subr.mxu0 0.0
        %2581 = vmatpush1.msra.mxu0 0.0
        %2582 = vmatprep.subr.mxu0 0.0
        %2583 = vmatpush1.msra.mxu0 0.0
        %2584 = vmatprep.subr.mxu0 0.0
        %2585 = vmatpush1.msra.mxu0 0.0
        %2586 = vmatprep.subr.mxu0 0.0
        %2587 = vmatpush1.msra.mxu0 0.0
        %2588 = vmatprep.subr.mxu0 0.0
        %2589 = vmatpush1.msra.mxu0 0.0
        %2590 = vmatprep.subr.mxu0 0.0
        %2591 = vmatpush1.msra.mxu0 0.0
        %2592 = vmatprep.subr.mxu0 0.0
        %2593 = vmatpush1.msra.mxu0 0.0
        %2594 = vmatprep.subr.mxu0 0.0
        %2595 = vmatpush1.msra.mxu0 0.0
        %2596 = vmatprep.subr.mxu0 0.0
        %2597 = vmatpush1.msra.mxu0 0.0
        %2598 = vmatprep.mubr.f32.mxu0 0.0
        %2599 = vmatmul.mubr.f32.gmra.mrb[0].mxu0 %v2526
        %v2600 = vpop.f32.mrb[0].mxu0
        %v2601 = vadd.f32 0.0, %v2600
        %v2602 = vpop.f32.mrb[0].mxu0
        %2603 = vmatprep.mubr.f32.mxu0 0.0
        %2604 = vmatmul.mubr.f32.gmra.mrb[0].mxu0 %v2529
        %v2605 = vpop.f32.mrb[0].mxu0
        %v2606 = vadd.f32 0.0, %v2605
        %v2607 = vpop.f32.mrb[0].mxu0
        %2608 = vmatprep.mubr.f32.mxu0 0.0
        %2609 = vmatmul.mubr.f32.gmra.mrb[0].mxu0 %v2532
        %v2610 = vpop.f32.mrb[0].mxu0
        %v2611 = vadd.f32 0.0, %v2610
        %v2612 = vpop.f32.mrb[0].mxu0
        %2613 = vdwg.mxu0
        %s2614 = scalar_lea.vmem %s3, 128
        %v2615 = vld [vmem:[%s2614] sm:$0xff]
        %v2616 = vld [vmem:[%s2614 + $0x8] sm:$0xff]
        %v2617 = vld [vmem:[%s2614 + $0x10] sm:$0xff]
        %v2618 = vld [vmem:[%s2614 + $0x18] sm:$0xff]
        %2619 = vmatprep.subr.mxu0 0.0
        %2620 = vmatpush1.msra.mxu0 %v2615
        %2621 = vmatprep.subr.mxu0 0.0
        %2622 = vmatpush1.msra.mxu0 %v2616
        %2623 = vmatprep.subr.mxu0 0.0
        %2624 = vmatpush1.msra.mxu0 %v2617
        %2625 = vmatprep.subr.mxu0 0.0
        %2626 = vmatpush1.msra.mxu0 %v2618
        %2627 = vmatprep.subr.mxu0 0.0
        %2628 = vmatpush1.msra.mxu0 0.0
        %2629 = vmatprep.subr.mxu0 0.0
        %2630 = vmatpush1.msra.mxu0 0.0
        %2631 = vmatprep.subr.mxu0 0.0
        %2632 = vmatpush1.msra.mxu0 0.0
        %2633 = vmatprep.subr.mxu0 0.0
        %2634 = vmatpush1.msra.mxu0 0.0
        %2635 = vmatprep.subr.mxu0 0.0
        %2636 = vmatpush1.msra.mxu0 0.0
        %2637 = vmatprep.subr.mxu0 0.0
        %2638 = vmatpush1.msra.mxu0 0.0
        %2639 = vmatprep.subr.mxu0 0.0
        %2640 = vmatpush1.msra.mxu0 0.0
        %2641 = vmatprep.subr.mxu0 0.0
        %2642 = vmatpush1.msra.mxu0 0.0
        %2643 = vmatprep.subr.mxu0 0.0
        %2644 = vmatpush1.msra.mxu0 0.0
        %2645 = vmatprep.subr.mxu0 0.0
        %2646 = vmatpush1.msra.mxu0 0.0
        %2647 = vmatprep.subr.mxu0 0.0
        %2648 = vmatpush1.msra.mxu0 0.0
        %2649 = vmatprep.subr.mxu0 0.0
        %2650 = vmatpush1.msra.mxu0 0.0
        %2651 = vmatprep.subr.mxu0 0.0
        %2652 = vmatpush1.msra.mxu0 0.0
        %2653 = vmatprep.subr.mxu0 0.0
        %2654 = vmatpush1.msra.mxu0 0.0
        %2655 = vmatprep.subr.mxu0 0.0
        %2656 = vmatpush1.msra.mxu0 0.0
        %2657 = vmatprep.subr.mxu0 0.0
        %2658 = vmatpush1.msra.mxu0 0.0
        %2659 = vmatprep.subr.mxu0 0.0
        %2660 = vmatpush1.msra.mxu0 0.0
        %2661 = vmatprep.subr.mxu0 0.0
        %2662 = vmatpush1.msra.mxu0 0.0
        %2663 = vmatprep.subr.mxu0 0.0
        %2664 = vmatpush1.msra.mxu0 0.0
        %2665 = vmatprep.subr.mxu0 0.0
        %2666 = vmatpush1.msra.mxu0 0.0
        %2667 = vmatprep.subr.mxu0 0.0
        %2668 = vmatpush1.msra.mxu0 0.0
        %2669 = vmatprep.subr.mxu0 0.0
        %2670 = vmatpush1.msra.mxu0 0.0
        %2671 = vmatprep.subr.mxu0 0.0
        %2672 = vmatpush1.msra.mxu0 0.0
        %2673 = vmatprep.subr.mxu0 0.0
        %2674 = vmatpush1.msra.mxu0 0.0
        %2675 = vmatprep.subr.mxu0 0.0
        %2676 = vmatpush1.msra.mxu0 0.0
        %2677 = vmatprep.subr.mxu0 0.0
        %2678 = vmatpush1.msra.mxu0 0.0
        %2679 = vmatprep.subr.mxu0 0.0
        %2680 = vmatpush1.msra.mxu0 0.0
        %2681 = vmatprep.subr.mxu0 0.0
        %2682 = vmatpush1.msra.mxu0 0.0
        %2683 = vmatprep.mubr.f32.mxu0 0.0
        %2684 = vmatmul.mubr.f32.gmra.mrb[0].mxu0 %v2526
        %v2685 = vpop.f32.mrb[0].mxu0
        %v2686 = vadd.f32 0.0, %v2685
        %v2687 = vpop.f32.mrb[0].mxu0
        %2688 = vmatprep.mubr.f32.mxu0 0.0
        %2689 = vmatmul.mubr.f32.gmra.mrb[0].mxu0 %v2529
        %v2690 = vpop.f32.mrb[0].mxu0
        %v2691 = vadd.f32 0.0, %v2690
        %v2692 = vpop.f32.mrb[0].mxu0
        %2693 = vmatprep.mubr.f32.mxu0 0.0
        %2694 = vmatmul.mubr.f32.gmra.mrb[0].mxu0 %v2532
        %v2695 = vpop.f32.mrb[0].mxu0
        %v2696 = vadd.f32 0.0, %v2695
        %v2697 = vpop.f32.mrb[0].mxu0
        %2698 = vdwg.mxu0
        %s2699 = scalar_lea.vmem %s3, 160
        %v2700 = vld [vmem:[%s2699] sm:$0xff]
        %v2701 = vld [vmem:[%s2699 + $0x8] sm:$0xff]
        %v2702 = vld [vmem:[%s2699 + $0x10] sm:$0xff]
        %v2703 = vld [vmem:[%s2699 + $0x18] sm:$0xff]
        %2704 = vmatprep.subr.mxu0 0.0
        %2705 = vmatpush1.msra.mxu0 %v2700
        %2706 = vmatprep.subr.mxu0 0.0
        %2707 = vmatpush1.msra.mxu0 %v2701
        %2708 = vmatprep.subr.mxu0 0.0
        %2709 = vmatpush1.msra.mxu0 %v2702
        %2710 = vmatprep.subr.mxu0 0.0
        %2711 = vmatpush1.msra.mxu0 %v2703
        %2712 = vmatprep.subr.mxu0 0.0
        %2713 = vmatpush1.msra.mxu0 0.0
        %2714 = vmatprep.subr.mxu0 0.0
        %2715 = vmatpush1.msra.mxu0 0.0
        %2716 = vmatprep.subr.mxu0 0.0
        %2717 = vmatpush1.msra.mxu0 0.0
        %2718 = vmatprep.subr.mxu0 0.0
        %2719 = vmatpush1.msra.mxu0 0.0
        %2720 = vmatprep.subr.mxu0 0.0
        %2721 = vmatpush1.msra.mxu0 0.0
        %2722 = vmatprep.subr.mxu0 0.0
        %2723 = vmatpush1.msra.mxu0 0.0
        %2724 = vmatprep.subr.mxu0 0.0
        %2725 = vmatpush1.msra.mxu0 0.0
        %2726 = vmatprep.subr.mxu0 0.0
        %2727 = vmatpush1.msra.mxu0 0.0
        %2728 = vmatprep.subr.mxu0 0.0
        %2729 = vmatpush1.msra.mxu0 0.0
        %2730 = vmatprep.subr.mxu0 0.0
        %2731 = vmatpush1.msra.mxu0 0.0
        %2732 = vmatprep.subr.mxu0 0.0
        %2733 = vmatpush1.msra.mxu0 0.0
        %2734 = vmatprep.subr.mxu0 0.0
        %2735 = vmatpush1.msra.mxu0 0.0
        %2736 = vmatprep.subr.mxu0 0.0
        %2737 = vmatpush1.msra.mxu0 0.0
        %2738 = vmatprep.subr.mxu0 0.0
        %2739 = vmatpush1.msra.mxu0 0.0
        %2740 = vmatprep.subr.mxu0 0.0
        %2741 = vmatpush1.msra.mxu0 0.0
        %2742 = vmatprep.subr.mxu0 0.0
        %2743 = vmatpush1.msra.mxu0 0.0
        %2744 = vmatprep.subr.mxu0 0.0
        %2745 = vmatpush1.msra.mxu0 0.0
        %2746 = vmatprep.subr.mxu0 0.0
        %2747 = vmatpush1.msra.mxu0 0.0
        %2748 = vmatprep.subr.mxu0 0.0
        %2749 = vmatpush1.msra.mxu0 0.0
        %2750 = vmatprep.subr.mxu0 0.0
        %2751 = vmatpush1.msra.mxu0 0.0
        %2752 = vmatprep.subr.mxu0 0.0
        %2753 = vmatpush1.msra.mxu0 0.0
        %2754 = vmatprep.subr.mxu0 0.0
        %2755 = vmatpush1.msra.mxu0 0.0
        %2756 = vmatprep.subr.mxu0 0.0
        %2757 = vmatpush1.msra.mxu0 0.0
        %2758 = vmatprep.subr.mxu0 0.0
        %2759 = vmatpush1.msra.mxu0 0.0
        %2760 = vmatprep.subr.mxu0 0.0
        %2761 = vmatpush1.msra.mxu0 0.0
        %2762 = vmatprep.subr.mxu0 0.0
        %2763 = vmatpush1.msra.mxu0 0.0
        %2764 = vmatprep.subr.mxu0 0.0
        %2765 = vmatpush1.msra.mxu0 0.0
        %2766 = vmatprep.subr.mxu0 0.0
        %2767 = vmatpush1.msra.mxu0 0.0
        %2768 = vmatprep.mubr.f32.mxu0 0.0
        %2769 = vmatmul.mubr.f32.gmra.mrb[0].mxu0 %v2526
        %v2770 = vpop.f32.mrb[0].mxu0
        %v2771 = vadd.f32 0.0, %v2770
        %v2772 = vpop.f32.mrb[0].mxu0
        %2773 = vmatprep.mubr.f32.mxu0 0.0
        %2774 = vmatmul.mubr.f32.gmra.mrb[0].mxu0 %v2529
        %v2775 = vpop.f32.mrb[0].mxu0
        %v2776 = vadd.f32 0.0, %v2775
        %v2777 = vpop.f32.mrb[0].mxu0
        %2778 = vmatprep.mubr.f32.mxu0 0.0
        %2779 = vmatmul.mubr.f32.gmra.mrb[0].mxu0 %v2532
        %v2780 = vpop.f32.mrb[0].mxu0
        %v2781 = vadd.f32 0.0, %v2780
        %v2782 = vpop.f32.mrb[0].mxu0
        %2783 = vdwg.mxu0
        %v2785 = vsel %vm843, %v2601, 0
        %v2788 = vsel %vm843, %v2606, 0
        %v2791 = vsel %vm843, %v2611, 0
        %v2794 = vsel %vm843, %v2686, 0
        %v2797 = vsel %vm843, %v2691, 0
        %v2800 = vsel %vm843, %v2696, 0
        %2802 = vmatprep.subr.mxu0 0.0
        %2803 = vmatpush1.xpose.msra.mxu0 %v2794
        %2804 = vmatprep.subr.mxu0 0.0
        %2805 = vmatpush1.xpose.msra.mxu0 %v2797
        %2806 = vmatprep.subr.mxu0 0.0
        %2807 = vmatpush1.xpose.msra.mxu0 %v2800
        %2808 = vmatprep.subr.mxu0 0.0
        %2809 = vmatpush1.xpose.msra.mxu0 0.0
        %2810 = vmatprep.subr.mxu0 0.0
        %2811 = vmatpush1.xpose.msra.mxu0 0.0
        %2812 = vmatprep.subr.mxu0 0.0
        %2813 = vmatpush1.xpose.msra.mxu0 0.0
        %2814 = vmatprep.subr.mxu0 0.0
        %2815 = vmatpush1.xpose.msra.mxu0 0.0
        %2816 = vmatprep.subr.mxu0 0.0
        %2817 = vmatpush1.xpose.msra.mxu0 0.0
        %2818 = vmatprep.subr.mxu0 0.0
        %2819 = vmatpush1.xpose.msra.mxu0 0.0
        %2820 = vmatprep.subr.mxu0 0.0
        %2821 = vmatpush1.xpose.msra.mxu0 0.0
        %2822 = vmatprep.subr.mxu0 0.0
        %2823 = vmatpush1.xpose.msra.mxu0 0.0
        %2824 = vmatprep.subr.mxu0 0.0
        %2825 = vmatpush1.xpose.msra.mxu0 0.0
        %2826 = vmatprep.subr.mxu0 0.0
        %2827 = vmatpush1.xpose.msra.mxu0 0.0
        %2828 = vmatprep.subr.mxu0 0.0
        %2829 = vmatpush1.xpose.msra.mxu0 0.0
        %2830 = vmatprep.subr.mxu0 0.0
        %2831 = vmatpush1.xpose.msra.mxu0 0.0
        %2832 = vmatprep.subr.mxu0 0.0
        %2833 = vmatpush1.xpose.msra.mxu0 0.0
        %2834 = vmatprep.subr.mxu0 0.0
        %2835 = vmatpush1.xpose.msra.mxu0 0.0
        %2836 = vmatprep.subr.mxu0 0.0
        %2837 = vmatpush1.xpose.msra.mxu0 0.0
        %2838 = vmatprep.subr.mxu0 0.0
        %2839 = vmatpush1.xpose.msra.mxu0 0.0
        %2840 = vmatprep.subr.mxu0 0.0
        %2841 = vmatpush1.xpose.msra.mxu0 0.0
        %2842 = vmatprep.subr.mxu0 0.0
        %2843 = vmatpush1.xpose.msra.mxu0 0.0
        %2844 = vmatprep.subr.mxu0 0.0
        %2845 = vmatpush1.xpose.msra.mxu0 0.0
        %2846 = vmatprep.subr.mxu0 0.0
        %2847 = vmatpush1.xpose.msra.mxu0 0.0
        %2848 = vmatprep.subr.mxu0 0.0
        %2849 = vmatpush1.xpose.msra.mxu0 0.0
        %2850 = vmatprep.subr.mxu0 0.0
        %2851 = vmatpush1.xpose.msra.mxu0 0.0
        %2852 = vmatprep.subr.mxu0 0.0
        %2853 = vmatpush1.xpose.msra.mxu0 0.0
        %2854 = vmatprep.subr.mxu0 0.0
        %2855 = vmatpush1.xpose.msra.mxu0 0.0
        %2856 = vmatprep.subr.mxu0 0.0
        %2857 = vmatpush1.xpose.msra.mxu0 0.0
        %2858 = vmatprep.subr.mxu0 0.0
        %2859 = vmatpush1.xpose.msra.mxu0 0.0
        %2860 = vmatprep.subr.mxu0 0.0
        %2861 = vmatpush1.xpose.msra.mxu0 0.0
        %2862 = vmatprep.subr.mxu0 0.0
        %2863 = vmatpush1.xpose.msra.mxu0 0.0
        %2864 = vmatprep.subr.mxu0 0.0
        %2865 = vmatpush1.xpose.msra.mxu0 0.0
        %2866 = vmatprep.mubr.f32.mxu0 0.0
        %2867 = vmatmul.mubr.f32.gmra.mrb[0].mxu0 %v2785
        %v2868 = vpop.f32.mrb[0].mxu0
        %v2869 = vadd.f32 0.0, %v2868
        %v2870 = vpop.f32.mrb[0].mxu0
        %2871 = vmatprep.mubr.f32.mxu0 0.0
        %2872 = vmatmul.mubr.f32.gmra.mrb[0].mxu0 %v2788
        %v2873 = vpop.f32.mrb[0].mxu0
        %v2874 = vadd.f32 0.0, %v2873
        %v2875 = vpop.f32.mrb[0].mxu0
        %2876 = vmatprep.mubr.f32.mxu0 0.0
        %2877 = vmatmul.mubr.f32.gmra.mrb[0].mxu0 %v2791
        %v2878 = vpop.f32.mrb[0].mxu0
        %v2879 = vadd.f32 0.0, %v2878
        %v2880 = vpop.f32.mrb[0].mxu0
        %2881 = vdwg.mxu0
        %v2882 = vmul.f32 %v2869, 0.35355338
        %v2883 = vmul.f32 %v2874, 0.35355338
        %v2884 = vmul.f32 %v2879, 0.35355338
        %v2885 = vadd.f32 %v2882, %v518
        %v2886 = vadd.f32 %v2883, %v518
        %v2887 = vadd.f32 %v2884, %v518
        %v2888 = vsel %vm948, %v2885, -inf
        %2889 = vmax.xlane.f32.xlu0 %v2888
        %v2890 = vpop.xlane.xlu0 %2889
        %v2891 = vsel %vm948, %v2886, -inf
        %2892 = vmax.xlane.f32.xlu0 %v2891
        %v2893 = vpop.xlane.xlu0 %2892
        %v2894 = vsel %vm948, %v2887, -inf
        %2895 = vmax.xlane.f32.xlu0 %v2894
        %v2896 = vpop.xlane.xlu0 %2895
        %v2897 = vsub.f32 %v2885, %v2890
        %v2898 = vsub.f32 %v2886, %v2893
        %v2899 = vsub.f32 %v2887, %v2896
        %v2900 = vmul.f32 %v2897, 1.442695
        %v2901 = vpow.pop %v2900
        %v2902 = vmul.f32 %v2898, 1.442695
        %v2903 = vpow.pop %v2902
        %v2904 = vmul.f32 %v2899, 1.442695
        %v2905 = vpow.pop %v2904
        %v2906 = vsel %vm948, %v2901, 0.0
        %2907 = vadd.xlane.f32.xlu0 %v2906
        %v2908 = vpop.xlane.xlu0 %2907
        %v2909 = vsel %vm948, %v2903, 0.0
        %2910 = vadd.xlane.f32.xlu0 %v2909
        %v2911 = vpop.xlane.xlu0 %2910
        %v2912 = vsel %vm948, %v2905, 0.0
        %2913 = vadd.xlane.f32.xlu0 %v2912
        %v2914 = vpop.xlane.xlu0 %2913
        %v2915 = vrcp.pop %v2908
        %v2916 = vrcp.pop %v2911
        %v2917 = vrcp.pop %v2914
        %v2918 = vmul.f32 %v2901, %v2915
        %v2919 = vmul.f32 %v2903, %v2916
        %v2920 = vmul.f32 %v2905, %v2917
        %v2922 = vsel %vm948, %v2918, 0
        %v2925 = vsel %vm948, %v2919, 0
        %v2928 = vsel %vm948, %v2920, 0
        %2930 = vmatprep.subr.mxu0 0.0
        %2931 = vmatpush1.msra.mxu0 %v2771
        %2932 = vmatprep.subr.mxu0 0.0
        %2933 = vmatpush1.msra.mxu0 %v2776
        %2934 = vmatprep.subr.mxu0 0.0
        %2935 = vmatpush1.msra.mxu0 %v2781
        %2936 = vmatprep.subr.mxu0 0.0
        %2937 = vmatpush1.msra.mxu0 0.0
        %2938 = vmatprep.subr.mxu0 0.0
        %2939 = vmatpush1.msra.mxu0 0.0
        %2940 = vmatprep.subr.mxu0 0.0
        %2941 = vmatpush1.msra.mxu0 0.0
        %2942 = vmatprep.subr.mxu0 0.0
        %2943 = vmatpush1.msra.mxu0 0.0
        %2944 = vmatprep.subr.mxu0 0.0
        %2945 = vmatpush1.msra.mxu0 0.0
        %2946 = vmatprep.subr.mxu0 0.0
        %2947 = vmatpush1.msra.mxu0 0.0
        %2948 = vmatprep.subr.mxu0 0.0
        %2949 = vmatpush1.msra.mxu0 0.0
        %2950 = vmatprep.subr.mxu0 0.0
        %2951 = vmatpush1.msra.mxu0 0.0
        %2952 = vmatprep.subr.mxu0 0.0
        %2953 = vmatpush1.msra.mxu0 0.0
        %2954 = vmatprep.subr.mxu0 0.0
        %2955 = vmatpush1.msra.mxu0 0.0
        %2956 = vmatprep.subr.mxu0 0.0
        %2957 = vmatpush1.msra.mxu0 0.0
        %2958 = vmatprep.subr.mxu0 0.0
        %2959 = vmatpush1.msra.mxu0 0.0
        %2960 = vmatprep.subr.mxu0 0.0
        %2961 = vmatpush1.msra.mxu0 0.0
        %2962 = vmatprep.subr.mxu0 0.0
        %2963 = vmatpush1.msra.mxu0 0.0
        %2964 = vmatprep.subr.mxu0 0.0
        %2965 = vmatpush1.msra.mxu0 0.0
        %2966 = vmatprep.subr.mxu0 0.0
        %2967 = vmatpush1.msra.mxu0 0.0
        %2968 = vmatprep.subr.mxu0 0.0
        %2969 = vmatpush1.msra.mxu0 0.0
        %2970 = vmatprep.subr.mxu0 0.0
        %2971 = vmatpush1.msra.mxu0 0.0
        %2972 = vmatprep.subr.mxu0 0.0
        %2973 = vmatpush1.msra.mxu0 0.0
        %2974 = vmatprep.subr.mxu0 0.0
        %2975 = vmatpush1.msra.mxu0 0.0
        %2976 = vmatprep.subr.mxu0 0.0
        %2977 = vmatpush1.msra.mxu0 0.0
        %2978 = vmatprep.subr.mxu0 0.0
        %2979 = vmatpush1.msra.mxu0 0.0
        %2980 = vmatprep.subr.mxu0 0.0
        %2981 = vmatpush1.msra.mxu0 0.0
        %2982 = vmatprep.subr.mxu0 0.0
        %2983 = vmatpush1.msra.mxu0 0.0
        %2984 = vmatprep.subr.mxu0 0.0
        %2985 = vmatpush1.msra.mxu0 0.0
        %2986 = vmatprep.subr.mxu0 0.0
        %2987 = vmatpush1.msra.mxu0 0.0
        %2988 = vmatprep.subr.mxu0 0.0
        %2989 = vmatpush1.msra.mxu0 0.0
        %2990 = vmatprep.subr.mxu0 0.0
        %2991 = vmatpush1.msra.mxu0 0.0
        %2992 = vmatprep.subr.mxu0 0.0
        %2993 = vmatpush1.msra.mxu0 0.0
        %2994 = vmatprep.mubr.f32.mxu0 0.0
        %2995 = vmatmul.mubr.f32.gmra.mrb[0].mxu0 %v2922
        %v2996 = vpop.f32.mrb[0].mxu0
        %v2997 = vadd.f32 0.0, %v2996
        %v2998 = vpop.f32.mrb[0].mxu0
        %2999 = vmatprep.mubr.f32.mxu0 0.0
        %3000 = vmatmul.mubr.f32.gmra.mrb[0].mxu0 %v2925
        %v3001 = vpop.f32.mrb[0].mxu0
        %v3002 = vadd.f32 0.0, %v3001
        %v3003 = vpop.f32.mrb[0].mxu0
        %3004 = vmatprep.mubr.f32.mxu0 0.0
        %3005 = vmatmul.mubr.f32.gmra.mrb[0].mxu0 %v2928
        %v3006 = vpop.f32.mrb[0].mxu0
        %v3007 = vadd.f32 0.0, %v3006
        %v3008 = vpop.f32.mrb[0].mxu0
        %3009 = vdwg.mxu0
        %s3010 = scalar_lea.vmem %s4, 32
        %v3011 = vld [vmem:[%s3010] sm:$0xff]
        %3012 = vrot.lane.b32.xlu0 %v2601, 120
        %v3013 = vpop.permute.xlu0 %3012
        %3014 = vrot.lane.b32.xlu0 %v2606, 120
        %v3015 = vpop.permute.xlu0 %3014
        %3016 = vrot.lane.b32.xlu0 %v2611, 120
        %v3017 = vpop.permute.xlu0 %3016
        %3018 = vrot.lane.b32.xlu0 %v2686, 120
        %v3019 = vpop.permute.xlu0 %3018
        %3020 = vrot.lane.b32.xlu0 %v2691, 120
        %v3021 = vpop.permute.xlu0 %3020
        %3022 = vrot.lane.b32.xlu0 %v2696, 120
        %v3023 = vpop.permute.xlu0 %3022
        %v3024 = vsel %vm843, %v3013, 0
        %v3026 = vsel %vm843, %v3015, 0
        %v3028 = vsel %vm843, %v3017, 0
        %v3030 = vsel %vm843, %v3019, 0
        %v3032 = vsel %vm843, %v3021, 0
        %v3034 = vsel %vm843, %v3023, 0
        %3036 = vmatprep.subr.mxu0 0.0
        %3037 = vmatpush1.xpose.msra.mxu0 %v3030
        %3038 = vmatprep.subr.mxu0 0.0
        %3039 = vmatpush1.xpose.msra.mxu0 %v3032
        %3040 = vmatprep.subr.mxu0 0.0
        %3041 = vmatpush1.xpose.msra.mxu0 %v3034
        %3042 = vmatprep.subr.mxu0 0.0
        %3043 = vmatpush1.xpose.msra.mxu0 0.0
        %3044 = vmatprep.subr.mxu0 0.0
        %3045 = vmatpush1.xpose.msra.mxu0 0.0
        %3046 = vmatprep.subr.mxu0 0.0
        %3047 = vmatpush1.xpose.msra.mxu0 0.0
        %3048 = vmatprep.subr.mxu0 0.0
        %3049 = vmatpush1.xpose.msra.mxu0 0.0
        %3050 = vmatprep.subr.mxu0 0.0
        %3051 = vmatpush1.xpose.msra.mxu0 0.0
        %3052 = vmatprep.subr.mxu0 0.0
        %3053 = vmatpush1.xpose.msra.mxu0 0.0
        %3054 = vmatprep.subr.mxu0 0.0
        %3055 = vmatpush1.xpose.msra.mxu0 0.0
        %3056 = vmatprep.subr.mxu0 0.0
        %3057 = vmatpush1.xpose.msra.mxu0 0.0
        %3058 = vmatprep.subr.mxu0 0.0
        %3059 = vmatpush1.xpose.msra.mxu0 0.0
        %3060 = vmatprep.subr.mxu0 0.0
        %3061 = vmatpush1.xpose.msra.mxu0 0.0
        %3062 = vmatprep.subr.mxu0 0.0
        %3063 = vmatpush1.xpose.msra.mxu0 0.0
        %3064 = vmatprep.subr.mxu0 0.0
        %3065 = vmatpush1.xpose.msra.mxu0 0.0
        %3066 = vmatprep.subr.mxu0 0.0
        %3067 = vmatpush1.xpose.msra.mxu0 0.0
        %3068 = vmatprep.subr.mxu0 0.0
        %3069 = vmatpush1.xpose.msra.mxu0 0.0
        %3070 = vmatprep.subr.mxu0 0.0
        %3071 = vmatpush1.xpose.msra.mxu0 0.0
        %3072 = vmatprep.subr.mxu0 0.0
        %3073 = vmatpush1.xpose.msra.mxu0 0.0
        %3074 = vmatprep.subr.mxu0 0.0
        %3075 = vmatpush1.xpose.msra.mxu0 0.0
        %3076 = vmatprep.subr.mxu0 0.0
        %3077 = vmatpush1.xpose.msra.mxu0 0.0
        %3078 = vmatprep.subr.mxu0 0.0
        %3079 = vmatpush1.xpose.msra.mxu0 0.0
        %3080 = vmatprep.subr.mxu0 0.0
        %3081 = vmatpush1.xpose.msra.mxu0 0.0
        %3082 = vmatprep.subr.mxu0 0.0
        %3083 = vmatpush1.xpose.msra.mxu0 0.0
        %3084 = vmatprep.subr.mxu0 0.0
        %3085 = vmatpush1.xpose.msra.mxu0 0.0
        %3086 = vmatprep.subr.mxu0 0.0
        %3087 = vmatpush1.xpose.msra.mxu0 0.0
        %3088 = vmatprep.subr.mxu0 0.0
        %3089 = vmatpush1.xpose.msra.mxu0 0.0
        %3090 = vmatprep.subr.mxu0 0.0
        %3091 = vmatpush1.xpose.msra.mxu0 0.0
        %3092 = vmatprep.subr.mxu0 0.0
        %3093 = vmatpush1.xpose.msra.mxu0 0.0
        %3094 = vmatprep.subr.mxu0 0.0
        %3095 = vmatpush1.xpose.msra.mxu0 0.0
        %3096 = vmatprep.subr.mxu0 0.0
        %3097 = vmatpush1.xpose.msra.mxu0 0.0
        %3098 = vmatprep.subr.mxu0 0.0
        %3099 = vmatpush1.xpose.msra.mxu0 0.0
        %3100 = vmatprep.mubr.f32.mxu0 0.0
        %3101 = vmatmul.mubr.f32.gmra.mrb[0].mxu0 %v3024
        %v3102 = vpop.f32.mrb[0].mxu0
        %v3103 = vadd.f32 0.0, %v3102
        %v3104 = vpop.f32.mrb[0].mxu0
        %3105 = vmatprep.mubr.f32.mxu0 0.0
        %3106 = vmatmul.mubr.f32.gmra.mrb[0].mxu0 %v3026
        %v3107 = vpop.f32.mrb[0].mxu0
        %v3108 = vadd.f32 0.0, %v3107
        %v3109 = vpop.f32.mrb[0].mxu0
        %3110 = vmatprep.mubr.f32.mxu0 0.0
        %3111 = vmatmul.mubr.f32.gmra.mrb[0].mxu0 %v3028
        %v3112 = vpop.f32.mrb[0].mxu0
        %v3113 = vadd.f32 0.0, %v3112
        %v3114 = vpop.f32.mrb[0].mxu0
        %3115 = vdwg.mxu0
        %v3116 = vmul.f32 %v3103, 0.35355338
        %v3117 = vmul.f32 %v3108, 0.35355338
        %v3118 = vmul.f32 %v3113, 0.35355338
        %v3119 = vadd.f32 %v3116, %v518
        %v3120 = vadd.f32 %v3117, %v518
        %v3121 = vadd.f32 %v3118, %v518
        %v3122 = vsel %vm948, %v3119, -inf
        %3123 = vmax.xlane.f32.xlu0 %v3122
        %v3124 = vpop.xlane.xlu0 %3123
        %v3125 = vsel %vm948, %v3120, -inf
        %3126 = vmax.xlane.f32.xlu0 %v3125
        %v3127 = vpop.xlane.xlu0 %3126
        %v3128 = vsel %vm948, %v3121, -inf
        %3129 = vmax.xlane.f32.xlu0 %v3128
        %v3130 = vpop.xlane.xlu0 %3129
        %v3131 = vsub.f32 %v3119, %v3124
        %v3132 = vsub.f32 %v3120, %v3127
        %v3133 = vsub.f32 %v3121, %v3130
        %v3134 = vmul.f32 %v3131, 1.442695
        %v3135 = vpow.pop %v3134
        %v3136 = vmul.f32 %v3132, 1.442695
        %v3137 = vpow.pop %v3136
        %v3138 = vmul.f32 %v3133, 1.442695
        %v3139 = vpow.pop %v3138
        %v3140 = vsel %vm948, %v3135, 0.0
        %3141 = vadd.xlane.f32.xlu0 %v3140
        %v3142 = vpop.xlane.xlu0 %3141
        %v3143 = vsel %vm948, %v3137, 0.0
        %3144 = vadd.xlane.f32.xlu0 %v3143
        %v3145 = vpop.xlane.xlu0 %3144
        %v3146 = vsel %vm948, %v3139, 0.0
        %3147 = vadd.xlane.f32.xlu0 %v3146
        %v3148 = vpop.xlane.xlu0 %3147
        %v3149 = vrcp.pop %v3142
        %v3150 = vrcp.pop %v3145
        %v3151 = vrcp.pop %v3148
        %v3152 = vmul.f32 %v3135, %v3149
        %v3153 = vmul.f32 %v3137, %v3150
        %v3154 = vmul.f32 %v3139, %v3151
        %3158 = vrot.lane.b32.xlu0 %v2771, 120
        %v3159 = vpop.permute.xlu0 %3158
        %3160 = vrot.lane.b32.xlu0 %v2776, 120
        %v3161 = vpop.permute.xlu0 %3160
        %3162 = vrot.lane.b32.xlu0 %v2781, 120
        %v3163 = vpop.permute.xlu0 %3162
        %v3168 = vsel %vm948, %v3152, 0
        %v3171 = vsel %vm948, %v3153, 0
        %v3174 = vsel %vm948, %v3154, 0
        %3176 = vmatprep.subr.mxu0 0.0
        %3177 = vmatpush1.msra.mxu0 %v3159
        %3178 = vmatprep.subr.mxu0 0.0
        %3179 = vmatpush1.msra.mxu0 %v3161
        %3180 = vmatprep.subr.mxu0 0.0
        %3181 = vmatpush1.msra.mxu0 %v3163
        %3182 = vmatprep.subr.mxu0 0.0
        %3183 = vmatpush1.msra.mxu0 0.0
        %3184 = vmatprep.subr.mxu0 0.0
        %3185 = vmatpush1.msra.mxu0 0.0
        %3186 = vmatprep.subr.mxu0 0.0
        %3187 = vmatpush1.msra.mxu0 0.0
        %3188 = vmatprep.subr.mxu0 0.0
        %3189 = vmatpush1.msra.mxu0 0.0
        %3190 = vmatprep.subr.mxu0 0.0
        %3191 = vmatpush1.msra.mxu0 0.0
        %3192 = vmatprep.subr.mxu0 0.0
        %3193 = vmatpush1.msra.mxu0 0.0
        %3194 = vmatprep.subr.mxu0 0.0
        %3195 = vmatpush1.msra.mxu0 0.0
        %3196 = vmatprep.subr.mxu0 0.0
        %3197 = vmatpush1.msra.mxu0 0.0
        %3198 = vmatprep.subr.mxu0 0.0
        %3199 = vmatpush1.msra.mxu0 0.0
        %3200 = vmatprep.subr.mxu0 0.0
        %3201 = vmatpush1.msra.mxu0 0.0
        %3202 = vmatprep.subr.mxu0 0.0
        %3203 = vmatpush1.msra.mxu0 0.0
        %3204 = vmatprep.subr.mxu0 0.0
        %3205 = vmatpush1.msra.mxu0 0.0
        %3206 = vmatprep.subr.mxu0 0.0
        %3207 = vmatpush1.msra.mxu0 0.0
        %3208 = vmatprep.subr.mxu0 0.0
        %3209 = vmatpush1.msra.mxu0 0.0
        %3210 = vmatprep.subr.mxu0 0.0
        %3211 = vmatpush1.msra.mxu0 0.0
        %3212 = vmatprep.subr.mxu0 0.0
        %3213 = vmatpush1.msra.mxu0 0.0
        %3214 = vmatprep.subr.mxu0 0.0
        %3215 = vmatpush1.msra.mxu0 0.0
        %3216 = vmatprep.subr.mxu0 0.0
        %3217 = vmatpush1.msra.mxu0 0.0
        %3218 = vmatprep.subr.mxu0 0.0
        %3219 = vmatpush1.msra.mxu0 0.0
        %3220 = vmatprep.subr.mxu0 0.0
        %3221 = vmatpush1.msra.mxu0 0.0
        %3222 = vmatprep.subr.mxu0 0.0
        %3223 = vmatpush1.msra.mxu0 0.0
        %3224 = vmatprep.subr.mxu0 0.0
        %3225 = vmatpush1.msra.mxu0 0.0
        %3226 = vmatprep.subr.mxu0 0.0
        %3227 = vmatpush1.msra.mxu0 0.0
        %3228 = vmatprep.subr.mxu0 0.0
        %3229 = vmatpush1.msra.mxu0 0.0
        %3230 = vmatprep.subr.mxu0 0.0
        %3231 = vmatpush1.msra.mxu0 0.0
        %3232 = vmatprep.subr.mxu0 0.0
        %3233 = vmatpush1.msra.mxu0 0.0
        %3234 = vmatprep.subr.mxu0 0.0
        %3235 = vmatpush1.msra.mxu0 0.0
        %3236 = vmatprep.subr.mxu0 0.0
        %3237 = vmatpush1.msra.mxu0 0.0
        %3238 = vmatprep.subr.mxu0 0.0
        %3239 = vmatpush1.msra.mxu0 0.0
        %3240 = vmatprep.mubr.f32.mxu0 0.0
        %3241 = vmatmul.mubr.f32.gmra.mrb[0].mxu0 %v3168
        %v3242 = vpop.f32.mrb[0].mxu0
        %v3243 = vadd.f32 0.0, %v3242
        %v3244 = vpop.f32.mrb[0].mxu0
        %3245 = vmatprep.mubr.f32.mxu0 0.0
        %3246 = vmatmul.mubr.f32.gmra.mrb[0].mxu0 %v3171
        %v3247 = vpop.f32.mrb[0].mxu0
        %v3248 = vadd.f32 0.0, %v3247
        %v3249 = vpop.f32.mrb[0].mxu0
        %3250 = vmatprep.mubr.f32.mxu0 0.0
        %3251 = vmatmul.mubr.f32.gmra.mrb[0].mxu0 %v3174
        %v3252 = vpop.f32.mrb[0].mxu0
        %v3253 = vadd.f32 0.0, %v3252
        %v3254 = vpop.f32.mrb[0].mxu0
        %3255 = vdwg.mxu0
        %v3256 = vld [vmem:[%s3010 + $0x8] sm:$0xff]
        %v3258 = vsel %vm843, %v3243, 0
        %v3261 = vsel %vm843, %v3248, 0
        %v3264 = vsel %vm843, %v3253, 0
        %3266 = vmatprep.subr.mxu0 0.0
        %3267 = vmatpush1.msra.mxu0 %v3256
        %3268 = vmatprep.subr.mxu0 0.0
        %3269 = vmatpush1.msra.mxu0 0.0
        %3270 = vmatprep.subr.mxu0 0.0
        %3271 = vmatpush1.msra.mxu0 0.0
        %3272 = vmatprep.subr.mxu0 0.0
        %3273 = vmatpush1.msra.mxu0 0.0
        %3274 = vmatprep.subr.mxu0 0.0
        %3275 = vmatpush1.msra.mxu0 0.0
        %3276 = vmatprep.subr.mxu0 0.0
        %3277 = vmatpush1.msra.mxu0 0.0
        %3278 = vmatprep.subr.mxu0 0.0
        %3279 = vmatpush1.msra.mxu0 0.0
        %3280 = vmatprep.subr.mxu0 0.0
        %3281 = vmatpush1.msra.mxu0 0.0
        %3282 = vmatprep.subr.mxu0 0.0
        %3283 = vmatpush1.msra.mxu0 0.0
        %3284 = vmatprep.subr.mxu0 0.0
        %3285 = vmatpush1.msra.mxu0 0.0
        %3286 = vmatprep.subr.mxu0 0.0
        %3287 = vmatpush1.msra.mxu0 0.0
        %3288 = vmatprep.subr.mxu0 0.0
        %3289 = vmatpush1.msra.mxu0 0.0
        %3290 = vmatprep.subr.mxu0 0.0
        %3291 = vmatpush1.msra.mxu0 0.0
        %3292 = vmatprep.subr.mxu0 0.0
        %3293 = vmatpush1.msra.mxu0 0.0
        %3294 = vmatprep.subr.mxu0 0.0
        %3295 = vmatpush1.msra.mxu0 0.0
        %3296 = vmatprep.subr.mxu0 0.0
        %3297 = vmatpush1.msra.mxu0 0.0
        %3298 = vmatprep.subr.mxu0 0.0
        %3299 = vmatpush1.msra.mxu0 0.0
        %3300 = vmatprep.subr.mxu0 0.0
        %3301 = vmatpush1.msra.mxu0 0.0
        %3302 = vmatprep.subr.mxu0 0.0
        %3303 = vmatpush1.msra.mxu0 0.0
        %3304 = vmatprep.subr.mxu0 0.0
        %3305 = vmatpush1.msra.mxu0 0.0
        %3306 = vmatprep.subr.mxu0 0.0
        %3307 = vmatpush1.msra.mxu0 0.0
        %3308 = vmatprep.subr.mxu0 0.0
        %3309 = vmatpush1.msra.mxu0 0.0
        %3310 = vmatprep.subr.mxu0 0.0
        %3311 = vmatpush1.msra.mxu0 0.0
        %3312 = vmatprep.subr.mxu0 0.0
        %3313 = vmatpush1.msra.mxu0 0.0
        %3314 = vmatprep.subr.mxu0 0.0
        %3315 = vmatpush1.msra.mxu0 0.0
        %3316 = vmatprep.subr.mxu0 0.0
        %3317 = vmatpush1.msra.mxu0 0.0
        %3318 = vmatprep.subr.mxu0 0.0
        %3319 = vmatpush1.msra.mxu0 0.0
        %3320 = vmatprep.subr.mxu0 0.0
        %3321 = vmatpush1.msra.mxu0 0.0
        %3322 = vmatprep.subr.mxu0 0.0
        %3323 = vmatpush1.msra.mxu0 0.0
        %3324 = vmatprep.subr.mxu0 0.0
        %3325 = vmatpush1.msra.mxu0 0.0
        %3326 = vmatprep.subr.mxu0 0.0
        %3327 = vmatpush1.msra.mxu0 0.0
        %3328 = vmatprep.subr.mxu0 0.0
        %3329 = vmatpush1.msra.mxu0 0.0
        %3330 = vmatprep.mubr.f32.mxu0 0.0
        %3331 = vmatmul.mubr.f32.gmra.mrb[0].mxu0 %v3258
        %v3332 = vpop.f32.mrb[0].mxu0
        %v3333 = vadd.f32 0.0, %v3332
        %v3334 = vpop.f32.mrb[0].mxu0
        %3335 = vmatprep.mubr.f32.mxu0 0.0
        %3336 = vmatmul.mubr.f32.gmra.mrb[0].mxu0 %v3261
        %v3337 = vpop.f32.mrb[0].mxu0
        %v3338 = vadd.f32 0.0, %v3337
        %v3339 = vpop.f32.mrb[0].mxu0
        %3340 = vmatprep.mubr.f32.mxu0 0.0
        %3341 = vmatmul.mubr.f32.gmra.mrb[0].mxu0 %v3264
        %v3342 = vpop.f32.mrb[0].mxu0
        %v3343 = vadd.f32 0.0, %v3342
        %v3344 = vpop.f32.mrb[0].mxu0
        %3345 = vdwg.mxu0
        %v3347 = vsel %vm843, %v2997, 0
        %v3350 = vsel %vm843, %v3002, 0
        %v3353 = vsel %vm843, %v3007, 0
        %3355 = vmatprep.subr.mxu0 0.0
        %3356 = vmatpush1.msra.mxu0 %v3011
        %3357 = vmatprep.subr.mxu0 0.0
        %3358 = vmatpush1.msra.mxu0 0.0
        %3359 = vmatprep.subr.mxu0 0.0
        %3360 = vmatpush1.msra.mxu0 0.0
        %3361 = vmatprep.subr.mxu0 0.0
        %3362 = vmatpush1.msra.mxu0 0.0
        %3363 = vmatprep.subr.mxu0 0.0
        %3364 = vmatpush1.msra.mxu0 0.0
        %3365 = vmatprep.subr.mxu0 0.0
        %3366 = vmatpush1.msra.mxu0 0.0
        %3367 = vmatprep.subr.mxu0 0.0
        %3368 = vmatpush1.msra.mxu0 0.0
        %3369 = vmatprep.subr.mxu0 0.0
        %3370 = vmatpush1.msra.mxu0 0.0
        %3371 = vmatprep.subr.mxu0 0.0
        %3372 = vmatpush1.msra.mxu0 0.0
        %3373 = vmatprep.subr.mxu0 0.0
        %3374 = vmatpush1.msra.mxu0 0.0
        %3375 = vmatprep.subr.mxu0 0.0
        %3376 = vmatpush1.msra.mxu0 0.0
        %3377 = vmatprep.subr.mxu0 0.0
        %3378 = vmatpush1.msra.mxu0 0.0
        %3379 = vmatprep.subr.mxu0 0.0
        %3380 = vmatpush1.msra.mxu0 0.0
        %3381 = vmatprep.subr.mxu0 0.0
        %3382 = vmatpush1.msra.mxu0 0.0
        %3383 = vmatprep.subr.mxu0 0.0
        %3384 = vmatpush1.msra.mxu0 0.0
        %3385 = vmatprep.subr.mxu0 0.0
        %3386 = vmatpush1.msra.mxu0 0.0
        %3387 = vmatprep.subr.mxu0 0.0
        %3388 = vmatpush1.msra.mxu0 0.0
        %3389 = vmatprep.subr.mxu0 0.0
        %3390 = vmatpush1.msra.mxu0 0.0
        %3391 = vmatprep.subr.mxu0 0.0
        %3392 = vmatpush1.msra.mxu0 0.0
        %3393 = vmatprep.subr.mxu0 0.0
        %3394 = vmatpush1.msra.mxu0 0.0
        %3395 = vmatprep.subr.mxu0 0.0
        %3396 = vmatpush1.msra.mxu0 0.0
        %3397 = vmatprep.subr.mxu0 0.0
        %3398 = vmatpush1.msra.mxu0 0.0
        %3399 = vmatprep.subr.mxu0 0.0
        %3400 = vmatpush1.msra.mxu0 0.0
        %3401 = vmatprep.subr.mxu0 0.0
        %3402 = vmatpush1.msra.mxu0 0.0
        %3403 = vmatprep.subr.mxu0 0.0
        %3404 = vmatpush1.msra.mxu0 0.0
        %3405 = vmatprep.subr.mxu0 0.0
        %3406 = vmatpush1.msra.mxu0 0.0
        %3407 = vmatprep.subr.mxu0 0.0
        %3408 = vmatpush1.msra.mxu0 0.0
        %3409 = vmatprep.subr.mxu0 0.0
        %3410 = vmatpush1.msra.mxu0 0.0
        %3411 = vmatprep.subr.mxu0 0.0
        %3412 = vmatpush1.msra.mxu0 0.0
        %3413 = vmatprep.subr.mxu0 0.0
        %3414 = vmatpush1.msra.mxu0 0.0
        %3415 = vmatprep.subr.mxu0 0.0
        %3416 = vmatpush1.msra.mxu0 0.0
        %3417 = vmatprep.subr.mxu0 0.0
        %3418 = vmatpush1.msra.mxu0 0.0
        %3419 = vmatprep.mubr.f32.mxu0 0.0
        %3420 = vmatmul.mubr.f32.gmra.mrb[0].mxu0 %v3347
        %v3421 = vpop.f32.mrb[0].mxu0
        %v3422 = vadd.f32 %v3333, %v3421
        %v3423 = vpop.f32.mrb[0].mxu0
        %3424 = vmatprep.mubr.f32.mxu0 0.0
        %3425 = vmatmul.mubr.f32.gmra.mrb[0].mxu0 %v3350
        %v3426 = vpop.f32.mrb[0].mxu0
        %v3427 = vadd.f32 %v3338, %v3426
        %v3428 = vpop.f32.mrb[0].mxu0
        %3429 = vmatprep.mubr.f32.mxu0 0.0
        %3430 = vmatmul.mubr.f32.gmra.mrb[0].mxu0 %v3353
        %v3431 = vpop.f32.mrb[0].mxu0
        %v3432 = vadd.f32 %v3343, %v3431
        %v3433 = vpop.f32.mrb[0].mxu0
        %3434 = vdwg.mxu0
        %3435 = vrot.lane.b32.xlu0 %v2601, 112
        %v3436 = vpop.permute.xlu0 %3435
        %3437 = vrot.lane.b32.xlu0 %v2606, 112
        %v3438 = vpop.permute.xlu0 %3437
        %3439 = vrot.lane.b32.xlu0 %v2611, 112
        %v3440 = vpop.permute.xlu0 %3439
        %3441 = vrot.lane.b32.xlu0 %v2686, 112
        %v3442 = vpop.permute.xlu0 %3441
        %3443 = vrot.lane.b32.xlu0 %v2691, 112
        %v3444 = vpop.permute.xlu0 %3443
        %3445 = vrot.lane.b32.xlu0 %v2696, 112
        %v3446 = vpop.permute.xlu0 %3445
        %v3447 = vsel %vm843, %v3436, 0
        %v3449 = vsel %vm843, %v3438, 0
        %v3451 = vsel %vm843, %v3440, 0
        %v3453 = vsel %vm843, %v3442, 0
        %v3455 = vsel %vm843, %v3444, 0
        %v3457 = vsel %vm843, %v3446, 0
        %3459 = vmatprep.subr.mxu0 0.0
        %3460 = vmatpush1.xpose.msra.mxu0 %v3453
        %3461 = vmatprep.subr.mxu0 0.0
        %3462 = vmatpush1.xpose.msra.mxu0 %v3455
        %3463 = vmatprep.subr.mxu0 0.0
        %3464 = vmatpush1.xpose.msra.mxu0 %v3457
        %3465 = vmatprep.subr.mxu0 0.0
        %3466 = vmatpush1.xpose.msra.mxu0 0.0
        %3467 = vmatprep.subr.mxu0 0.0
        %3468 = vmatpush1.xpose.msra.mxu0 0.0
        %3469 = vmatprep.subr.mxu0 0.0
        %3470 = vmatpush1.xpose.msra.mxu0 0.0
        %3471 = vmatprep.subr.mxu0 0.0
        %3472 = vmatpush1.xpose.msra.mxu0 0.0
        %3473 = vmatprep.subr.mxu0 0.0
        %3474 = vmatpush1.xpose.msra.mxu0 0.0
        %3475 = vmatprep.subr.mxu0 0.0
        %3476 = vmatpush1.xpose.msra.mxu0 0.0
        %3477 = vmatprep.subr.mxu0 0.0
        %3478 = vmatpush1.xpose.msra.mxu0 0.0
        %3479 = vmatprep.subr.mxu0 0.0
        %3480 = vmatpush1.xpose.msra.mxu0 0.0
        %3481 = vmatprep.subr.mxu0 0.0
        %3482 = vmatpush1.xpose.msra.mxu0 0.0
        %3483 = vmatprep.subr.mxu0 0.0
        %3484 = vmatpush1.xpose.msra.mxu0 0.0
        %3485 = vmatprep.subr.mxu0 0.0
        %3486 = vmatpush1.xpose.msra.mxu0 0.0
        %3487 = vmatprep.subr.mxu0 0.0
        %3488 = vmatpush1.xpose.msra.mxu0 0.0
        %3489 = vmatprep.subr.mxu0 0.0
        %3490 = vmatpush1.xpose.msra.mxu0 0.0
        %3491 = vmatprep.subr.mxu0 0.0
        %3492 = vmatpush1.xpose.msra.mxu0 0.0
        %3493 = vmatprep.subr.mxu0 0.0
        %3494 = vmatpush1.xpose.msra.mxu0 0.0
        %3495 = vmatprep.subr.mxu0 0.0
        %3496 = vmatpush1.xpose.msra.mxu0 0.0
        %3497 = vmatprep.subr.mxu0 0.0
        %3498 = vmatpush1.xpose.msra.mxu0 0.0
        %3499 = vmatprep.subr.mxu0 0.0
        %3500 = vmatpush1.xpose.msra.mxu0 0.0
        %3501 = vmatprep.subr.mxu0 0.0
        %3502 = vmatpush1.xpose.msra.mxu0 0.0
        %3503 = vmatprep.subr.mxu0 0.0
        %3504 = vmatpush1.xpose.msra.mxu0 0.0
        %3505 = vmatprep.subr.mxu0 0.0
        %3506 = vmatpush1.xpose.msra.mxu0 0.0
        %3507 = vmatprep.subr.mxu0 0.0
        %3508 = vmatpush1.xpose.msra.mxu0 0.0
        %3509 = vmatprep.subr.mxu0 0.0
        %3510 = vmatpush1.xpose.msra.mxu0 0.0
        %3511 = vmatprep.subr.mxu0 0.0
        %3512 = vmatpush1.xpose.msra.mxu0 0.0
        %3513 = vmatprep.subr.mxu0 0.0
        %3514 = vmatpush1.xpose.msra.mxu0 0.0
        %3515 = vmatprep.subr.mxu0 0.0
        %3516 = vmatpush1.xpose.msra.mxu0 0.0
        %3517 = vmatprep.subr.mxu0 0.0
        %3518 = vmatpush1.xpose.msra.mxu0 0.0
        %3519 = vmatprep.subr.mxu0 0.0
        %3520 = vmatpush1.xpose.msra.mxu0 0.0
        %3521 = vmatprep.subr.mxu0 0.0
        %3522 = vmatpush1.xpose.msra.mxu0 0.0
        %3523 = vmatprep.mubr.f32.mxu0 0.0
        %3524 = vmatmul.mubr.f32.gmra.mrb[0].mxu0 %v3447
        %v3525 = vpop.f32.mrb[0].mxu0
        %v3526 = vadd.f32 0.0, %v3525
        %v3527 = vpop.f32.mrb[0].mxu0
        %3528 = vmatprep.mubr.f32.mxu0 0.0
        %3529 = vmatmul.mubr.f32.gmra.mrb[0].mxu0 %v3449
        %v3530 = vpop.f32.mrb[0].mxu0
        %v3531 = vadd.f32 0.0, %v3530
        %v3532 = vpop.f32.mrb[0].mxu0
        %3533 = vmatprep.mubr.f32.mxu0 0.0
        %3534 = vmatmul.mubr.f32.gmra.mrb[0].mxu0 %v3451
        %v3535 = vpop.f32.mrb[0].mxu0
        %v3536 = vadd.f32 0.0, %v3535
        %v3537 = vpop.f32.mrb[0].mxu0
        %3538 = vdwg.mxu0
        %v3539 = vmul.f32 %v3526, 0.35355338
        %v3540 = vmul.f32 %v3531, 0.35355338
        %v3541 = vmul.f32 %v3536, 0.35355338
        %v3542 = vadd.f32 %v3539, %v518
        %v3543 = vadd.f32 %v3540, %v518
        %v3544 = vadd.f32 %v3541, %v518
        %v3545 = vsel %vm948, %v3542, -inf
        %3546 = vmax.xlane.f32.xlu0 %v3545
        %v3547 = vpop.xlane.xlu0 %3546
        %v3548 = vsel %vm948, %v3543, -inf
        %3549 = vmax.xlane.f32.xlu0 %v3548
        %v3550 = vpop.xlane.xlu0 %3549
        %v3551 = vsel %vm948, %v3544, -inf
        %3552 = vmax.xlane.f32.xlu0 %v3551
        %v3553 = vpop.xlane.xlu0 %3552
        %v3554 = vsub.f32 %v3542, %v3547
        %v3555 = vsub.f32 %v3543, %v3550
        %v3556 = vsub.f32 %v3544, %v3553
        %v3557 = vmul.f32 %v3554, 1.442695
        %v3558 = vpow.pop %v3557
        %v3559 = vmul.f32 %v3555, 1.442695
        %v3560 = vpow.pop %v3559
        %v3561 = vmul.f32 %v3556, 1.442695
        %v3562 = vpow.pop %v3561
        %v3563 = vsel %vm948, %v3558, 0.0
        %3564 = vadd.xlane.f32.xlu0 %v3563
        %v3565 = vpop.xlane.xlu0 %3564
        %v3566 = vsel %vm948, %v3560, 0.0
        %3567 = vadd.xlane.f32.xlu0 %v3566
        %v3568 = vpop.xlane.xlu0 %3567
        %v3569 = vsel %vm948, %v3562, 0.0
        %3570 = vadd.xlane.f32.xlu0 %v3569
        %v3571 = vpop.xlane.xlu0 %3570
        %v3572 = vrcp.pop %v3565
        %v3573 = vrcp.pop %v3568
        %v3574 = vrcp.pop %v3571
        %v3575 = vmul.f32 %v3558, %v3572
        %v3576 = vmul.f32 %v3560, %v3573
        %v3577 = vmul.f32 %v3562, %v3574
        %3578 = vrot.lane.b32.xlu0 %v2771, 112
        %v3579 = vpop.permute.xlu0 %3578
        %3580 = vrot.lane.b32.xlu0 %v2776, 112
        %v3581 = vpop.permute.xlu0 %3580
        %3582 = vrot.lane.b32.xlu0 %v2781, 112
        %v3583 = vpop.permute.xlu0 %3582
        %v3588 = vsel %vm948, %v3575, 0
        %v3591 = vsel %vm948, %v3576, 0
        %v3594 = vsel %vm948, %v3577, 0
        %3596 = vmatprep.subr.mxu0 0.0
        %3597 = vmatpush1.msra.mxu0 %v3579
        %3598 = vmatprep.subr.mxu0 0.0
        %3599 = vmatpush1.msra.mxu0 %v3581
        %3600 = vmatprep.subr.mxu0 0.0
        %3601 = vmatpush1.msra.mxu0 %v3583
        %3602 = vmatprep.subr.mxu0 0.0
        %3603 = vmatpush1.msra.mxu0 0.0
        %3604 = vmatprep.subr.mxu0 0.0
        %3605 = vmatpush1.msra.mxu0 0.0
        %3606 = vmatprep.subr.mxu0 0.0
        %3607 = vmatpush1.msra.mxu0 0.0
        %3608 = vmatprep.subr.mxu0 0.0
        %3609 = vmatpush1.msra.mxu0 0.0
        %3610 = vmatprep.subr.mxu0 0.0
        %3611 = vmatpush1.msra.mxu0 0.0
        %3612 = vmatprep.subr.mxu0 0.0
        %3613 = vmatpush1.msra.mxu0 0.0
        %3614 = vmatprep.subr.mxu0 0.0
        %3615 = vmatpush1.msra.mxu0 0.0
        %3616 = vmatprep.subr.mxu0 0.0
        %3617 = vmatpush1.msra.mxu0 0.0
        %3618 = vmatprep.subr.mxu0 0.0
        %3619 = vmatpush1.msra.mxu0 0.0
        %3620 = vmatprep.subr.mxu0 0.0
        %3621 = vmatpush1.msra.mxu0 0.0
        %3622 = vmatprep.subr.mxu0 0.0
        %3623 = vmatpush1.msra.mxu0 0.0
        %3624 = vmatprep.subr.mxu0 0.0
        %3625 = vmatpush1.msra.mxu0 0.0
        %3626 = vmatprep.subr.mxu0 0.0
        %3627 = vmatpush1.msra.mxu0 0.0
        %3628 = vmatprep.subr.mxu0 0.0
        %3629 = vmatpush1.msra.mxu0 0.0
        %3630 = vmatprep.subr.mxu0 0.0
        %3631 = vmatpush1.msra.mxu0 0.0
        %3632 = vmatprep.subr.mxu0 0.0
        %3633 = vmatpush1.msra.mxu0 0.0
        %3634 = vmatprep.subr.mxu0 0.0
        %3635 = vmatpush1.msra.mxu0 0.0
        %3636 = vmatprep.subr.mxu0 0.0
        %3637 = vmatpush1.msra.mxu0 0.0
        %3638 = vmatprep.subr.mxu0 0.0
        %3639 = vmatpush1.msra.mxu0 0.0
        %3640 = vmatprep.subr.mxu0 0.0
        %3641 = vmatpush1.msra.mxu0 0.0
        %3642 = vmatprep.subr.mxu0 0.0
        %3643 = vmatpush1.msra.mxu0 0.0
        %3644 = vmatprep.subr.mxu0 0.0
        %3645 = vmatpush1.msra.mxu0 0.0
        %3646 = vmatprep.subr.mxu0 0.0
        %3647 = vmatpush1.msra.mxu0 0.0
        %3648 = vmatprep.subr.mxu0 0.0
        %3649 = vmatpush1.msra.mxu0 0.0
        %3650 = vmatprep.subr.mxu0 0.0
        %3651 = vmatpush1.msra.mxu0 0.0
        %3652 = vmatprep.subr.mxu0 0.0
        %3653 = vmatpush1.msra.mxu0 0.0
        %3654 = vmatprep.subr.mxu0 0.0
        %3655 = vmatpush1.msra.mxu0 0.0
        %3656 = vmatprep.subr.mxu0 0.0
        %3657 = vmatpush1.msra.mxu0 0.0
        %3658 = vmatprep.subr.mxu0 0.0
        %3659 = vmatpush1.msra.mxu0 0.0
        %3660 = vmatprep.mubr.f32.mxu0 0.0
        %3661 = vmatmul.mubr.f32.gmra.mrb[0].mxu0 %v3588
        %v3662 = vpop.f32.mrb[0].mxu0
        %v3663 = vadd.f32 0.0, %v3662
        %v3664 = vpop.f32.mrb[0].mxu0
        %3665 = vmatprep.mubr.f32.mxu0 0.0
        %3666 = vmatmul.mubr.f32.gmra.mrb[0].mxu0 %v3591
        %v3667 = vpop.f32.mrb[0].mxu0
        %v3668 = vadd.f32 0.0, %v3667
        %v3669 = vpop.f32.mrb[0].mxu0
        %3670 = vmatprep.mubr.f32.mxu0 0.0
        %3671 = vmatmul.mubr.f32.gmra.mrb[0].mxu0 %v3594
        %v3672 = vpop.f32.mrb[0].mxu0
        %v3673 = vadd.f32 0.0, %v3672
        %v3674 = vpop.f32.mrb[0].mxu0
        %3675 = vdwg.mxu0
        %v3676 = vld [vmem:[%s3010 + $0x10] sm:$0xff]
        %v3678 = vsel %vm843, %v3663, 0
        %v3681 = vsel %vm843, %v3668, 0
        %v3684 = vsel %vm843, %v3673, 0
        %3686 = vmatprep.subr.mxu0 0.0
        %3687 = vmatpush1.msra.mxu0 %v3676
        %3688 = vmatprep.subr.mxu0 0.0
        %3689 = vmatpush1.msra.mxu0 0.0
        %3690 = vmatprep.subr.mxu0 0.0
        %3691 = vmatpush1.msra.mxu0 0.0
        %3692 = vmatprep.subr.mxu0 0.0
        %3693 = vmatpush1.msra.mxu0 0.0
        %3694 = vmatprep.subr.mxu0 0.0
        %3695 = vmatpush1.msra.mxu0 0.0
        %3696 = vmatprep.subr.mxu0 0.0
        %3697 = vmatpush1.msra.mxu0 0.0
        %3698 = vmatprep.subr.mxu0 0.0
        %3699 = vmatpush1.msra.mxu0 0.0
        %3700 = vmatprep.subr.mxu0 0.0
        %3701 = vmatpush1.msra.mxu0 0.0
        %3702 = vmatprep.subr.mxu0 0.0
        %3703 = vmatpush1.msra.mxu0 0.0
        %3704 = vmatprep.subr.mxu0 0.0
        %3705 = vmatpush1.msra.mxu0 0.0
        %3706 = vmatprep.subr.mxu0 0.0
        %3707 = vmatpush1.msra.mxu0 0.0
        %3708 = vmatprep.subr.mxu0 0.0
        %3709 = vmatpush1.msra.mxu0 0.0
        %3710 = vmatprep.subr.mxu0 0.0
        %3711 = vmatpush1.msra.mxu0 0.0
        %3712 = vmatprep.subr.mxu0 0.0
        %3713 = vmatpush1.msra.mxu0 0.0
        %3714 = vmatprep.subr.mxu0 0.0
        %3715 = vmatpush1.msra.mxu0 0.0
        %3716 = vmatprep.subr.mxu0 0.0
        %3717 = vmatpush1.msra.mxu0 0.0
        %3718 = vmatprep.subr.mxu0 0.0
        %3719 = vmatpush1.msra.mxu0 0.0
        %3720 = vmatprep.subr.mxu0 0.0
        %3721 = vmatpush1.msra.mxu0 0.0
        %3722 = vmatprep.subr.mxu0 0.0
        %3723 = vmatpush1.msra.mxu0 0.0
        %3724 = vmatprep.subr.mxu0 0.0
        %3725 = vmatpush1.msra.mxu0 0.0
        %3726 = vmatprep.subr.mxu0 0.0
        %3727 = vmatpush1.msra.mxu0 0.0
        %3728 = vmatprep.subr.mxu0 0.0
        %3729 = vmatpush1.msra.mxu0 0.0
        %3730 = vmatprep.subr.mxu0 0.0
        %3731 = vmatpush1.msra.mxu0 0.0
        %3732 = vmatprep.subr.mxu0 0.0
        %3733 = vmatpush1.msra.mxu0 0.0
        %3734 = vmatprep.subr.mxu0 0.0
        %3735 = vmatpush1.msra.mxu0 0.0
        %3736 = vmatprep.subr.mxu0 0.0
        %3737 = vmatpush1.msra.mxu0 0.0
        %3738 = vmatprep.subr.mxu0 0.0
        %3739 = vmatpush1.msra.mxu0 0.0
        %3740 = vmatprep.subr.mxu0 0.0
        %3741 = vmatpush1.msra.mxu0 0.0
        %3742 = vmatprep.subr.mxu0 0.0
        %3743 = vmatpush1.msra.mxu0 0.0
        %3744 = vmatprep.subr.mxu0 0.0
        %3745 = vmatpush1.msra.mxu0 0.0
        %3746 = vmatprep.subr.mxu0 0.0
        %3747 = vmatpush1.msra.mxu0 0.0
        %3748 = vmatprep.subr.mxu0 0.0
        %3749 = vmatpush1.msra.mxu0 0.0
        %3750 = vmatprep.mubr.f32.mxu0 0.0
        %3751 = vmatmul.mubr.f32.gmra.mrb[0].mxu0 %v3678
        %v3752 = vpop.f32.mrb[0].mxu0
        %v3753 = vadd.f32 0.0, %v3752
        %v3754 = vpop.f32.mrb[0].mxu0
        %3755 = vmatprep.mubr.f32.mxu0 0.0
        %3756 = vmatmul.mubr.f32.gmra.mrb[0].mxu0 %v3681
        %v3757 = vpop.f32.mrb[0].mxu0
        %v3758 = vadd.f32 0.0, %v3757
        %v3759 = vpop.f32.mrb[0].mxu0
        %3760 = vmatprep.mubr.f32.mxu0 0.0
        %3761 = vmatmul.mubr.f32.gmra.mrb[0].mxu0 %v3684
        %v3762 = vpop.f32.mrb[0].mxu0
        %v3763 = vadd.f32 0.0, %v3762
        %v3764 = vpop.f32.mrb[0].mxu0
        %3765 = vdwg.mxu0
        %v3766 = vadd.f32 %v3422, %v3753
        %v3767 = vadd.f32 %v3427, %v3758
        %v3768 = vadd.f32 %v3432, %v3763
        %3769 = vrot.lane.b32.xlu0 %v2601, 104
        %v3770 = vpop.permute.xlu0 %3769
        %3771 = vrot.lane.b32.xlu0 %v2606, 104
        %v3772 = vpop.permute.xlu0 %3771
        %3773 = vrot.lane.b32.xlu0 %v2611, 104
        %v3774 = vpop.permute.xlu0 %3773
        %3775 = vrot.lane.b32.xlu0 %v2686, 104
        %v3776 = vpop.permute.xlu0 %3775
        %3777 = vrot.lane.b32.xlu0 %v2691, 104
        %v3778 = vpop.permute.xlu0 %3777
        %3779 = vrot.lane.b32.xlu0 %v2696, 104
        %v3780 = vpop.permute.xlu0 %3779
        %v3781 = vsel %vm843, %v3770, 0
        %v3783 = vsel %vm843, %v3772, 0
        %v3785 = vsel %vm843, %v3774, 0
        %v3787 = vsel %vm843, %v3776, 0
        %v3789 = vsel %vm843, %v3778, 0
        %v3791 = vsel %vm843, %v3780, 0
        %3793 = vmatprep.subr.mxu0 0.0
        %3794 = vmatpush1.xpose.msra.mxu0 %v3787
        %3795 = vmatprep.subr.mxu0 0.0
        %3796 = vmatpush1.xpose.msra.mxu0 %v3789
        %3797 = vmatprep.subr.mxu0 0.0
        %3798 = vmatpush1.xpose.msra.mxu0 %v3791
        %3799 = vmatprep.subr.mxu0 0.0
        %3800 = vmatpush1.xpose.msra.mxu0 0.0
        %3801 = vmatprep.subr.mxu0 0.0
        %3802 = vmatpush1.xpose.msra.mxu0 0.0
        %3803 = vmatprep.subr.mxu0 0.0
        %3804 = vmatpush1.xpose.msra.mxu0 0.0
        %3805 = vmatprep.subr.mxu0 0.0
        %3806 = vmatpush1.xpose.msra.mxu0 0.0
        %3807 = vmatprep.subr.mxu0 0.0
        %3808 = vmatpush1.xpose.msra.mxu0 0.0
        %3809 = vmatprep.subr.mxu0 0.0
        %3810 = vmatpush1.xpose.msra.mxu0 0.0
        %3811 = vmatprep.subr.mxu0 0.0
        %3812 = vmatpush1.xpose.msra.mxu0 0.0
        %3813 = vmatprep.subr.mxu0 0.0
        %3814 = vmatpush1.xpose.msra.mxu0 0.0
        %3815 = vmatprep.subr.mxu0 0.0
        %3816 = vmatpush1.xpose.msra.mxu0 0.0
        %3817 = vmatprep.subr.mxu0 0.0
        %3818 = vmatpush1.xpose.msra.mxu0 0.0
        %3819 = vmatprep.subr.mxu0 0.0
        %3820 = vmatpush1.xpose.msra.mxu0 0.0
        %3821 = vmatprep.subr.mxu0 0.0
        %3822 = vmatpush1.xpose.msra.mxu0 0.0
        %3823 = vmatprep.subr.mxu0 0.0
        %3824 = vmatpush1.xpose.msra.mxu0 0.0
        %3825 = vmatprep.subr.mxu0 0.0
        %3826 = vmatpush1.xpose.msra.mxu0 0.0
        %3827 = vmatprep.subr.mxu0 0.0
        %3828 = vmatpush1.xpose.msra.mxu0 0.0
        %3829 = vmatprep.subr.mxu0 0.0
        %3830 = vmatpush1.xpose.msra.mxu0 0.0
        %3831 = vmatprep.subr.mxu0 0.0
        %3832 = vmatpush1.xpose.msra.mxu0 0.0
        %3833 = vmatprep.subr.mxu0 0.0
        %3834 = vmatpush1.xpose.msra.mxu0 0.0
        %3835 = vmatprep.subr.mxu0 0.0
        %3836 = vmatpush1.xpose.msra.mxu0 0.0
        %3837 = vmatprep.subr.mxu0 0.0
        %3838 = vmatpush1.xpose.msra.mxu0 0.0
        %3839 = vmatprep.subr.mxu0 0.0
        %3840 = vmatpush1.xpose.msra.mxu0 0.0
        %3841 = vmatprep.subr.mxu0 0.0
        %3842 = vmatpush1.xpose.msra.mxu0 0.0
        %3843 = vmatprep.subr.mxu0 0.0
        %3844 = vmatpush1.xpose.msra.mxu0 0.0
        %3845 = vmatprep.subr.mxu0 0.0
        %3846 = vmatpush1.xpose.msra.mxu0 0.0
        %3847 = vmatprep.subr.mxu0 0.0
        %3848 = vmatpush1.xpose.msra.mxu0 0.0
        %3849 = vmatprep.subr.mxu0 0.0
        %3850 = vmatpush1.xpose.msra.mxu0 0.0
        %3851 = vmatprep.subr.mxu0 0.0
        %3852 = vmatpush1.xpose.msra.mxu0 0.0
        %3853 = vmatprep.subr.mxu0 0.0
        %3854 = vmatpush1.xpose.msra.mxu0 0.0
        %3855 = vmatprep.subr.mxu0 0.0
        %3856 = vmatpush1.xpose.msra.mxu0 0.0
        %3857 = vmatprep.mubr.f32.mxu0 0.0
        %3858 = vmatmul.mubr.f32.gmra.mrb[0].mxu0 %v3781
        %v3859 = vpop.f32.mrb[0].mxu0
        %v3860 = vadd.f32 0.0, %v3859
        %v3861 = vpop.f32.mrb[0].mxu0
        %3862 = vmatprep.mubr.f32.mxu0 0.0
        %3863 = vmatmul.mubr.f32.gmra.mrb[0].mxu0 %v3783
        %v3864 = vpop.f32.mrb[0].mxu0
        %v3865 = vadd.f32 0.0, %v3864
        %v3866 = vpop.f32.mrb[0].mxu0
        %3867 = vmatprep.mubr.f32.mxu0 0.0
        %3868 = vmatmul.mubr.f32.gmra.mrb[0].mxu0 %v3785
        %v3869 = vpop.f32.mrb[0].mxu0
        %v3870 = vadd.f32 0.0, %v3869
        %v3871 = vpop.f32.mrb[0].mxu0
        %3872 = vdwg.mxu0
        %v3873 = vmul.f32 %v3860, 0.35355338
        %v3874 = vmul.f32 %v3865, 0.35355338
        %v3875 = vmul.f32 %v3870, 0.35355338
        %v3876 = vadd.f32 %v3873, %v518
        %v3877 = vadd.f32 %v3874, %v518
        %v3878 = vadd.f32 %v3875, %v518
        %v3879 = vsel %vm948, %v3876, -inf
        %3880 = vmax.xlane.f32.xlu0 %v3879
        %v3881 = vpop.xlane.xlu0 %3880
        %v3882 = vsel %vm948, %v3877, -inf
        %3883 = vmax.xlane.f32.xlu0 %v3882
        %v3884 = vpop.xlane.xlu0 %3883
        %v3885 = vsel %vm948, %v3878, -inf
        %3886 = vmax.xlane.f32.xlu0 %v3885
        %v3887 = vpop.xlane.xlu0 %3886
        %v3888 = vsub.f32 %v3876, %v3881
        %v3889 = vsub.f32 %v3877, %v3884
        %v3890 = vsub.f32 %v3878, %v3887
        %v3891 = vmul.f32 %v3888, 1.442695
        %v3892 = vpow.pop %v3891
        %v3893 = vmul.f32 %v3889, 1.442695
        %v3894 = vpow.pop %v3893
        %v3895 = vmul.f32 %v3890, 1.442695
        %v3896 = vpow.pop %v3895
        %v3897 = vsel %vm948, %v3892, 0.0
        %3898 = vadd.xlane.f32.xlu0 %v3897
        %v3899 = vpop.xlane.xlu0 %3898
        %v3900 = vsel %vm948, %v3894, 0.0
        %3901 = vadd.xlane.f32.xlu0 %v3900
        %v3902 = vpop.xlane.xlu0 %3901
        %v3903 = vsel %vm948, %v3896, 0.0
        %3904 = vadd.xlane.f32.xlu0 %v3903
        %v3905 = vpop.xlane.xlu0 %3904
        %v3906 = vrcp.pop %v3899
        %v3907 = vrcp.pop %v3902
        %v3908 = vrcp.pop %v3905
        %v3909 = vmul.f32 %v3892, %v3906
        %v3910 = vmul.f32 %v3894, %v3907
        %v3911 = vmul.f32 %v3896, %v3908
        %3912 = vrot.lane.b32.xlu0 %v2771, 104
        %v3913 = vpop.permute.xlu0 %3912
        %3914 = vrot.lane.b32.xlu0 %v2776, 104
        %v3915 = vpop.permute.xlu0 %3914
        %3916 = vrot.lane.b32.xlu0 %v2781, 104
        %v3917 = vpop.permute.xlu0 %3916
        %v3922 = vsel %vm948, %v3909, 0
        %v3925 = vsel %vm948, %v3910, 0
        %v3928 = vsel %vm948, %v3911, 0
        %3930 = vmatprep.subr.mxu0 0.0
        %3931 = vmatpush1.msra.mxu0 %v3913
        %3932 = vmatprep.subr.mxu0 0.0
        %3933 = vmatpush1.msra.mxu0 %v3915
        %3934 = vmatprep.subr.mxu0 0.0
        %3935 = vmatpush1.msra.mxu0 %v3917
        %3936 = vmatprep.subr.mxu0 0.0
        %3937 = vmatpush1.msra.mxu0 0.0
        %3938 = vmatprep.subr.mxu0 0.0
        %3939 = vmatpush1.msra.mxu0 0.0
        %3940 = vmatprep.subr.mxu0 0.0
        %3941 = vmatpush1.msra.mxu0 0.0
        %3942 = vmatprep.subr.mxu0 0.0
        %3943 = vmatpush1.msra.mxu0 0.0
        %3944 = vmatprep.subr.mxu0 0.0
        %3945 = vmatpush1.msra.mxu0 0.0
        %3946 = vmatprep.subr.mxu0 0.0
        %3947 = vmatpush1.msra.mxu0 0.0
        %3948 = vmatprep.subr.mxu0 0.0
        %3949 = vmatpush1.msra.mxu0 0.0
        %3950 = vmatprep.subr.mxu0 0.0
        %3951 = vmatpush1.msra.mxu0 0.0
        %3952 = vmatprep.subr.mxu0 0.0
        %3953 = vmatpush1.msra.mxu0 0.0
        %3954 = vmatprep.subr.mxu0 0.0
        %3955 = vmatpush1.msra.mxu0 0.0
        %3956 = vmatprep.subr.mxu0 0.0
        %3957 = vmatpush1.msra.mxu0 0.0
        %3958 = vmatprep.subr.mxu0 0.0
        %3959 = vmatpush1.msra.mxu0 0.0
        %3960 = vmatprep.subr.mxu0 0.0
        %3961 = vmatpush1.msra.mxu0 0.0
        %3962 = vmatprep.subr.mxu0 0.0
        %3963 = vmatpush1.msra.mxu0 0.0
        %3964 = vmatprep.subr.mxu0 0.0
        %3965 = vmatpush1.msra.mxu0 0.0
        %3966 = vmatprep.subr.mxu0 0.0
        %3967 = vmatpush1.msra.mxu0 0.0
        %3968 = vmatprep.subr.mxu0 0.0
        %3969 = vmatpush1.msra.mxu0 0.0
        %3970 = vmatprep.subr.mxu0 0.0
        %3971 = vmatpush1.msra.mxu0 0.0
        %3972 = vmatprep.subr.mxu0 0.0
        %3973 = vmatpush1.msra.mxu0 0.0
        %3974 = vmatprep.subr.mxu0 0.0
        %3975 = vmatpush1.msra.mxu0 0.0
        %3976 = vmatprep.subr.mxu0 0.0
        %3977 = vmatpush1.msra.mxu0 0.0
        %3978 = vmatprep.subr.mxu0 0.0
        %3979 = vmatpush1.msra.mxu0 0.0
        %3980 = vmatprep.subr.mxu0 0.0
        %3981 = vmatpush1.msra.mxu0 0.0
        %3982 = vmatprep.subr.mxu0 0.0
        %3983 = vmatpush1.msra.mxu0 0.0
        %3984 = vmatprep.subr.mxu0 0.0
        %3985 = vmatpush1.msra.mxu0 0.0
        %3986 = vmatprep.subr.mxu0 0.0
        %3987 = vmatpush1.msra.mxu0 0.0
        %3988 = vmatprep.subr.mxu0 0.0
        %3989 = vmatpush1.msra.mxu0 0.0
        %3990 = vmatprep.subr.mxu0 0.0
        %3991 = vmatpush1.msra.mxu0 0.0
        %3992 = vmatprep.subr.mxu0 0.0
        %3993 = vmatpush1.msra.mxu0 0.0
        %3994 = vmatprep.mubr.f32.mxu0 0.0
        %3995 = vmatmul.mubr.f32.gmra.mrb[0].mxu0 %v3922
        %v3996 = vpop.f32.mrb[0].mxu0
        %v3997 = vadd.f32 0.0, %v3996
        %v3998 = vpop.f32.mrb[0].mxu0
        %3999 = vmatprep.mubr.f32.mxu0 0.0
        %4000 = vmatmul.mubr.f32.gmra.mrb[0].mxu0 %v3925
        %v4001 = vpop.f32.mrb[0].mxu0
        %v4002 = vadd.f32 0.0, %v4001
        %v4003 = vpop.f32.mrb[0].mxu0
        %4004 = vmatprep.mubr.f32.mxu0 0.0
        %4005 = vmatmul.mubr.f32.gmra.mrb[0].mxu0 %v3928
        %v4006 = vpop.f32.mrb[0].mxu0
        %v4007 = vadd.f32 0.0, %v4006
        %v4008 = vpop.f32.mrb[0].mxu0
        %4009 = vdwg.mxu0
        %v4010 = vld [vmem:[%s3010 + $0x18] sm:$0xff]
        %v4012 = vsel %vm843, %v3997, 0
        %v4015 = vsel %vm843, %v4002, 0
        %v4018 = vsel %vm843, %v4007, 0
        %4020 = vmatprep.subr.mxu0 0.0
        %4021 = vmatpush1.msra.mxu0 %v4010
        %4022 = vmatprep.subr.mxu0 0.0
        %4023 = vmatpush1.msra.mxu0 0.0
        %4024 = vmatprep.subr.mxu0 0.0
        %4025 = vmatpush1.msra.mxu0 0.0
        %4026 = vmatprep.subr.mxu0 0.0
        %4027 = vmatpush1.msra.mxu0 0.0
        %4028 = vmatprep.subr.mxu0 0.0
        %4029 = vmatpush1.msra.mxu0 0.0
        %4030 = vmatprep.subr.mxu0 0.0
        %4031 = vmatpush1.msra.mxu0 0.0
        %4032 = vmatprep.subr.mxu0 0.0
        %4033 = vmatpush1.msra.mxu0 0.0
        %4034 = vmatprep.subr.mxu0 0.0
        %4035 = vmatpush1.msra.mxu0 0.0
        %4036 = vmatprep.subr.mxu0 0.0
        %4037 = vmatpush1.msra.mxu0 0.0
        %4038 = vmatprep.subr.mxu0 0.0
        %4039 = vmatpush1.msra.mxu0 0.0
        %4040 = vmatprep.subr.mxu0 0.0
        %4041 = vmatpush1.msra.mxu0 0.0
        %4042 = vmatprep.subr.mxu0 0.0
        %4043 = vmatpush1.msra.mxu0 0.0
        %4044 = vmatprep.subr.mxu0 0.0
        %4045 = vmatpush1.msra.mxu0 0.0
        %4046 = vmatprep.subr.mxu0 0.0
        %4047 = vmatpush1.msra.mxu0 0.0
        %4048 = vmatprep.subr.mxu0 0.0
        %4049 = vmatpush1.msra.mxu0 0.0
        %4050 = vmatprep.subr.mxu0 0.0
        %4051 = vmatpush1.msra.mxu0 0.0
        %4052 = vmatprep.subr.mxu0 0.0
        %4053 = vmatpush1.msra.mxu0 0.0
        %4054 = vmatprep.subr.mxu0 0.0
        %4055 = vmatpush1.msra.mxu0 0.0
        %4056 = vmatprep.subr.mxu0 0.0
        %4057 = vmatpush1.msra.mxu0 0.0
        %4058 = vmatprep.subr.mxu0 0.0
        %4059 = vmatpush1.msra.mxu0 0.0
        %4060 = vmatprep.subr.mxu0 0.0
        %4061 = vmatpush1.msra.mxu0 0.0
        %4062 = vmatprep.subr.mxu0 0.0
        %4063 = vmatpush1.msra.mxu0 0.0
        %4064 = vmatprep.subr.mxu0 0.0
        %4065 = vmatpush1.msra.mxu0 0.0
        %4066 = vmatprep.subr.mxu0 0.0
        %4067 = vmatpush1.msra.mxu0 0.0
        %4068 = vmatprep.subr.mxu0 0.0
        %4069 = vmatpush1.msra.mxu0 0.0
        %4070 = vmatprep.subr.mxu0 0.0
        %4071 = vmatpush1.msra.mxu0 0.0
        %4072 = vmatprep.subr.mxu0 0.0
        %4073 = vmatpush1.msra.mxu0 0.0
        %4074 = vmatprep.subr.mxu0 0.0
        %4075 = vmatpush1.msra.mxu0 0.0
        %4076 = vmatprep.subr.mxu0 0.0
        %4077 = vmatpush1.msra.mxu0 0.0
        %4078 = vmatprep.subr.mxu0 0.0
        %4079 = vmatpush1.msra.mxu0 0.0
        %4080 = vmatprep.subr.mxu0 0.0
        %4081 = vmatpush1.msra.mxu0 0.0
        %4082 = vmatprep.subr.mxu0 0.0
        %4083 = vmatpush1.msra.mxu0 0.0
        %4084 = vmatprep.mubr.f32.mxu0 0.0
        %4085 = vmatmul.mubr.f32.gmra.mrb[0].mxu0 %v4012
        %v4086 = vpop.f32.mrb[0].mxu0
        %v4087 = vadd.f32 0.0, %v4086
        %v4088 = vpop.f32.mrb[0].mxu0
        %4089 = vmatprep.mubr.f32.mxu0 0.0
        %4090 = vmatmul.mubr.f32.gmra.mrb[0].mxu0 %v4015
        %v4091 = vpop.f32.mrb[0].mxu0
        %v4092 = vadd.f32 0.0, %v4091
        %v4093 = vpop.f32.mrb[0].mxu0
        %4094 = vmatprep.mubr.f32.mxu0 0.0
        %4095 = vmatmul.mubr.f32.gmra.mrb[0].mxu0 %v4018
        %v4096 = vpop.f32.mrb[0].mxu0
        %v4097 = vadd.f32 0.0, %v4096
        %v4098 = vpop.f32.mrb[0].mxu0
        %4099 = vdwg.mxu0
        %v4100 = vadd.f32 %v3766, %v4087
        %v4101 = vadd.f32 %v3767, %v4092
        %v4102 = vadd.f32 %v3768, %v4097
        %v4103 = vadd.f32 %v2457, %v4100
        %v4104 = vadd.f32 %v2458, %v4101
        %v4105 = vadd.f32 %v2459, %v4102
        %v4106 = vlaneseq
        %v4107 = vshrl.u32 %v4106, 7
        %v4108 = vsub.s32 0, %v4107
        %v4109 = vrot.slane %v2465, %v4108
        %v4110 = vadd.f32 %v4103, %v4109
        %v4111 = vadd.f32 %v4104, %v4109
        %v4112 = vadd.f32 %v4105, %v4109
        %v4113 = vsel %vm525, %v4110, 0.0
        %4114 = vadd.xlane.f32.xlu0 %v4113
        %v4115 = vpop.xlane.xlu0 %4114
        %v4116 = vsel %vm525, %v4111, 0.0
        %4117 = vadd.xlane.f32.xlu0 %v4116
        %v4118 = vpop.xlane.xlu0 %4117
        %v4119 = vsel %vm525, %v4112, 0.0
        %4120 = vadd.xlane.f32.xlu0 %v4119
        %v4121 = vpop.xlane.xlu0 %4120
        %v4122 = vmul.f32 %v4115, %v535
        %v4123 = vmul.f32 %v4118, %v535
        %v4124 = vmul.f32 %v4121, %v535
        %v4125 = vsub.f32 %v4110, %v4122
        %v4126 = vsub.f32 %v4111, %v4123
        %v4127 = vsub.f32 %v4112, %v4124
        %v4128 = vmul.f32 %v4125, %v4125
        %v4129 = vmul.f32 %v4126, %v4126
        %v4130 = vmul.f32 %v4127, %v4127
        %v4131 = vsel %vm525, %v4128, 0.0
        %4132 = vadd.xlane.f32.xlu0 %v4131
        %v4133 = vpop.xlane.xlu0 %4132
        %v4134 = vsel %vm525, %v4129, 0.0
        %4135 = vadd.xlane.f32.xlu0 %v4134
        %v4136 = vpop.xlane.xlu0 %4135
        %v4137 = vsel %vm525, %v4130, 0.0
        %4138 = vadd.xlane.f32.xlu0 %v4137
        %v4139 = vpop.xlane.xlu0 %4138
        %v4140 = vmul.f32 %v4133, %v535
        %v4141 = vmul.f32 %v4136, %v535
        %v4142 = vmul.f32 %v4139, %v535
        %v4143 = vadd.f32 %v4140, 1e-05
        %v4144 = vadd.f32 %v4141, 1e-05
        %v4145 = vadd.f32 %v4142, 1e-05
        %v4146 = vrsqrt.pop %v4143
        %v4147 = vrsqrt.pop %v4144
        %v4148 = vrsqrt.pop %v4145
        %v4149 = vmul.f32 %v4125, %v4146
        %v4150 = vmul.f32 %v4126, %v4147
        %v4151 = vmul.f32 %v4127, %v4148
        %v4152 = vlaneseq
        %v4153 = vshrl.u32 %v4152, 7
        %v4154 = vsub.s32 0, %v4153
        %v4155 = vrot.slane %v2463, %v4154
        %v4156 = vmul.f32 %v4149, %v4155
        %v4157 = vmul.f32 %v4150, %v4155
        %v4158 = vmul.f32 %v4151, %v4155
        %v4159 = vlaneseq
        %v4160 = vshrl.u32 %v4159, 7
        %v4161 = vsub.s32 0, %v4160
        %v4162 = vrot.slane %v2464, %v4161
        %v4163 = vadd.f32 %v4156, %v4162
        %v4164 = vadd.f32 %v4157, %v4162
        %v4165 = vadd.f32 %v4158, %v4162
        %s4166 = scalar_lea.vmem %s5, 32
        %v4167 = vld [vmem:[%s4166] sm:$0xff]
        %v4168 = vld [vmem:[%s4166 + $0x8] sm:$0xff]
        %v4169 = vld [vmem:[%s4166 + $0x10] sm:$0xff]
        %v4170 = vld [vmem:[%s4166 + $0x18] sm:$0xff]
        %s4171 = scalar_lea.vmem %s6, 1
        %v4172 = vld [vmem:[%s4171] sm:$0x1]
        %v4174 = vlaneseq
        %v4175 = vshrl.u32 %v4174, 7
        %v4176 = vsub.s32 0, %v4175
        %v4177 = vrot.slane %v4172, %v4176
        %v4180 = vsel %vm525, %v4163, 0
        %v4183 = vsel %vm525, %v4164, 0
        %v4186 = vsel %vm525, %v4165, 0
        %4188 = vmatprep.subr.mxu0 0.0
        %4189 = vmatpush1.msra.mxu0 %v4167
        %4190 = vmatprep.subr.mxu0 0.0
        %4191 = vmatpush1.msra.mxu0 %v4168
        %4192 = vmatprep.subr.mxu0 0.0
        %4193 = vmatpush1.msra.mxu0 %v4169
        %4194 = vmatprep.subr.mxu0 0.0
        %4195 = vmatpush1.msra.mxu0 %v4170
        %4196 = vmatprep.subr.mxu0 0.0
        %4197 = vmatpush1.msra.mxu0 0.0
        %4198 = vmatprep.subr.mxu0 0.0
        %4199 = vmatpush1.msra.mxu0 0.0
        %4200 = vmatprep.subr.mxu0 0.0
        %4201 = vmatpush1.msra.mxu0 0.0
        %4202 = vmatprep.subr.mxu0 0.0
        %4203 = vmatpush1.msra.mxu0 0.0
        %4204 = vmatprep.subr.mxu0 0.0
        %4205 = vmatpush1.msra.mxu0 0.0
        %4206 = vmatprep.subr.mxu0 0.0
        %4207 = vmatpush1.msra.mxu0 0.0
        %4208 = vmatprep.subr.mxu0 0.0
        %4209 = vmatpush1.msra.mxu0 0.0
        %4210 = vmatprep.subr.mxu0 0.0
        %4211 = vmatpush1.msra.mxu0 0.0
        %4212 = vmatprep.subr.mxu0 0.0
        %4213 = vmatpush1.msra.mxu0 0.0
        %4214 = vmatprep.subr.mxu0 0.0
        %4215 = vmatpush1.msra.mxu0 0.0
        %4216 = vmatprep.subr.mxu0 0.0
        %4217 = vmatpush1.msra.mxu0 0.0
        %4218 = vmatprep.subr.mxu0 0.0
        %4219 = vmatpush1.msra.mxu0 0.0
        %4220 = vmatprep.subr.mxu0 0.0
        %4221 = vmatpush1.msra.mxu0 0.0
        %4222 = vmatprep.subr.mxu0 0.0
        %4223 = vmatpush1.msra.mxu0 0.0
        %4224 = vmatprep.subr.mxu0 0.0
        %4225 = vmatpush1.msra.mxu0 0.0
        %4226 = vmatprep.subr.mxu0 0.0
        %4227 = vmatpush1.msra.mxu0 0.0
        %4228 = vmatprep.subr.mxu0 0.0
        %4229 = vmatpush1.msra.mxu0 0.0
        %4230 = vmatprep.subr.mxu0 0.0
        %4231 = vmatpush1.msra.mxu0 0.0
        %4232 = vmatprep.subr.mxu0 0.0
        %4233 = vmatpush1.msra.mxu0 0.0
        %4234 = vmatprep.subr.mxu0 0.0
        %4235 = vmatpush1.msra.mxu0 0.0
        %4236 = vmatprep.subr.mxu0 0.0
        %4237 = vmatpush1.msra.mxu0 0.0
        %4238 = vmatprep.subr.mxu0 0.0
        %4239 = vmatpush1.msra.mxu0 0.0
        %4240 = vmatprep.subr.mxu0 0.0
        %4241 = vmatpush1.msra.mxu0 0.0
        %4242 = vmatprep.subr.mxu0 0.0
        %4243 = vmatpush1.msra.mxu0 0.0
        %4244 = vmatprep.subr.mxu0 0.0
        %4245 = vmatpush1.msra.mxu0 0.0
        %4246 = vmatprep.subr.mxu0 0.0
        %4247 = vmatpush1.msra.mxu0 0.0
        %4248 = vmatprep.subr.mxu0 0.0
        %4249 = vmatpush1.msra.mxu0 0.0
        %4250 = vmatprep.subr.mxu0 0.0
        %4251 = vmatpush1.msra.mxu0 0.0
        %4252 = vmatprep.mubr.f32.mxu0 0.0
        %4253 = vmatmul.mubr.f32.gmra.mrb[0].mxu0 %v4180
        %v4254 = vpop.f32.mrb[0].mxu0
        %v4255 = vadd.f32 %v4177, %v4254
        %v4256 = vpop.f32.mrb[0].mxu0
        %4257 = vmatprep.mubr.f32.mxu0 0.0
        %4258 = vmatmul.mubr.f32.gmra.mrb[0].mxu0 %v4183
        %v4259 = vpop.f32.mrb[0].mxu0
        %v4260 = vadd.f32 %v4177, %v4259
        %v4261 = vpop.f32.mrb[0].mxu0
        %4262 = vmatprep.mubr.f32.mxu0 0.0
        %4263 = vmatmul.mubr.f32.gmra.mrb[0].mxu0 %v4186
        %v4264 = vpop.f32.mrb[0].mxu0
        %v4265 = vadd.f32 %v4177, %v4264
        %v4266 = vpop.f32.mrb[0].mxu0
        %4267 = vdwg.mxu0
        %v4268 = vmul.f32 %v4255, %v4255
        %v4269 = vmul.f32 %v4260, %v4260
        %v4270 = vmul.f32 %v4265, %v4265
        %v4271 = vmul.f32 %v4255, %v4268
        %v4272 = vmul.f32 %v4260, %v4269
        %v4273 = vmul.f32 %v4265, %v4270
        %v4274 = vmul.f32 %v4271, 0.044715
        %v4275 = vmul.f32 %v4272, 0.044715
        %v4276 = vmul.f32 %v4273, 0.044715
        %v4277 = vadd.f32 %v4255, %v4274
        %v4278 = vadd.f32 %v4260, %v4275
        %v4279 = vadd.f32 %v4265, %v4276
        %v4280 = vmul.f32 %v4277, 0.7978846
        %v4281 = vmul.f32 %v4278, 0.7978846
        %v4282 = vmul.f32 %v4279, 0.7978846
        %v4283 = vtanh.pop %v4280
        %v4284 = vtanh.pop %v4281
        %v4285 = vtanh.pop %v4282
        %v4286 = vadd.f32 %v4283, 1.0
        %v4287 = vadd.f32 %v4284, 1.0
        %v4288 = vadd.f32 %v4285, 1.0
        %v4289 = vmul.f32 %v4286, 0.5
        %v4290 = vmul.f32 %v4287, 0.5
        %v4291 = vmul.f32 %v4288, 0.5
        %v4292 = vmul.f32 %v4255, %v4289
        %v4293 = vmul.f32 %v4260, %v4290
        %v4294 = vmul.f32 %v4265, %v4291
        %s4295 = scalar_lea.vmem %s7, 64
        %v4296 = vld [vmem:[%s4295] sm:$0xff]
        %v4297 = vld [vmem:[%s4295 + $0x8] sm:$0xff]
        %v4298 = vld [vmem:[%s4295 + $0x10] sm:$0xff]
        %v4299 = vld [vmem:[%s4295 + $0x18] sm:$0xff]
        %v4300 = vld [vmem:[%s4295 + $0x20] sm:$0xff]
        %v4301 = vld [vmem:[%s4295 + $0x28] sm:$0xff]
        %v4302 = vld [vmem:[%s4295 + $0x30] sm:$0xff]
        %v4303 = vld [vmem:[%s4295 + $0x38] sm:$0xff]
        %v4305 = vsel %vm425, %v4292, 0
        %v4308 = vsel %vm425, %v4293, 0
        %v4311 = vsel %vm425, %v4294, 0
        %4313 = vmatprep.subr.mxu0 0.0
        %4314 = vmatpush1.msra.mxu0 %v4296
        %4315 = vmatprep.subr.mxu0 0.0
        %4316 = vmatpush1.msra.mxu0 %v4297
        %4317 = vmatprep.subr.mxu0 0.0
        %4318 = vmatpush1.msra.mxu0 %v4298
        %4319 = vmatprep.subr.mxu0 0.0
        %4320 = vmatpush1.msra.mxu0 %v4299
        %4321 = vmatprep.subr.mxu0 0.0
        %4322 = vmatpush1.msra.mxu0 %v4300
        %4323 = vmatprep.subr.mxu0 0.0
        %4324 = vmatpush1.msra.mxu0 %v4301
        %4325 = vmatprep.subr.mxu0 0.0
        %4326 = vmatpush1.msra.mxu0 %v4302
        %4327 = vmatprep.subr.mxu0 0.0
        %4328 = vmatpush1.msra.mxu0 %v4303
        %4329 = vmatprep.subr.mxu0 0.0
        %4330 = vmatpush1.msra.mxu0 0.0
        %4331 = vmatprep.subr.mxu0 0.0
        %4332 = vmatpush1.msra.mxu0 0.0
        %4333 = vmatprep.subr.mxu0 0.0
        %4334 = vmatpush1.msra.mxu0 0.0
        %4335 = vmatprep.subr.mxu0 0.0
        %4336 = vmatpush1.msra.mxu0 0.0
        %4337 = vmatprep.subr.mxu0 0.0
        %4338 = vmatpush1.msra.mxu0 0.0
        %4339 = vmatprep.subr.mxu0 0.0
        %4340 = vmatpush1.msra.mxu0 0.0
        %4341 = vmatprep.subr.mxu0 0.0
        %4342 = vmatpush1.msra.mxu0 0.0
        %4343 = vmatprep.subr.mxu0 0.0
        %4344 = vmatpush1.msra.mxu0 0.0
        %4345 = vmatprep.subr.mxu0 0.0
        %4346 = vmatpush1.msra.mxu0 0.0
        %4347 = vmatprep.subr.mxu0 0.0
        %4348 = vmatpush1.msra.mxu0 0.0
        %4349 = vmatprep.subr.mxu0 0.0
        %4350 = vmatpush1.msra.mxu0 0.0
        %4351 = vmatprep.subr.mxu0 0.0
        %4352 = vmatpush1.msra.mxu0 0.0
        %4353 = vmatprep.subr.mxu0 0.0
        %4354 = vmatpush1.msra.mxu0 0.0
        %4355 = vmatprep.subr.mxu0 0.0
        %4356 = vmatpush1.msra.mxu0 0.0
        %4357 = vmatprep.subr.mxu0 0.0
        %4358 = vmatpush1.msra.mxu0 0.0
        %4359 = vmatprep.subr.mxu0 0.0
        %4360 = vmatpush1.msra.mxu0 0.0
        %4361 = vmatprep.subr.mxu0 0.0
        %4362 = vmatpush1.msra.mxu0 0.0
        %4363 = vmatprep.subr.mxu0 0.0
        %4364 = vmatpush1.msra.mxu0 0.0
        %4365 = vmatprep.subr.mxu0 0.0
        %4366 = vmatpush1.msra.mxu0 0.0
        %4367 = vmatprep.subr.mxu0 0.0
        %4368 = vmatpush1.msra.mxu0 0.0
        %4369 = vmatprep.subr.mxu0 0.0
        %4370 = vmatpush1.msra.mxu0 0.0
        %4371 = vmatprep.subr.mxu0 0.0
        %4372 = vmatpush1.msra.mxu0 0.0
        %4373 = vmatprep.subr.mxu0 0.0
        %4374 = vmatpush1.msra.mxu0 0.0
        %4375 = vmatprep.subr.mxu0 0.0
        %4376 = vmatpush1.msra.mxu0 0.0
        %4377 = vmatprep.mubr.f32.mxu0 0.0
        %4378 = vmatmul.mubr.f32.gmra.mrb[0].mxu0 %v4305
        %v4379 = vpop.f32.mrb[0].mxu0
        %v4380 = vadd.f32 0.0, %v4379
        %v4381 = vpop.f32.mrb[0].mxu0
        %4382 = vmatprep.mubr.f32.mxu0 0.0
        %4383 = vmatmul.mubr.f32.gmra.mrb[0].mxu0 %v4308
        %v4384 = vpop.f32.mrb[0].mxu0
        %v4385 = vpop.f32.mrb[0].mxu0
        %4386 = vmatprep.mubr.f32.mxu0 0.0
        %4387 = vmatmul.mubr.f32.gmra.mrb[0].mxu0 %v4311
        %v4388 = vpop.f32.mrb[0].mxu0
        %v4389 = vpop.f32.mrb[0].mxu0
        %4390 = vdwg.mxu0
        %v4391 = vadd.f32 %v4110, %v4380
        %v4392 = vlaneseq
        %v4393 = vshrl.u32 %v4392, 7
        %v4394 = vsub.s32 0, %v4393
        %v4395 = vrot.slane %v2466, %v4394
        %v4396 = vadd.f32 %v4391, %v4395
        %v4397 = vld [vmem:[%s9] sm:$0x1]
        %v4398 = vld [vmem:[%s9 + $0x1] sm:$0x1]
        %vm4399 = vcmask 253952
        %v4400 = vsel %vm4399, %v4396, 0.0
        %4401 = vadd.xlane.f32.xlu0 %v4400
        %v4402 = vpop.xlane.xlu0 %4401
        %v4403 = vmul.f32 %v4402, %v535
        %v4404 = vsub.f32 %v4396, %v4403
        %v4405 = vmul.f32 %v4404, %v4404
        %v4406 = vsel %vm4399, %v4405, 0.0
        %4407 = vadd.xlane.f32.xlu0 %v4406
        %v4408 = vpop.xlane.xlu0 %4407
        %v4409 = vmul.f32 %v4408, %v535
        %v4410 = vadd.f32 %v4409, 1e-05
        %v4411 = vrsqrt.pop %v4410
        %v4412 = vmul.f32 %v4404, %v4411
        %v4413 = vmul.f32 %v4412, %v4397
        %v4414 = vadd.f32 %v4413, %v4398
        %v4415 = vld [vmem:[%s10] sm:$0xff]
        %v4416 = vld [vmem:[%s10 + $0x8] sm:$0xff]
        %v4417 = vld [vmem:[%s10 + $0x10] sm:$0xff]
        %v4418 = vld [vmem:[%s10 + $0x18] sm:$0xff]
        %v4419 = vld [vmem:[%s11] sm:$0x1]
        %v4421 = vsel %vm525, %v4414, 0
        %4423 = vmatprep.subr.mxu0 0.0
        %4424 = vmatpush1.msra.mxu0 %v4415
        %4425 = vmatprep.subr.mxu0 0.0
        %4426 = vmatpush1.msra.mxu0 %v4416
        %4427 = vmatprep.subr.mxu0 0.0
        %4428 = vmatpush1.msra.mxu0 %v4417
        %4429 = vmatprep.subr.mxu0 0.0
        %4430 = vmatpush1.msra.mxu0 %v4418
        %4431 = vmatprep.subr.mxu0 0.0
        %4432 = vmatpush1.msra.mxu0 0.0
        %4433 = vmatprep.subr.mxu0 0.0
        %4434 = vmatpush1.msra.mxu0 0.0
        %4435 = vmatprep.subr.mxu0 0.0
        %4436 = vmatpush1.msra.mxu0 0.0
        %4437 = vmatprep.subr.mxu0 0.0
        %4438 = vmatpush1.msra.mxu0 0.0
        %4439 = vmatprep.subr.mxu0 0.0
        %4440 = vmatpush1.msra.mxu0 0.0
        %4441 = vmatprep.subr.mxu0 0.0
        %4442 = vmatpush1.msra.mxu0 0.0
        %4443 = vmatprep.subr.mxu0 0.0
        %4444 = vmatpush1.msra.mxu0 0.0
        %4445 = vmatprep.subr.mxu0 0.0
        %4446 = vmatpush1.msra.mxu0 0.0
        %4447 = vmatprep.subr.mxu0 0.0
        %4448 = vmatpush1.msra.mxu0 0.0
        %4449 = vmatprep.subr.mxu0 0.0
        %4450 = vmatpush1.msra.mxu0 0.0
        %4451 = vmatprep.subr.mxu0 0.0
        %4452 = vmatpush1.msra.mxu0 0.0
        %4453 = vmatprep.subr.mxu0 0.0
        %4454 = vmatpush1.msra.mxu0 0.0
        %4455 = vmatprep.subr.mxu0 0.0
        %4456 = vmatpush1.msra.mxu0 0.0
        %4457 = vmatprep.subr.mxu0 0.0
        %4458 = vmatpush1.msra.mxu0 0.0
        %4459 = vmatprep.subr.mxu0 0.0
        %4460 = vmatpush1.msra.mxu0 0.0
        %4461 = vmatprep.subr.mxu0 0.0
        %4462 = vmatpush1.msra.mxu0 0.0
        %4463 = vmatprep.subr.mxu0 0.0
        %4464 = vmatpush1.msra.mxu0 0.0
        %4465 = vmatprep.subr.mxu0 0.0
        %4466 = vmatpush1.msra.mxu0 0.0
        %4467 = vmatprep.subr.mxu0 0.0
        %4468 = vmatpush1.msra.mxu0 0.0
        %4469 = vmatprep.subr.mxu0 0.0
        %4470 = vmatpush1.msra.mxu0 0.0
        %4471 = vmatprep.subr.mxu0 0.0
        %4472 = vmatpush1.msra.mxu0 0.0
        %4473 = vmatprep.subr.mxu0 0.0
        %4474 = vmatpush1.msra.mxu0 0.0
        %4475 = vmatprep.subr.mxu0 0.0
        %4476 = vmatpush1.msra.mxu0 0.0
        %4477 = vmatprep.subr.mxu0 0.0
        %4478 = vmatpush1.msra.mxu0 0.0
        %4479 = vmatprep.subr.mxu0 0.0
        %4480 = vmatpush1.msra.mxu0 0.0
        %4481 = vmatprep.subr.mxu0 0.0
        %4482 = vmatpush1.msra.mxu0 0.0
        %4483 = vmatprep.subr.mxu0 0.0
        %4484 = vmatpush1.msra.mxu0 0.0
        %4485 = vmatprep.subr.mxu0 0.0
        %4486 = vmatpush1.msra.mxu0 0.0
        %4487 = vmatprep.mubr.f32.mxu0 0.0
        %4488 = vmatmul.mubr.f32.gmra.mrb[0].mxu0 %v4421
        %v4489 = vpop.f32.mrb[0].mxu0
        %v4490 = vadd.f32 %v4419, %v4489
        %v4491 = vpop.f32.mrb[0].mxu0
        %4492 = vdwg.mxu0
        %4493 = vst [vmem:[%s405] sm:$0x1] %v4490
        %s4494 = sand.u32 %s291, 1
        %s4495 = scalar_lea.sflag [#allocation3], %s4494
        %s4496 = sand.u32 %s291, 1
        %s4497 = scalar_lea.vmem [#allocation2], %s4496
        // Predicated region
        $region69: #{vit_forward.1} parent=67 // pred_check
          %p4498 = pneg %p301
        $region70: #{vit_forward.1} parent=67 // pred_check_branch
          %4500 = sbr.rel (%p4498) target = $region72
        $region71: #{vit_forward.1} parent=67 // pred_region
          %s4502 = ssub.s32 16, 16
          %4503 = vsyncadd %s4495, %s4502
          %s4504 = smul.addr %s26, 16
          %s4505 = scalar_lea.hbm %s12, %s4504
          %s4507 = sshll.u32 %s4497, 4
          %s4508 = int_to_ptr.vmem [resolvable:$true] %s4507
          %4510 = dma.vmem_to_hbm [thread:$0]  %s4508, 16, %s4505, %s4495
        $region72: #{vit_forward.1} parent=67 // pred_fallthru
          _
      $region68: #{vit_forward.1} parent=5 // pred_fallthru
        _
      %p4511 = scmp.le.s32.totalorder 2, %s21
      // Predicated region
      $region73: #{vit_forward.1} parent=5 // pred_check
        %p4512 = pneg %p4511
      $region74: #{vit_forward.1} parent=5 // pred_check_branch
        %4514 = sbr.rel (%p4512) target = $region76
      $region75: #{vit_forward.1} parent=5 // pred_region
        %s4515 = ssub.s32 %s21, 2
        // Predicated region
        $region77: #{vit_forward.1} parent=75 // pred_check
          %p4516 = pneg %p307
        $region78: #{vit_forward.1} parent=75 // pred_check_branch
          %4518 = sbr.rel (%p4516) target = $region80
        $region79: #{vit_forward.1} parent=75 // pred_region
          %s4519 = sand.u32 %s292, 1
          %s4520 = scalar_lea.sflag [#allocation3], %s4519
          %s4521 = sand.u32 %s292, 1
          %s4522 = scalar_lea.vmem [#allocation2], %s4521
          %4523 = dma.done %s4520, 16
        $region80: #{vit_forward.1} parent=75 // pred_fallthru
          _
      $region76: #{vit_forward.1} parent=5 // pred_fallthru
        _
    $region6: #{vit_forward.1} parent=1 // loop_footer
      %s25 = sadd.s32 1, %s21
    $region7: #{vit_forward.1} parent=1 // loop_footer_branch
      %20 = sbr.rel target = $region3
    $region8: #{vit_forward.1} parent=1 // loop_exit
      _
    %4524 = vsyncpa [#allocation3], 1
    %s4525 = scalar_lea.sflag [#allocation3], 1
    %4526 = vsyncpa %s4525, 1

</llo_original>
